<compile_context>
chip_gen: v6e
topology: v6e:2x2x1
jax: 0.10.0
libtpu: 0.0.40
codegen_flags: <defaults>
</compile_context>

<pallas_src>
import functools
import math

import jax
import jax.numpy as jnp
from jax.experimental import pallas as pl
from jax.experimental.pallas import tpu as pltpu

# ---------------- model hyper-params (small, consistent with the module) ----
VOCAB = 128          # 128 lanes -> lane-dense logits stores
D_MODEL = 32
NHEAD = 4
NUM_LAYERS = 2
DIM_FF = 64
MAX_LEN = 16
PAD_IDX = 0

BATCH = 2
SEQ = 8

SLAB_W = 128                                   # common lane width of both slabs

# bf16 weight slab layout (rows)
_W_EMBED_T_ROWS = D_MODEL                      # rows [0, 32): embed_w.T  (D, V)
_W_GLOBAL_ROWS = _W_EMBED_T_ROWS + VOCAB       # rows [32, 160): embed_w (V, D)
_W_LAYER_ROWS = 5 * D_MODEL + DIM_FF           # Wq,Wk,Wv,Wo,Wff1 (32 ea) + Wff2 (64)

# f32 vector slab layout (rows)
_V_GLOBAL_ROWS = MAX_LEN                       # rows [0, 16): pos embedding
_V_LAYER_ROWS = 10                             # bq,bk,bv,bo,ln1g,ln1b,bf1,bf2,ln2g,ln2b

_VMEM = pl.BlockSpec(memory_space=pltpu.MemorySpace.VMEM)


# ---------------- fused Pallas kernel ----------------------------------------
def model_kernel(tok_ref, w_ref, v_ref, out_ref, *, batch, seq, nhead,
                 num_layers, pad_idx):
    """Whole TransformerLanguageModel forward in one VMEM-resident kernel."""
    B, S = batch, seq
    N = B * S
    D = D_MODEL
    F = DIM_FF
    V = VOCAB
    H = nhead
    dh = D // H
    scale = 1.0 / math.sqrt(dh)

    tok_col = tok_ref[0:N, 0:1]            # (N, 1) sublane layout -> one-hot lookup
    tok_row = tok_ref[N:N + B, :]          # (B, S) lane layout    -> key-pad mask

    # ---- embedding lookup: one-hot @ E (single MXU matmul, pad row is zero) ----
    onehot = (tok_col == jax.lax.broadcasted_iota(jnp.int32, (N, V), 1)
              ).astype(jnp.bfloat16)                              # (N, V)
    embed_w = w_ref[_W_EMBED_T_ROWS:_W_GLOBAL_ROWS, 0:D]          # (V, D) bf16
    x = jnp.dot(onehot, embed_w, preferred_element_type=jnp.float32)   # (N, D) f32

    # positional embedding: one broadcast over batch (no concatenate)
    pos = v_ref[0:S, 0:D]                                         # (S, D) f32
    x = x + jax.lax.broadcast_in_dim(pos, (B, S, D), (1, 2)).reshape(N, D)

    # ---- additive key-padding bias, shared by every layer / head ----
    # TODO(synk): PyTorch uses -inf for masked keys; -1e30 only differs for a
    # fully padded row, where PyTorch would produce NaNs.
    kpb = jnp.where(tok_row == pad_idx, -1e30, 0.0).astype(jnp.float32)   # (B, S)
    kpb = jax.lax.broadcast_in_dim(kpb, (B, S, S), (0, 2))                # (B,Sq,Sk)

    # per-head lane masks over the packed head dim (hoisted, built once)
    lane = jax.lax.broadcasted_iota(jnp.int32, (1, 1, D), 2)
    head_masks = [((lane >= h * dh) & (lane < (h + 1) * dh)).astype(jnp.float32)
                  for h in range(H)]

    def layer_norm(h, g, b):
        mu = jnp.mean(h, axis=-1, keepdims=True)
        c = h - mu
        var = jnp.mean(c * c, axis=-1, keepdims=True)
        return c * jax.lax.rsqrt(var + 1e-5) * g + b

    # NOTE: the reference forward() builds a causal mask but never passes it to
    # the transformer, so no causal masking is applied here either.
    for l in range(num_layers):
        wb = _W_GLOBAL_ROWS + l * _W_LAYER_ROWS
        vb = _V_GLOBAL_ROWS + l * _V_LAYER_ROWS

        # static slices of the packed slabs (zero-cost views of VMEM)
        w_q = w_ref[wb + 0 * D:wb + 1 * D, 0:D]                   # (D, D) bf16
        w_k = w_ref[wb + 1 * D:wb + 2 * D, 0:D]
        w_v = w_ref[wb + 2 * D:wb + 3 * D, 0:D]
        w_o = w_ref[wb + 3 * D:wb + 4 * D, 0:D]
        w_f1 = w_ref[wb + 4 * D:wb + 5 * D, 0:F]                  # (D, F)
        w_f2 = w_ref[wb + 5 * D:wb + 5 * D + F, 0:D]              # (F, D)
        b_q = v_ref[vb + 0:vb + 1, 0:D]
        b_k = v_ref[vb + 1:vb + 2, 0:D]
        b_v = v_ref[vb + 2:vb + 3, 0:D]
        b_o = v_ref[vb + 3:vb + 4, 0:D]
        ln1g = v_ref[vb + 4:vb + 5, 0:D]
        ln1b = v_ref[vb + 5:vb + 6, 0:D]
        b_f1 = v_ref[vb + 6:vb + 7, 0:F]
        b_f2 = v_ref[vb + 7:vb + 8, 0:D]
        ln2g = v_ref[vb + 8:vb + 9, 0:D]
        ln2b = v_ref[vb + 9:vb + 10, 0:D]

        # -- Q/K/V: three full-width (N,D)@(D,D) bf16 matmuls (no per-head
        #    matmuls, no lane-offset activation slicing, no concatenates) --
        xb = x.astype(jnp.bfloat16)
        q = (jnp.dot(xb, w_q, preferred_element_type=jnp.float32) + b_q
             ).reshape(B, S, D)
        k = (jnp.dot(xb, w_k, preferred_element_type=jnp.float32) + b_k
             ).reshape(B, S, D)
        v = (jnp.dot(xb, w_v, preferred_element_type=jnp.float32) + b_v
             ).reshape(B, S, D)

        # -- attention: heads isolated by lane masks so each head's scores use
        #    a full-width masked contraction and head outputs accumulate
        #    directly in the packed (B,S,D) layout (softmax stats in f32) --
        head_out = []
        for h in range(H):
            s = jnp.einsum('bqd,bkd->bqk', q * head_masks[h], k,
                           preferred_element_type=jnp.float32) * scale + kpb
            s = s - jnp.max(s, axis=-1, keepdims=True)
            p = jnp.exp(s)                                        # EUP
            p = p * pl.reciprocal(jnp.sum(p, axis=-1, keepdims=True), approx=True)
            head_out.append(jnp.einsum('bqk,bkd->bqd', p, v * head_masks[h],
                                       preferred_element_type=jnp.float32))
        attn3 = head_out[0]
        for t in head_out[1:]:
            attn3 = attn3 + t                                     # lane-packed (B,S,D)
        attn = attn3.reshape(N, D)

        # -- single output-projection matmul on the lane-packed head outputs --
        attn = jnp.dot(attn.astype(jnp.bfloat16), w_o,
                       preferred_element_type=jnp.float32) + b_o

        # -- residual + LayerNorm 1 (post-norm), f32 --
        h1 = layer_norm(x + attn, ln1g, ln1b)

        # -- feed-forward (ReLU): bf16 MXU operands, f32 accumulate / epilogue --
        ff = jnp.dot(h1.astype(jnp.bfloat16), w_f1,
                     preferred_element_type=jnp.float32) + b_f1
        ff = jnp.maximum(ff, 0.0)
        ff = jnp.dot(ff.astype(jnp.bfloat16), w_f2,
                     preferred_element_type=jnp.float32) + b_f2

        # -- residual + LayerNorm 2 --
        x = layer_norm(h1 + ff, ln2g, ln2b)

    # ---- tied output projection: logits = x @ E^T ; V = 128 -> lane-dense ----
    embed_t = w_ref[0:_W_EMBED_T_ROWS, :]                         # (D, V) bf16
    out_ref[...] = jnp.dot(x.astype(jnp.bfloat16), embed_t,
                           preferred_element_type=jnp.float32)    # (N, V)


# ---------------- wrapper -----------------------------------------------------
def forward(x_tok, params, temperature=None):
    """Replicates TransformerLanguageModel.forward (inference semantics)."""
    wslab, vslab = params
    B, S = x_tok.shape
    N = B * S
    tok = x_tok.astype(jnp.int32)

    # Single packed int32 input carrying both layouts of the token ids:
    #   rows [0, N)   : flat tokens down the sublane axis (column 0 is read)
    #   rows [N, N+B) : the (B, S) token matrix along the lane axis
    tok_pack = jnp.concatenate(
        [jnp.broadcast_to(tok.reshape(N, 1), (N, S)), tok], axis=0)      # (N+B, S)

    # TODO(synk): if this forward is called repeatedly (e.g. per decode step),
    # keep the two parameter slabs resident / prefetch them across calls
    # instead of re-fetching ~150 KB of weights cold from HBM every call.
    kernel = functools.partial(model_kernel, batch=B, seq=S, nhead=NHEAD,
                               num_layers=NUM_LAYERS, pad_idx=PAD_IDX)
    logits = pl.pallas_call(
        kernel,
        out_shape=jax.ShapeDtypeStruct((N, VOCAB), jnp.float32),
        in_specs=[_VMEM, _VMEM, _VMEM],
        out_specs=_VMEM,
    )(tok_pack, wslab, vslab)

    logits = logits.reshape(B, S, VOCAB)          # free reshape in XLA
    if temperature is not None:
        logits = logits / temperature
    return logits


# ---------------- deterministic parameter construction -----------------------
def make_params(key):
    """Builds the two packed parameter slabs (done once, outside the kernel)."""
    keys = jax.random.split(key, 2 + NUM_LAYERS)
    embed_w = jax.random.normal(keys[0], (VOCAB, D_MODEL), jnp.float32) * 0.05
    embed_w = embed_w.at[PAD_IDX].set(0.0)        # padding_idx row is zero
    pos_w = jax.random.normal(keys[1], (MAX_LEN, D_MODEL), jnp.float32) * 0.05

    def padc(a):  # pad columns to the common slab width (128 lanes)
        a = jnp.asarray(a, jnp.float32)
        return jnp.pad(a, ((0, 0), (0, SLAB_W - a.shape[-1])))

    # bf16 weight slab: embed_w.T (logits), embed_w (lookup), then per-layer
    # Wq, Wk, Wv, Wo, Wff1, Wff2 -- each pre-transposed once so every kernel
    # matmul is a plain x @ W.
    w_blocks = [padc(jnp.transpose(embed_w)), padc(embed_w)]
    # f32 vector slab: pos embedding, then per-layer biases / LayerNorm params.
    v_blocks = [padc(pos_w)]
    ones_d = jnp.ones((1, D_MODEL), jnp.float32)
    zeros_d = jnp.zeros((1, D_MODEL), jnp.float32)

    for l in range(NUM_LAYERS):
        kk = jax.random.split(keys[2 + l], 8)
        in_proj_w = jax.random.normal(kk[0], (3 * D_MODEL, D_MODEL), jnp.float32) * 0.05
        in_proj_b = jax.random.normal(kk[1], (3 * D_MODEL,), jnp.float32) * 0.01
        out_proj_w = jax.random.normal(kk[2], (D_MODEL, D_MODEL), jnp.float32) * 0.05
        out_proj_b = jax.random.normal(kk[3], (D_MODEL,), jnp.float32) * 0.01
        lin1_w = jax.random.normal(kk[4], (DIM_FF, D_MODEL), jnp.float32) * 0.05
        lin1_b = jax.random.normal(kk[5], (DIM_FF,), jnp.float32) * 0.01
        lin2_w = jax.random.normal(kk[6], (D_MODEL, DIM_FF), jnp.float32) * 0.05
        lin2_b = jax.random.normal(kk[7], (D_MODEL,), jnp.float32) * 0.01

        # PyTorch linears compute y = x @ W.T + b; pre-transpose once here.
        w_blocks += [
            padc(jnp.transpose(in_proj_w[0:D_MODEL])),               # Wq (D, D)
            padc(jnp.transpose(in_proj_w[D_MODEL:2 * D_MODEL])),     # Wk
            padc(jnp.transpose(in_proj_w[2 * D_MODEL:])),            # Wv
            padc(jnp.transpose(out_proj_w)),                         # Wo
            padc(jnp.transpose(lin1_w)),                             # Wff1 (D, F)
            padc(jnp.transpose(lin2_w)),                             # Wff2 (F, D)
        ]
        v_blocks += [
            padc(in_proj_b[0:D_MODEL].reshape(1, -1)),               # bq
            padc(in_proj_b[D_MODEL:2 * D_MODEL].reshape(1, -1)),     # bk
            padc(in_proj_b[2 * D_MODEL:].reshape(1, -1)),            # bv
            padc(out_proj_b.reshape(1, -1)),                         # bo
            padc(ones_d), padc(zeros_d),                             # ln1 gamma/beta
            padc(lin1_b.reshape(1, -1)),                             # bff1
            padc(lin2_b.reshape(1, -1)),                             # bff2
            padc(ones_d), padc(zeros_d),                             # ln2 gamma/beta
        ]

    wslab = jnp.concatenate(w_blocks, axis=0).astype(jnp.bfloat16)   # (608, 128)
    vslab = jnp.concatenate(v_blocks, axis=0)                        # (36, 128) f32
    assert wslab.shape[0] == _W_GLOBAL_ROWS + NUM_LAYERS * _W_LAYER_ROWS
    assert vslab.shape[0] == _V_GLOBAL_ROWS + NUM_LAYERS * _V_LAYER_ROWS
    return wslab, vslab


# ---------------- main --------------------------------------------------------
if __name__ == "__main__":
    key = jax.random.PRNGKey(0)
    pkey, tkey = jax.random.split(key)
    params = make_params(pkey)

    # token ids in [1, VOCAB); add trailing padding to one sequence
    x_tok = jax.random.randint(tkey, (BATCH, SEQ), 1, VOCAB, dtype=jnp.int32)
    x_tok = x_tok.at[0, 6:].set(PAD_IDX)

    logits = forward(x_tok, params, temperature=None)
    logits = jax.block_until_ready(logits)

    assert logits.shape == (BATCH, SEQ, VOCAB)
    assert bool(jnp.all(jnp.isfinite(logits)))
    print("KERNEL_OK")
</pallas_src>

<mosaic_0001>
module attributes {stable_mosaic.version = 11 : i64} {
  func.func @model_kernel(%arg0: memref<18x8xi32, #tpu.memory_space<vmem>>, %arg1: memref<608x128xbf16, #tpu.memory_space<vmem>>, %arg2: memref<36x128xf32, #tpu.memory_space<vmem>>, %arg3: memref<16x128xf32, #tpu.memory_space<vmem>>) attributes {dimension_semantics = [], scalar_prefetch = 0 : i64, scratch_operands = 0 : i64, tpu.core_type = #tpu.core_type<tc>} {
    %c0 = arith.constant 0 : index
    %c0_0 = arith.constant 0 : index
    %0 = vector.load %arg0[%c0, %c0_0] : memref<18x8xi32, #tpu.memory_space<vmem>>, vector<16x1xi32>
    %c16 = arith.constant 16 : index
    %c0_1 = arith.constant 0 : index
    %1 = vector.load %arg0[%c16, %c0_1] : memref<18x8xi32, #tpu.memory_space<vmem>>, vector<2x8xi32>
    %2 = tpu.iota {dimensions = array<i32: 1>} : vector<16x128xi32>
    %3 = vector.broadcast %0 : vector<16x1xi32> to vector<16x128xi32>
    %4 = arith.cmpi eq, %3, %2 : vector<16x128xi32>
    %5 = arith.extui %4 : vector<16x128xi1> to vector<16x128xi32>
    %6 = arith.sitofp %5 : vector<16x128xi32> to vector<16x128xf32>
    %7 = arith.truncf %6 : vector<16x128xf32> to vector<16x128xbf16>
    %c32 = arith.constant 32 : index
    %c0_2 = arith.constant 0 : index
    %8 = vector.load %arg1[%c32, %c0_2] : memref<608x128xbf16, #tpu.memory_space<vmem>>, vector<128x32xbf16>
    %cst = arith.constant dense<0.000000e+00> : vector<16x32xf32>
    %9 = tpu.matmul %7, %8, %cst {dimension_numbers = #tpu.dot_dimension_numbers<[1], [0], [0], [1], [0, 0, 1, 1], [], []>} : vector<16x128xbf16>, vector<128x32xbf16>, vector<16x32xf32> -> vector<16x32xf32>
    %c0_3 = arith.constant 0 : index
    %c0_4 = arith.constant 0 : index
    %10 = vector.load %arg2[%c0_3, %c0_4] : memref<36x128xf32, #tpu.memory_space<vmem>>, vector<8x32xf32>
    %11 = vector.shape_cast %10 : vector<8x32xf32> to vector<1x8x32xf32>
    %12 = vector.broadcast %11 : vector<1x8x32xf32> to vector<2x8x32xf32>
    %13 = vector.shape_cast %12 : vector<2x8x32xf32> to vector<16x32xf32>
    %14 = arith.addf %9, %13 : vector<16x32xf32>
    %c0_i32 = arith.constant 0 : i32
    %15 = vector.broadcast %c0_i32 : i32 to vector<2x8xi32>
    %16 = arith.cmpi eq, %1, %15 : vector<2x8xi32>
    %cst_5 = arith.constant -1.000000e+30 : f32
    %cst_6 = arith.constant 0.000000e+00 : f32
    %17 = vector.broadcast %cst_5 : f32 to vector<2x8xf32>
    %18 = vector.broadcast %cst_6 : f32 to vector<2x8xf32>
    %19 = arith.select %16, %17, %18 : vector<2x8xi1>, vector<2x8xf32>
    %20 = vector.shape_cast %19 : vector<2x8xf32> to vector<2x1x8xf32>
    %21 = vector.broadcast %20 : vector<2x1x8xf32> to vector<2x8x8xf32>
    %22 = tpu.iota {dimensions = array<i32: 2>} : vector<1x1x32xi32>
    %c0_i32_7 = arith.constant 0 : i32
    %23 = vector.broadcast %c0_i32_7 : i32 to vector<1x1x32xi32>
    %24 = arith.cmpi sge, %22, %23 : vector<1x1x32xi32>
    %c8_i32 = arith.constant 8 : i32
    %25 = vector.broadcast %c8_i32 : i32 to vector<1x1x32xi32>
    %26 = arith.cmpi slt, %22, %25 : vector<1x1x32xi32>
    %27 = arith.andi %24, %26 : vector<1x1x32xi1>
    %28 = arith.extui %27 : vector<1x1x32xi1> to vector<1x1x32xi32>
    %29 = arith.sitofp %28 : vector<1x1x32xi32> to vector<1x1x32xf32>
    %c8_i32_8 = arith.constant 8 : i32
    %30 = vector.broadcast %c8_i32_8 : i32 to vector<1x1x32xi32>
    %31 = arith.cmpi sge, %22, %30 : vector<1x1x32xi32>
    %c16_i32 = arith.constant 16 : i32
    %32 = vector.broadcast %c16_i32 : i32 to vector<1x1x32xi32>
    %33 = arith.cmpi slt, %22, %32 : vector<1x1x32xi32>
    %34 = arith.andi %31, %33 : vector<1x1x32xi1>
    %35 = arith.extui %34 : vector<1x1x32xi1> to vector<1x1x32xi32>
    %36 = arith.sitofp %35 : vector<1x1x32xi32> to vector<1x1x32xf32>
    %c16_i32_9 = arith.constant 16 : i32
    %37 = vector.broadcast %c16_i32_9 : i32 to vector<1x1x32xi32>
    %38 = arith.cmpi sge, %22, %37 : vector<1x1x32xi32>
    %c24_i32 = arith.constant 24 : i32
    %39 = vector.broadcast %c24_i32 : i32 to vector<1x1x32xi32>
    %40 = arith.cmpi slt, %22, %39 : vector<1x1x32xi32>
    %41 = arith.andi %38, %40 : vector<1x1x32xi1>
    %42 = arith.extui %41 : vector<1x1x32xi1> to vector<1x1x32xi32>
    %43 = arith.sitofp %42 : vector<1x1x32xi32> to vector<1x1x32xf32>
    %c24_i32_10 = arith.constant 24 : i32
    %44 = vector.broadcast %c24_i32_10 : i32 to vector<1x1x32xi32>
    %45 = arith.cmpi sge, %22, %44 : vector<1x1x32xi32>
    %c32_i32 = arith.constant 32 : i32
    %46 = vector.broadcast %c32_i32 : i32 to vector<1x1x32xi32>
    %47 = arith.cmpi slt, %22, %46 : vector<1x1x32xi32>
    %48 = arith.andi %45, %47 : vector<1x1x32xi1>
    %49 = arith.extui %48 : vector<1x1x32xi1> to vector<1x1x32xi32>
    %50 = arith.sitofp %49 : vector<1x1x32xi32> to vector<1x1x32xf32>
    %c160 = arith.constant 160 : index
    %c0_11 = arith.constant 0 : index
    %51 = vector.load %arg1[%c160, %c0_11] : memref<608x128xbf16, #tpu.memory_space<vmem>>, vector<32x32xbf16>
    %c192 = arith.constant 192 : index
    %c0_12 = arith.constant 0 : index
    %52 = vector.load %arg1[%c192, %c0_12] : memref<608x128xbf16, #tpu.memory_space<vmem>>, vector<32x32xbf16>
    %c224 = arith.constant 224 : index
    %c0_13 = arith.constant 0 : index
    %53 = vector.load %arg1[%c224, %c0_13] : memref<608x128xbf16, #tpu.memory_space<vmem>>, vector<32x32xbf16>
    %c256 = arith.constant 256 : index
    %c0_14 = arith.constant 0 : index
    %54 = vector.load %arg1[%c256, %c0_14] : memref<608x128xbf16, #tpu.memory_space<vmem>>, vector<32x32xbf16>
    %c288 = arith.constant 288 : index
    %c0_15 = arith.constant 0 : index
    %55 = vector.load %arg1[%c288, %c0_15] : memref<608x128xbf16, #tpu.memory_space<vmem>>, vector<32x64xbf16>
    %c320 = arith.constant 320 : index
    %c0_16 = arith.constant 0 : index
    %56 = vector.load %arg1[%c320, %c0_16] : memref<608x128xbf16, #tpu.memory_space<vmem>>, vector<64x32xbf16>
    %c16_17 = arith.constant 16 : index
    %c0_18 = arith.constant 0 : index
    %57 = vector.load %arg2[%c16_17, %c0_18] : memref<36x128xf32, #tpu.memory_space<vmem>>, vector<1x32xf32>
    %c17 = arith.constant 17 : index
    %c0_19 = arith.constant 0 : index
    %58 = vector.load %arg2[%c17, %c0_19] : memref<36x128xf32, #tpu.memory_space<vmem>>, vector<1x32xf32>
    %c18 = arith.constant 18 : index
    %c0_20 = arith.constant 0 : index
    %59 = vector.load %arg2[%c18, %c0_20] : memref<36x128xf32, #tpu.memory_space<vmem>>, vector<1x32xf32>
    %c19 = arith.constant 19 : index
    %c0_21 = arith.constant 0 : index
    %60 = vector.load %arg2[%c19, %c0_21] : memref<36x128xf32, #tpu.memory_space<vmem>>, vector<1x32xf32>
    %c20 = arith.constant 20 : index
    %c0_22 = arith.constant 0 : index
    %61 = vector.load %arg2[%c20, %c0_22] : memref<36x128xf32, #tpu.memory_space<vmem>>, vector<1x32xf32>
    %c21 = arith.constant 21 : index
    %c0_23 = arith.constant 0 : index
    %62 = vector.load %arg2[%c21, %c0_23] : memref<36x128xf32, #tpu.memory_space<vmem>>, vector<1x32xf32>
    %c22 = arith.constant 22 : index
    %c0_24 = arith.constant 0 : index
    %63 = vector.load %arg2[%c22, %c0_24] : memref<36x128xf32, #tpu.memory_space<vmem>>, vector<1x64xf32>
    %c23 = arith.constant 23 : index
    %c0_25 = arith.constant 0 : index
    %64 = vector.load %arg2[%c23, %c0_25] : memref<36x128xf32, #tpu.memory_space<vmem>>, vector<1x32xf32>
    %c24 = arith.constant 24 : index
    %c0_26 = arith.constant 0 : index
    %65 = vector.load %arg2[%c24, %c0_26] : memref<36x128xf32, #tpu.memory_space<vmem>>, vector<1x32xf32>
    %c25 = arith.constant 25 : index
    %c0_27 = arith.constant 0 : index
    %66 = vector.load %arg2[%c25, %c0_27] : memref<36x128xf32, #tpu.memory_space<vmem>>, vector<1x32xf32>
    %67 = arith.truncf %14 : vector<16x32xf32> to vector<16x32xbf16>
    %cst_28 = arith.constant dense<0.000000e+00> : vector<16x32xf32>
    %68 = tpu.matmul %67, %51, %cst_28 {dimension_numbers = #tpu.dot_dimension_numbers<[1], [0], [0], [1], [0, 0, 1, 1], [], []>} : vector<16x32xbf16>, vector<32x32xbf16>, vector<16x32xf32> -> vector<16x32xf32>
    %69 = vector.broadcast %57 : vector<1x32xf32> to vector<16x32xf32>
    %70 = arith.addf %68, %69 : vector<16x32xf32>
    %71 = vector.shape_cast %70 : vector<16x32xf32> to vector<2x8x32xf32>
    %cst_29 = arith.constant dense<0.000000e+00> : vector<16x32xf32>
    %72 = tpu.matmul %67, %52, %cst_29 {dimension_numbers = #tpu.dot_dimension_numbers<[1], [0], [0], [1], [0, 0, 1, 1], [], []>} : vector<16x32xbf16>, vector<32x32xbf16>, vector<16x32xf32> -> vector<16x32xf32>
    %73 = vector.broadcast %58 : vector<1x32xf32> to vector<16x32xf32>
    %74 = arith.addf %72, %73 : vector<16x32xf32>
    %75 = vector.shape_cast %74 : vector<16x32xf32> to vector<2x8x32xf32>
    %cst_30 = arith.constant dense<0.000000e+00> : vector<16x32xf32>
    %76 = tpu.matmul %67, %53, %cst_30 {dimension_numbers = #tpu.dot_dimension_numbers<[1], [0], [0], [1], [0, 0, 1, 1], [], []>} : vector<16x32xbf16>, vector<32x32xbf16>, vector<16x32xf32> -> vector<16x32xf32>
    %77 = vector.broadcast %59 : vector<1x32xf32> to vector<16x32xf32>
    %78 = arith.addf %76, %77 : vector<16x32xf32>
    %79 = vector.shape_cast %78 : vector<16x32xf32> to vector<2x8x32xf32>
    %80 = vector.broadcast %29 : vector<1x1x32xf32> to vector<2x8x32xf32>
    %81 = arith.mulf %71, %80 : vector<2x8x32xf32>
    "tpu.trace_start"() <{level = 10 : i32, message = "bqd,bkd->bqk"}> : () -> ()
    %cst_31 = arith.constant dense<0.000000e+00> : vector<2x8x8xf32>
    %82 = tpu.matmul %81, %75, %cst_31 {dimension_numbers = #tpu.dot_dimension_numbers<[2], [2], [1], [1], [0, 0, 0, 1, 1, 1], [0], [0]>} : vector<2x8x32xf32>, vector<2x8x32xf32>, vector<2x8x8xf32> -> vector<2x8x8xf32>
    "tpu.trace_stop"() : () -> ()
    %cst_32 = arith.constant 0.353553385 : f32
    %83 = vector.broadcast %cst_32 : f32 to vector<2x8x8xf32>
    %84 = arith.mulf %82, %83 : vector<2x8x8xf32>
    %85 = arith.addf %84, %21 : vector<2x8x8xf32>
    %cst_33 = arith.constant dense<0xFF800000> : vector<2x8xf32>
    %86 = vector.multi_reduction <maximumf>, %85, %cst_33 [2] : vector<2x8x8xf32> to vector<2x8xf32>
    %87 = vector.shape_cast %86 : vector<2x8xf32> to vector<2x8x1xf32>
    %88 = vector.broadcast %87 : vector<2x8x1xf32> to vector<2x8x8xf32>
    %89 = arith.subf %85, %88 : vector<2x8x8xf32>
    %90 = math.exp %89 : vector<2x8x8xf32>
    %cst_34 = arith.constant dense<0.000000e+00> : vector<2x8xf32>
    %91 = vector.multi_reduction <add>, %90, %cst_34 [2] : vector<2x8x8xf32> to vector<2x8xf32>
    %92 = vector.shape_cast %91 : vector<2x8xf32> to vector<2x8x1xf32>
    %93 = tpu.reciprocal %92 {approx = true} : vector<2x8x1xf32> -> vector<2x8x1xf32>
    %94 = vector.broadcast %93 : vector<2x8x1xf32> to vector<2x8x8xf32>
    %95 = arith.mulf %90, %94 : vector<2x8x8xf32>
    %96 = vector.broadcast %29 : vector<1x1x32xf32> to vector<2x8x32xf32>
    %97 = arith.mulf %79, %96 : vector<2x8x32xf32>
    "tpu.trace_start"() <{level = 10 : i32, message = "bqk,bkd->bqd"}> : () -> ()
    %cst_35 = arith.constant dense<0.000000e+00> : vector<2x8x32xf32>
    %98 = tpu.matmul %95, %97, %cst_35 {dimension_numbers = #tpu.dot_dimension_numbers<[2], [1], [1], [2], [0, 0, 0, 1, 1, 2], [0], [0]>} : vector<2x8x8xf32>, vector<2x8x32xf32>, vector<2x8x32xf32> -> vector<2x8x32xf32>
    "tpu.trace_stop"() : () -> ()
    %99 = vector.broadcast %36 : vector<1x1x32xf32> to vector<2x8x32xf32>
    %100 = arith.mulf %71, %99 : vector<2x8x32xf32>
    "tpu.trace_start"() <{level = 10 : i32, message = "bqd,bkd->bqk"}> : () -> ()
    %cst_36 = arith.constant dense<0.000000e+00> : vector<2x8x8xf32>
    %101 = tpu.matmul %100, %75, %cst_36 {dimension_numbers = #tpu.dot_dimension_numbers<[2], [2], [1], [1], [0, 0, 0, 1, 1, 1], [0], [0]>} : vector<2x8x32xf32>, vector<2x8x32xf32>, vector<2x8x8xf32> -> vector<2x8x8xf32>
    "tpu.trace_stop"() : () -> ()
    %cst_37 = arith.constant 0.353553385 : f32
    %102 = vector.broadcast %cst_37 : f32 to vector<2x8x8xf32>
    %103 = arith.mulf %101, %102 : vector<2x8x8xf32>
    %104 = arith.addf %103, %21 : vector<2x8x8xf32>
    %cst_38 = arith.constant dense<0xFF800000> : vector<2x8xf32>
    %105 = vector.multi_reduction <maximumf>, %104, %cst_38 [2] : vector<2x8x8xf32> to vector<2x8xf32>
    %106 = vector.shape_cast %105 : vector<2x8xf32> to vector<2x8x1xf32>
    %107 = vector.broadcast %106 : vector<2x8x1xf32> to vector<2x8x8xf32>
    %108 = arith.subf %104, %107 : vector<2x8x8xf32>
    %109 = math.exp %108 : vector<2x8x8xf32>
    %cst_39 = arith.constant dense<0.000000e+00> : vector<2x8xf32>
    %110 = vector.multi_reduction <add>, %109, %cst_39 [2] : vector<2x8x8xf32> to vector<2x8xf32>
    %111 = vector.shape_cast %110 : vector<2x8xf32> to vector<2x8x1xf32>
    %112 = tpu.reciprocal %111 {approx = true} : vector<2x8x1xf32> -> vector<2x8x1xf32>
    %113 = vector.broadcast %112 : vector<2x8x1xf32> to vector<2x8x8xf32>
    %114 = arith.mulf %109, %113 : vector<2x8x8xf32>
    %115 = vector.broadcast %36 : vector<1x1x32xf32> to vector<2x8x32xf32>
    %116 = arith.mulf %79, %115 : vector<2x8x32xf32>
    "tpu.trace_start"() <{level = 10 : i32, message = "bqk,bkd->bqd"}> : () -> ()
    %cst_40 = arith.constant dense<0.000000e+00> : vector<2x8x32xf32>
    %117 = tpu.matmul %114, %116, %cst_40 {dimension_numbers = #tpu.dot_dimension_numbers<[2], [1], [1], [2], [0, 0, 0, 1, 1, 2], [0], [0]>} : vector<2x8x8xf32>, vector<2x8x32xf32>, vector<2x8x32xf32> -> vector<2x8x32xf32>
    "tpu.trace_stop"() : () -> ()
    %118 = vector.broadcast %43 : vector<1x1x32xf32> to vector<2x8x32xf32>
    %119 = arith.mulf %71, %118 : vector<2x8x32xf32>
    "tpu.trace_start"() <{level = 10 : i32, message = "bqd,bkd->bqk"}> : () -> ()
    %cst_41 = arith.constant dense<0.000000e+00> : vector<2x8x8xf32>
    %120 = tpu.matmul %119, %75, %cst_41 {dimension_numbers = #tpu.dot_dimension_numbers<[2], [2], [1], [1], [0, 0, 0, 1, 1, 1], [0], [0]>} : vector<2x8x32xf32>, vector<2x8x32xf32>, vector<2x8x8xf32> -> vector<2x8x8xf32>
    "tpu.trace_stop"() : () -> ()
    %cst_42 = arith.constant 0.353553385 : f32
    %121 = vector.broadcast %cst_42 : f32 to vector<2x8x8xf32>
    %122 = arith.mulf %120, %121 : vector<2x8x8xf32>
    %123 = arith.addf %122, %21 : vector<2x8x8xf32>
    %cst_43 = arith.constant dense<0xFF800000> : vector<2x8xf32>
    %124 = vector.multi_reduction <maximumf>, %123, %cst_43 [2] : vector<2x8x8xf32> to vector<2x8xf32>
    %125 = vector.shape_cast %124 : vector<2x8xf32> to vector<2x8x1xf32>
    %126 = vector.broadcast %125 : vector<2x8x1xf32> to vector<2x8x8xf32>
    %127 = arith.subf %123, %126 : vector<2x8x8xf32>
    %128 = math.exp %127 : vector<2x8x8xf32>
    %cst_44 = arith.constant dense<0.000000e+00> : vector<2x8xf32>
    %129 = vector.multi_reduction <add>, %128, %cst_44 [2] : vector<2x8x8xf32> to vector<2x8xf32>
    %130 = vector.shape_cast %129 : vector<2x8xf32> to vector<2x8x1xf32>
    %131 = tpu.reciprocal %130 {approx = true} : vector<2x8x1xf32> -> vector<2x8x1xf32>
    %132 = vector.broadcast %131 : vector<2x8x1xf32> to vector<2x8x8xf32>
    %133 = arith.mulf %128, %132 : vector<2x8x8xf32>
    %134 = vector.broadcast %43 : vector<1x1x32xf32> to vector<2x8x32xf32>
    %135 = arith.mulf %79, %134 : vector<2x8x32xf32>
    "tpu.trace_start"() <{level = 10 : i32, message = "bqk,bkd->bqd"}> : () -> ()
    %cst_45 = arith.constant dense<0.000000e+00> : vector<2x8x32xf32>
    %136 = tpu.matmul %133, %135, %cst_45 {dimension_numbers = #tpu.dot_dimension_numbers<[2], [1], [1], [2], [0, 0, 0, 1, 1, 2], [0], [0]>} : vector<2x8x8xf32>, vector<2x8x32xf32>, vector<2x8x32xf32> -> vector<2x8x32xf32>
    "tpu.trace_stop"() : () -> ()
    %137 = vector.broadcast %50 : vector<1x1x32xf32> to vector<2x8x32xf32>
    %138 = arith.mulf %71, %137 : vector<2x8x32xf32>
    "tpu.trace_start"() <{level = 10 : i32, message = "bqd,bkd->bqk"}> : () -> ()
    %cst_46 = arith.constant dense<0.000000e+00> : vector<2x8x8xf32>
    %139 = tpu.matmul %138, %75, %cst_46 {dimension_numbers = #tpu.dot_dimension_numbers<[2], [2], [1], [1], [0, 0, 0, 1, 1, 1], [0], [0]>} : vector<2x8x32xf32>, vector<2x8x32xf32>, vector<2x8x8xf32> -> vector<2x8x8xf32>
    "tpu.trace_stop"() : () -> ()
    %cst_47 = arith.constant 0.353553385 : f32
    %140 = vector.broadcast %cst_47 : f32 to vector<2x8x8xf32>
    %141 = arith.mulf %139, %140 : vector<2x8x8xf32>
    %142 = arith.addf %141, %21 : vector<2x8x8xf32>
    %cst_48 = arith.constant dense<0xFF800000> : vector<2x8xf32>
    %143 = vector.multi_reduction <maximumf>, %142, %cst_48 [2] : vector<2x8x8xf32> to vector<2x8xf32>
    %144 = vector.shape_cast %143 : vector<2x8xf32> to vector<2x8x1xf32>
    %145 = vector.broadcast %144 : vector<2x8x1xf32> to vector<2x8x8xf32>
    %146 = arith.subf %142, %145 : vector<2x8x8xf32>
    %147 = math.exp %146 : vector<2x8x8xf32>
    %cst_49 = arith.constant dense<0.000000e+00> : vector<2x8xf32>
    %148 = vector.multi_reduction <add>, %147, %cst_49 [2] : vector<2x8x8xf32> to vector<2x8xf32>
    %149 = vector.shape_cast %148 : vector<2x8xf32> to vector<2x8x1xf32>
    %150 = tpu.reciprocal %149 {approx = true} : vector<2x8x1xf32> -> vector<2x8x1xf32>
    %151 = vector.broadcast %150 : vector<2x8x1xf32> to vector<2x8x8xf32>
    %152 = arith.mulf %147, %151 : vector<2x8x8xf32>
    %153 = vector.broadcast %50 : vector<1x1x32xf32> to vector<2x8x32xf32>
    %154 = arith.mulf %79, %153 : vector<2x8x32xf32>
    "tpu.trace_start"() <{level = 10 : i32, message = "bqk,bkd->bqd"}> : () -> ()
    %cst_50 = arith.constant dense<0.000000e+00> : vector<2x8x32xf32>
    %155 = tpu.matmul %152, %154, %cst_50 {dimension_numbers = #tpu.dot_dimension_numbers<[2], [1], [1], [2], [0, 0, 0, 1, 1, 2], [0], [0]>} : vector<2x8x8xf32>, vector<2x8x32xf32>, vector<2x8x32xf32> -> vector<2x8x32xf32>
    "tpu.trace_stop"() : () -> ()
    %156 = arith.addf %98, %117 : vector<2x8x32xf32>
    %157 = arith.addf %156, %136 : vector<2x8x32xf32>
    %158 = arith.addf %157, %155 : vector<2x8x32xf32>
    %159 = vector.shape_cast %158 : vector<2x8x32xf32> to vector<16x32xf32>
    %160 = arith.truncf %159 : vector<16x32xf32> to vector<16x32xbf16>
    %cst_51 = arith.constant dense<0.000000e+00> : vector<16x32xf32>
    %161 = tpu.matmul %160, %54, %cst_51 {dimension_numbers = #tpu.dot_dimension_numbers<[1], [0], [0], [1], [0, 0, 1, 1], [], []>} : vector<16x32xbf16>, vector<32x32xbf16>, vector<16x32xf32> -> vector<16x32xf32>
    %162 = vector.broadcast %60 : vector<1x32xf32> to vector<16x32xf32>
    %163 = arith.addf %161, %162 : vector<16x32xf32>
    %164 = arith.addf %14, %163 : vector<16x32xf32>
    %cst_52 = arith.constant dense<0.000000e+00> : vector<16xf32>
    %165 = vector.multi_reduction <add>, %164, %cst_52 [1] : vector<16x32xf32> to vector<16xf32>
    %166 = vector.shape_cast %165 : vector<16xf32> to vector<16x1xf32>
    %cst_53 = arith.constant 3.200000e+01 : f32
    %167 = vector.broadcast %cst_53 : f32 to vector<16x1xf32>
    %168 = arith.divf %166, %167 : vector<16x1xf32>
    %169 = vector.broadcast %168 : vector<16x1xf32> to vector<16x32xf32>
    %170 = arith.subf %164, %169 : vector<16x32xf32>
    %171 = arith.mulf %170, %170 : vector<16x32xf32>
    %cst_54 = arith.constant dense<0.000000e+00> : vector<16xf32>
    %172 = vector.multi_reduction <add>, %171, %cst_54 [1] : vector<16x32xf32> to vector<16xf32>
    %173 = vector.shape_cast %172 : vector<16xf32> to vector<16x1xf32>
    %cst_55 = arith.constant 3.200000e+01 : f32
    %174 = vector.broadcast %cst_55 : f32 to vector<16x1xf32>
    %175 = arith.divf %173, %174 : vector<16x1xf32>
    %cst_56 = arith.constant 9.99999974E-6 : f32
    %176 = vector.broadcast %cst_56 : f32 to vector<16x1xf32>
    %177 = arith.addf %175, %176 : vector<16x1xf32>
    %178 = math.rsqrt %177 : vector<16x1xf32>
    %179 = vector.broadcast %178 : vector<16x1xf32> to vector<16x32xf32>
    %180 = arith.mulf %170, %179 : vector<16x32xf32>
    %181 = vector.broadcast %61 : vector<1x32xf32> to vector<16x32xf32>
    %182 = arith.mulf %180, %181 : vector<16x32xf32>
    %183 = vector.broadcast %62 : vector<1x32xf32> to vector<16x32xf32>
    %184 = arith.addf %182, %183 : vector<16x32xf32>
    %185 = arith.truncf %184 : vector<16x32xf32> to vector<16x32xbf16>
    %cst_57 = arith.constant dense<0.000000e+00> : vector<16x64xf32>
    %186 = tpu.matmul %185, %55, %cst_57 {dimension_numbers = #tpu.dot_dimension_numbers<[1], [0], [0], [1], [0, 0, 1, 1], [], []>} : vector<16x32xbf16>, vector<32x64xbf16>, vector<16x64xf32> -> vector<16x64xf32>
    %187 = vector.broadcast %63 : vector<1x64xf32> to vector<16x64xf32>
    %188 = arith.addf %186, %187 : vector<16x64xf32>
    %cst_58 = arith.constant 0.000000e+00 : f32
    %189 = vector.broadcast %cst_58 : f32 to vector<16x64xf32>
    %190 = arith.maximumf %188, %189 : vector<16x64xf32>
    %191 = arith.truncf %190 : vector<16x64xf32> to vector<16x64xbf16>
    %cst_59 = arith.constant dense<0.000000e+00> : vector<16x32xf32>
    %192 = tpu.matmul %191, %56, %cst_59 {dimension_numbers = #tpu.dot_dimension_numbers<[1], [0], [0], [1], [0, 0, 1, 1], [], []>} : vector<16x64xbf16>, vector<64x32xbf16>, vector<16x32xf32> -> vector<16x32xf32>
    %193 = vector.broadcast %64 : vector<1x32xf32> to vector<16x32xf32>
    %194 = arith.addf %192, %193 : vector<16x32xf32>
    %195 = arith.addf %184, %194 : vector<16x32xf32>
    %cst_60 = arith.constant dense<0.000000e+00> : vector<16xf32>
    %196 = vector.multi_reduction <add>, %195, %cst_60 [1] : vector<16x32xf32> to vector<16xf32>
    %197 = vector.shape_cast %196 : vector<16xf32> to vector<16x1xf32>
    %cst_61 = arith.constant 3.200000e+01 : f32
    %198 = vector.broadcast %cst_61 : f32 to vector<16x1xf32>
    %199 = arith.divf %197, %198 : vector<16x1xf32>
    %200 = vector.broadcast %199 : vector<16x1xf32> to vector<16x32xf32>
    %201 = arith.subf %195, %200 : vector<16x32xf32>
    %202 = arith.mulf %201, %201 : vector<16x32xf32>
    %cst_62 = arith.constant dense<0.000000e+00> : vector<16xf32>
    %203 = vector.multi_reduction <add>, %202, %cst_62 [1] : vector<16x32xf32> to vector<16xf32>
    %204 = vector.shape_cast %203 : vector<16xf32> to vector<16x1xf32>
    %cst_63 = arith.constant 3.200000e+01 : f32
    %205 = vector.broadcast %cst_63 : f32 to vector<16x1xf32>
    %206 = arith.divf %204, %205 : vector<16x1xf32>
    %cst_64 = arith.constant 9.99999974E-6 : f32
    %207 = vector.broadcast %cst_64 : f32 to vector<16x1xf32>
    %208 = arith.addf %206, %207 : vector<16x1xf32>
    %209 = math.rsqrt %208 : vector<16x1xf32>
    %210 = vector.broadcast %209 : vector<16x1xf32> to vector<16x32xf32>
    %211 = arith.mulf %201, %210 : vector<16x32xf32>
    %212 = vector.broadcast %65 : vector<1x32xf32> to vector<16x32xf32>
    %213 = arith.mulf %211, %212 : vector<16x32xf32>
    %214 = vector.broadcast %66 : vector<1x32xf32> to vector<16x32xf32>
    %215 = arith.addf %213, %214 : vector<16x32xf32>
    %c384 = arith.constant 384 : index
    %c0_65 = arith.constant 0 : index
    %216 = vector.load %arg1[%c384, %c0_65] : memref<608x128xbf16, #tpu.memory_space<vmem>>, vector<32x32xbf16>
    %c416 = arith.constant 416 : index
    %c0_66 = arith.constant 0 : index
    %217 = vector.load %arg1[%c416, %c0_66] : memref<608x128xbf16, #tpu.memory_space<vmem>>, vector<32x32xbf16>
    %c448 = arith.constant 448 : index
    %c0_67 = arith.constant 0 : index
    %218 = vector.load %arg1[%c448, %c0_67] : memref<608x128xbf16, #tpu.memory_space<vmem>>, vector<32x32xbf16>
    %c480 = arith.constant 480 : index
    %c0_68 = arith.constant 0 : index
    %219 = vector.load %arg1[%c480, %c0_68] : memref<608x128xbf16, #tpu.memory_space<vmem>>, vector<32x32xbf16>
    %c512 = arith.constant 512 : index
    %c0_69 = arith.constant 0 : index
    %220 = vector.load %arg1[%c512, %c0_69] : memref<608x128xbf16, #tpu.memory_space<vmem>>, vector<32x64xbf16>
    %c544 = arith.constant 544 : index
    %c0_70 = arith.constant 0 : index
    %221 = vector.load %arg1[%c544, %c0_70] : memref<608x128xbf16, #tpu.memory_space<vmem>>, vector<64x32xbf16>
    %c26 = arith.constant 26 : index
    %c0_71 = arith.constant 0 : index
    %222 = vector.load %arg2[%c26, %c0_71] : memref<36x128xf32, #tpu.memory_space<vmem>>, vector<1x32xf32>
    %c27 = arith.constant 27 : index
    %c0_72 = arith.constant 0 : index
    %223 = vector.load %arg2[%c27, %c0_72] : memref<36x128xf32, #tpu.memory_space<vmem>>, vector<1x32xf32>
    %c28 = arith.constant 28 : index
    %c0_73 = arith.constant 0 : index
    %224 = vector.load %arg2[%c28, %c0_73] : memref<36x128xf32, #tpu.memory_space<vmem>>, vector<1x32xf32>
    %c29 = arith.constant 29 : index
    %c0_74 = arith.constant 0 : index
    %225 = vector.load %arg2[%c29, %c0_74] : memref<36x128xf32, #tpu.memory_space<vmem>>, vector<1x32xf32>
    %c30 = arith.constant 30 : index
    %c0_75 = arith.constant 0 : index
    %226 = vector.load %arg2[%c30, %c0_75] : memref<36x128xf32, #tpu.memory_space<vmem>>, vector<1x32xf32>
    %c31 = arith.constant 31 : index
    %c0_76 = arith.constant 0 : index
    %227 = vector.load %arg2[%c31, %c0_76] : memref<36x128xf32, #tpu.memory_space<vmem>>, vector<1x32xf32>
    %c32_77 = arith.constant 32 : index
    %c0_78 = arith.constant 0 : index
    %228 = vector.load %arg2[%c32_77, %c0_78] : memref<36x128xf32, #tpu.memory_space<vmem>>, vector<1x64xf32>
    %c33 = arith.constant 33 : index
    %c0_79 = arith.constant 0 : index
    %229 = vector.load %arg2[%c33, %c0_79] : memref<36x128xf32, #tpu.memory_space<vmem>>, vector<1x32xf32>
    %c34 = arith.constant 34 : index
    %c0_80 = arith.constant 0 : index
    %230 = vector.load %arg2[%c34, %c0_80] : memref<36x128xf32, #tpu.memory_space<vmem>>, vector<1x32xf32>
    %c35 = arith.constant 35 : index
    %c0_81 = arith.constant 0 : index
    %231 = vector.load %arg2[%c35, %c0_81] : memref<36x128xf32, #tpu.memory_space<vmem>>, vector<1x32xf32>
    %232 = arith.truncf %215 : vector<16x32xf32> to vector<16x32xbf16>
    %cst_82 = arith.constant dense<0.000000e+00> : vector<16x32xf32>
    %233 = tpu.matmul %232, %216, %cst_82 {dimension_numbers = #tpu.dot_dimension_numbers<[1], [0], [0], [1], [0, 0, 1, 1], [], []>} : vector<16x32xbf16>, vector<32x32xbf16>, vector<16x32xf32> -> vector<16x32xf32>
    %234 = vector.broadcast %222 : vector<1x32xf32> to vector<16x32xf32>
    %235 = arith.addf %233, %234 : vector<16x32xf32>
    %236 = vector.shape_cast %235 : vector<16x32xf32> to vector<2x8x32xf32>
    %cst_83 = arith.constant dense<0.000000e+00> : vector<16x32xf32>
    %237 = tpu.matmul %232, %217, %cst_83 {dimension_numbers = #tpu.dot_dimension_numbers<[1], [0], [0], [1], [0, 0, 1, 1], [], []>} : vector<16x32xbf16>, vector<32x32xbf16>, vector<16x32xf32> -> vector<16x32xf32>
    %238 = vector.broadcast %223 : vector<1x32xf32> to vector<16x32xf32>
    %239 = arith.addf %237, %238 : vector<16x32xf32>
    %240 = vector.shape_cast %239 : vector<16x32xf32> to vector<2x8x32xf32>
    %cst_84 = arith.constant dense<0.000000e+00> : vector<16x32xf32>
    %241 = tpu.matmul %232, %218, %cst_84 {dimension_numbers = #tpu.dot_dimension_numbers<[1], [0], [0], [1], [0, 0, 1, 1], [], []>} : vector<16x32xbf16>, vector<32x32xbf16>, vector<16x32xf32> -> vector<16x32xf32>
    %242 = vector.broadcast %224 : vector<1x32xf32> to vector<16x32xf32>
    %243 = arith.addf %241, %242 : vector<16x32xf32>
    %244 = vector.shape_cast %243 : vector<16x32xf32> to vector<2x8x32xf32>
    %245 = vector.broadcast %29 : vector<1x1x32xf32> to vector<2x8x32xf32>
    %246 = arith.mulf %236, %245 : vector<2x8x32xf32>
    "tpu.trace_start"() <{level = 10 : i32, message = "bqd,bkd->bqk"}> : () -> ()
    %cst_85 = arith.constant dense<0.000000e+00> : vector<2x8x8xf32>
    %247 = tpu.matmul %246, %240, %cst_85 {dimension_numbers = #tpu.dot_dimension_numbers<[2], [2], [1], [1], [0, 0, 0, 1, 1, 1], [0], [0]>} : vector<2x8x32xf32>, vector<2x8x32xf32>, vector<2x8x8xf32> -> vector<2x8x8xf32>
    "tpu.trace_stop"() : () -> ()
    %cst_86 = arith.constant 0.353553385 : f32
    %248 = vector.broadcast %cst_86 : f32 to vector<2x8x8xf32>
    %249 = arith.mulf %247, %248 : vector<2x8x8xf32>
    %250 = arith.addf %249, %21 : vector<2x8x8xf32>
    %cst_87 = arith.constant dense<0xFF800000> : vector<2x8xf32>
    %251 = vector.multi_reduction <maximumf>, %250, %cst_87 [2] : vector<2x8x8xf32> to vector<2x8xf32>
    %252 = vector.shape_cast %251 : vector<2x8xf32> to vector<2x8x1xf32>
    %253 = vector.broadcast %252 : vector<2x8x1xf32> to vector<2x8x8xf32>
    %254 = arith.subf %250, %253 : vector<2x8x8xf32>
    %255 = math.exp %254 : vector<2x8x8xf32>
    %cst_88 = arith.constant dense<0.000000e+00> : vector<2x8xf32>
    %256 = vector.multi_reduction <add>, %255, %cst_88 [2] : vector<2x8x8xf32> to vector<2x8xf32>
    %257 = vector.shape_cast %256 : vector<2x8xf32> to vector<2x8x1xf32>
    %258 = tpu.reciprocal %257 {approx = true} : vector<2x8x1xf32> -> vector<2x8x1xf32>
    %259 = vector.broadcast %258 : vector<2x8x1xf32> to vector<2x8x8xf32>
    %260 = arith.mulf %255, %259 : vector<2x8x8xf32>
    %261 = vector.broadcast %29 : vector<1x1x32xf32> to vector<2x8x32xf32>
    %262 = arith.mulf %244, %261 : vector<2x8x32xf32>
    "tpu.trace_start"() <{level = 10 : i32, message = "bqk,bkd->bqd"}> : () -> ()
    %cst_89 = arith.constant dense<0.000000e+00> : vector<2x8x32xf32>
    %263 = tpu.matmul %260, %262, %cst_89 {dimension_numbers = #tpu.dot_dimension_numbers<[2], [1], [1], [2], [0, 0, 0, 1, 1, 2], [0], [0]>} : vector<2x8x8xf32>, vector<2x8x32xf32>, vector<2x8x32xf32> -> vector<2x8x32xf32>
    "tpu.trace_stop"() : () -> ()
    %264 = vector.broadcast %36 : vector<1x1x32xf32> to vector<2x8x32xf32>
    %265 = arith.mulf %236, %264 : vector<2x8x32xf32>
    "tpu.trace_start"() <{level = 10 : i32, message = "bqd,bkd->bqk"}> : () -> ()
    %cst_90 = arith.constant dense<0.000000e+00> : vector<2x8x8xf32>
    %266 = tpu.matmul %265, %240, %cst_90 {dimension_numbers = #tpu.dot_dimension_numbers<[2], [2], [1], [1], [0, 0, 0, 1, 1, 1], [0], [0]>} : vector<2x8x32xf32>, vector<2x8x32xf32>, vector<2x8x8xf32> -> vector<2x8x8xf32>
    "tpu.trace_stop"() : () -> ()
    %cst_91 = arith.constant 0.353553385 : f32
    %267 = vector.broadcast %cst_91 : f32 to vector<2x8x8xf32>
    %268 = arith.mulf %266, %267 : vector<2x8x8xf32>
    %269 = arith.addf %268, %21 : vector<2x8x8xf32>
    %cst_92 = arith.constant dense<0xFF800000> : vector<2x8xf32>
    %270 = vector.multi_reduction <maximumf>, %269, %cst_92 [2] : vector<2x8x8xf32> to vector<2x8xf32>
    %271 = vector.shape_cast %270 : vector<2x8xf32> to vector<2x8x1xf32>
    %272 = vector.broadcast %271 : vector<2x8x1xf32> to vector<2x8x8xf32>
    %273 = arith.subf %269, %272 : vector<2x8x8xf32>
    %274 = math.exp %273 : vector<2x8x8xf32>
    %cst_93 = arith.constant dense<0.000000e+00> : vector<2x8xf32>
    %275 = vector.multi_reduction <add>, %274, %cst_93 [2] : vector<2x8x8xf32> to vector<2x8xf32>
    %276 = vector.shape_cast %275 : vector<2x8xf32> to vector<2x8x1xf32>
    %277 = tpu.reciprocal %276 {approx = true} : vector<2x8x1xf32> -> vector<2x8x1xf32>
    %278 = vector.broadcast %277 : vector<2x8x1xf32> to vector<2x8x8xf32>
    %279 = arith.mulf %274, %278 : vector<2x8x8xf32>
    %280 = vector.broadcast %36 : vector<1x1x32xf32> to vector<2x8x32xf32>
    %281 = arith.mulf %244, %280 : vector<2x8x32xf32>
    "tpu.trace_start"() <{level = 10 : i32, message = "bqk,bkd->bqd"}> : () -> ()
    %cst_94 = arith.constant dense<0.000000e+00> : vector<2x8x32xf32>
    %282 = tpu.matmul %279, %281, %cst_94 {dimension_numbers = #tpu.dot_dimension_numbers<[2], [1], [1], [2], [0, 0, 0, 1, 1, 2], [0], [0]>} : vector<2x8x8xf32>, vector<2x8x32xf32>, vector<2x8x32xf32> -> vector<2x8x32xf32>
    "tpu.trace_stop"() : () -> ()
    %283 = vector.broadcast %43 : vector<1x1x32xf32> to vector<2x8x32xf32>
    %284 = arith.mulf %236, %283 : vector<2x8x32xf32>
    "tpu.trace_start"() <{level = 10 : i32, message = "bqd,bkd->bqk"}> : () -> ()
    %cst_95 = arith.constant dense<0.000000e+00> : vector<2x8x8xf32>
    %285 = tpu.matmul %284, %240, %cst_95 {dimension_numbers = #tpu.dot_dimension_numbers<[2], [2], [1], [1], [0, 0, 0, 1, 1, 1], [0], [0]>} : vector<2x8x32xf32>, vector<2x8x32xf32>, vector<2x8x8xf32> -> vector<2x8x8xf32>
    "tpu.trace_stop"() : () -> ()
    %cst_96 = arith.constant 0.353553385 : f32
    %286 = vector.broadcast %cst_96 : f32 to vector<2x8x8xf32>
    %287 = arith.mulf %285, %286 : vector<2x8x8xf32>
    %288 = arith.addf %287, %21 : vector<2x8x8xf32>
    %cst_97 = arith.constant dense<0xFF800000> : vector<2x8xf32>
    %289 = vector.multi_reduction <maximumf>, %288, %cst_97 [2] : vector<2x8x8xf32> to vector<2x8xf32>
    %290 = vector.shape_cast %289 : vector<2x8xf32> to vector<2x8x1xf32>
    %291 = vector.broadcast %290 : vector<2x8x1xf32> to vector<2x8x8xf32>
    %292 = arith.subf %288, %291 : vector<2x8x8xf32>
    %293 = math.exp %292 : vector<2x8x8xf32>
    %cst_98 = arith.constant dense<0.000000e+00> : vector<2x8xf32>
    %294 = vector.multi_reduction <add>, %293, %cst_98 [2] : vector<2x8x8xf32> to vector<2x8xf32>
    %295 = vector.shape_cast %294 : vector<2x8xf32> to vector<2x8x1xf32>
    %296 = tpu.reciprocal %295 {approx = true} : vector<2x8x1xf32> -> vector<2x8x1xf32>
    %297 = vector.broadcast %296 : vector<2x8x1xf32> to vector<2x8x8xf32>
    %298 = arith.mulf %293, %297 : vector<2x8x8xf32>
    %299 = vector.broadcast %43 : vector<1x1x32xf32> to vector<2x8x32xf32>
    %300 = arith.mulf %244, %299 : vector<2x8x32xf32>
    "tpu.trace_start"() <{level = 10 : i32, message = "bqk,bkd->bqd"}> : () -> ()
    %cst_99 = arith.constant dense<0.000000e+00> : vector<2x8x32xf32>
    %301 = tpu.matmul %298, %300, %cst_99 {dimension_numbers = #tpu.dot_dimension_numbers<[2], [1], [1], [2], [0, 0, 0, 1, 1, 2], [0], [0]>} : vector<2x8x8xf32>, vector<2x8x32xf32>, vector<2x8x32xf32> -> vector<2x8x32xf32>
    "tpu.trace_stop"() : () -> ()
    %302 = vector.broadcast %50 : vector<1x1x32xf32> to vector<2x8x32xf32>
    %303 = arith.mulf %236, %302 : vector<2x8x32xf32>
    "tpu.trace_start"() <{level = 10 : i32, message = "bqd,bkd->bqk"}> : () -> ()
    %cst_100 = arith.constant dense<0.000000e+00> : vector<2x8x8xf32>
    %304 = tpu.matmul %303, %240, %cst_100 {dimension_numbers = #tpu.dot_dimension_numbers<[2], [2], [1], [1], [0, 0, 0, 1, 1, 1], [0], [0]>} : vector<2x8x32xf32>, vector<2x8x32xf32>, vector<2x8x8xf32> -> vector<2x8x8xf32>
    "tpu.trace_stop"() : () -> ()
    %cst_101 = arith.constant 0.353553385 : f32
    %305 = vector.broadcast %cst_101 : f32 to vector<2x8x8xf32>
    %306 = arith.mulf %304, %305 : vector<2x8x8xf32>
    %307 = arith.addf %306, %21 : vector<2x8x8xf32>
    %cst_102 = arith.constant dense<0xFF800000> : vector<2x8xf32>
    %308 = vector.multi_reduction <maximumf>, %307, %cst_102 [2] : vector<2x8x8xf32> to vector<2x8xf32>
    %309 = vector.shape_cast %308 : vector<2x8xf32> to vector<2x8x1xf32>
    %310 = vector.broadcast %309 : vector<2x8x1xf32> to vector<2x8x8xf32>
    %311 = arith.subf %307, %310 : vector<2x8x8xf32>
    %312 = math.exp %311 : vector<2x8x8xf32>
    %cst_103 = arith.constant dense<0.000000e+00> : vector<2x8xf32>
    %313 = vector.multi_reduction <add>, %312, %cst_103 [2] : vector<2x8x8xf32> to vector<2x8xf32>
    %314 = vector.shape_cast %313 : vector<2x8xf32> to vector<2x8x1xf32>
    %315 = tpu.reciprocal %314 {approx = true} : vector<2x8x1xf32> -> vector<2x8x1xf32>
    %316 = vector.broadcast %315 : vector<2x8x1xf32> to vector<2x8x8xf32>
    %317 = arith.mulf %312, %316 : vector<2x8x8xf32>
    %318 = vector.broadcast %50 : vector<1x1x32xf32> to vector<2x8x32xf32>
    %319 = arith.mulf %244, %318 : vector<2x8x32xf32>
    "tpu.trace_start"() <{level = 10 : i32, message = "bqk,bkd->bqd"}> : () -> ()
    %cst_104 = arith.constant dense<0.000000e+00> : vector<2x8x32xf32>
    %320 = tpu.matmul %317, %319, %cst_104 {dimension_numbers = #tpu.dot_dimension_numbers<[2], [1], [1], [2], [0, 0, 0, 1, 1, 2], [0], [0]>} : vector<2x8x8xf32>, vector<2x8x32xf32>, vector<2x8x32xf32> -> vector<2x8x32xf32>
    "tpu.trace_stop"() : () -> ()
    %321 = arith.addf %263, %282 : vector<2x8x32xf32>
    %322 = arith.addf %321, %301 : vector<2x8x32xf32>
    %323 = arith.addf %322, %320 : vector<2x8x32xf32>
    %324 = vector.shape_cast %323 : vector<2x8x32xf32> to vector<16x32xf32>
    %325 = arith.truncf %324 : vector<16x32xf32> to vector<16x32xbf16>
    %cst_105 = arith.constant dense<0.000000e+00> : vector<16x32xf32>
    %326 = tpu.matmul %325, %219, %cst_105 {dimension_numbers = #tpu.dot_dimension_numbers<[1], [0], [0], [1], [0, 0, 1, 1], [], []>} : vector<16x32xbf16>, vector<32x32xbf16>, vector<16x32xf32> -> vector<16x32xf32>
    %327 = vector.broadcast %225 : vector<1x32xf32> to vector<16x32xf32>
    %328 = arith.addf %326, %327 : vector<16x32xf32>
    %329 = arith.addf %215, %328 : vector<16x32xf32>
    %cst_106 = arith.constant dense<0.000000e+00> : vector<16xf32>
    %330 = vector.multi_reduction <add>, %329, %cst_106 [1] : vector<16x32xf32> to vector<16xf32>
    %331 = vector.shape_cast %330 : vector<16xf32> to vector<16x1xf32>
    %cst_107 = arith.constant 3.200000e+01 : f32
    %332 = vector.broadcast %cst_107 : f32 to vector<16x1xf32>
    %333 = arith.divf %331, %332 : vector<16x1xf32>
    %334 = vector.broadcast %333 : vector<16x1xf32> to vector<16x32xf32>
    %335 = arith.subf %329, %334 : vector<16x32xf32>
    %336 = arith.mulf %335, %335 : vector<16x32xf32>
    %cst_108 = arith.constant dense<0.000000e+00> : vector<16xf32>
    %337 = vector.multi_reduction <add>, %336, %cst_108 [1] : vector<16x32xf32> to vector<16xf32>
    %338 = vector.shape_cast %337 : vector<16xf32> to vector<16x1xf32>
    %cst_109 = arith.constant 3.200000e+01 : f32
    %339 = vector.broadcast %cst_109 : f32 to vector<16x1xf32>
    %340 = arith.divf %338, %339 : vector<16x1xf32>
    %cst_110 = arith.constant 9.99999974E-6 : f32
    %341 = vector.broadcast %cst_110 : f32 to vector<16x1xf32>
    %342 = arith.addf %340, %341 : vector<16x1xf32>
    %343 = math.rsqrt %342 : vector<16x1xf32>
    %344 = vector.broadcast %343 : vector<16x1xf32> to vector<16x32xf32>
    %345 = arith.mulf %335, %344 : vector<16x32xf32>
    %346 = vector.broadcast %226 : vector<1x32xf32> to vector<16x32xf32>
    %347 = arith.mulf %345, %346 : vector<16x32xf32>
    %348 = vector.broadcast %227 : vector<1x32xf32> to vector<16x32xf32>
    %349 = arith.addf %347, %348 : vector<16x32xf32>
    %350 = arith.truncf %349 : vector<16x32xf32> to vector<16x32xbf16>
    %cst_111 = arith.constant dense<0.000000e+00> : vector<16x64xf32>
    %351 = tpu.matmul %350, %220, %cst_111 {dimension_numbers = #tpu.dot_dimension_numbers<[1], [0], [0], [1], [0, 0, 1, 1], [], []>} : vector<16x32xbf16>, vector<32x64xbf16>, vector<16x64xf32> -> vector<16x64xf32>
    %352 = vector.broadcast %228 : vector<1x64xf32> to vector<16x64xf32>
    %353 = arith.addf %351, %352 : vector<16x64xf32>
    %cst_112 = arith.constant 0.000000e+00 : f32
    %354 = vector.broadcast %cst_112 : f32 to vector<16x64xf32>
    %355 = arith.maximumf %353, %354 : vector<16x64xf32>
    %356 = arith.truncf %355 : vector<16x64xf32> to vector<16x64xbf16>
    %cst_113 = arith.constant dense<0.000000e+00> : vector<16x32xf32>
    %357 = tpu.matmul %356, %221, %cst_113 {dimension_numbers = #tpu.dot_dimension_numbers<[1], [0], [0], [1], [0, 0, 1, 1], [], []>} : vector<16x64xbf16>, vector<64x32xbf16>, vector<16x32xf32> -> vector<16x32xf32>
    %358 = vector.broadcast %229 : vector<1x32xf32> to vector<16x32xf32>
    %359 = arith.addf %357, %358 : vector<16x32xf32>
    %360 = arith.addf %349, %359 : vector<16x32xf32>
    %cst_114 = arith.constant dense<0.000000e+00> : vector<16xf32>
    %361 = vector.multi_reduction <add>, %360, %cst_114 [1] : vector<16x32xf32> to vector<16xf32>
    %362 = vector.shape_cast %361 : vector<16xf32> to vector<16x1xf32>
    %cst_115 = arith.constant 3.200000e+01 : f32
    %363 = vector.broadcast %cst_115 : f32 to vector<16x1xf32>
    %364 = arith.divf %362, %363 : vector<16x1xf32>
    %365 = vector.broadcast %364 : vector<16x1xf32> to vector<16x32xf32>
    %366 = arith.subf %360, %365 : vector<16x32xf32>
    %367 = arith.mulf %366, %366 : vector<16x32xf32>
    %cst_116 = arith.constant dense<0.000000e+00> : vector<16xf32>
    %368 = vector.multi_reduction <add>, %367, %cst_116 [1] : vector<16x32xf32> to vector<16xf32>
    %369 = vector.shape_cast %368 : vector<16xf32> to vector<16x1xf32>
    %cst_117 = arith.constant 3.200000e+01 : f32
    %370 = vector.broadcast %cst_117 : f32 to vector<16x1xf32>
    %371 = arith.divf %369, %370 : vector<16x1xf32>
    %cst_118 = arith.constant 9.99999974E-6 : f32
    %372 = vector.broadcast %cst_118 : f32 to vector<16x1xf32>
    %373 = arith.addf %371, %372 : vector<16x1xf32>
    %374 = math.rsqrt %373 : vector<16x1xf32>
    %375 = vector.broadcast %374 : vector<16x1xf32> to vector<16x32xf32>
    %376 = arith.mulf %366, %375 : vector<16x32xf32>
    %377 = vector.broadcast %230 : vector<1x32xf32> to vector<16x32xf32>
    %378 = arith.mulf %376, %377 : vector<16x32xf32>
    %379 = vector.broadcast %231 : vector<1x32xf32> to vector<16x32xf32>
    %380 = arith.addf %378, %379 : vector<16x32xf32>
    %c0_119 = arith.constant 0 : index
    %c0_120 = arith.constant 0 : index
    %381 = vector.load %arg1[%c0_119, %c0_120] : memref<608x128xbf16, #tpu.memory_space<vmem>>, vector<32x128xbf16>
    %382 = arith.truncf %380 : vector<16x32xf32> to vector<16x32xbf16>
    %cst_121 = arith.constant dense<0.000000e+00> : vector<16x128xf32>
    %383 = tpu.matmul %382, %381, %cst_121 {dimension_numbers = #tpu.dot_dimension_numbers<[1], [0], [0], [1], [0, 0, 1, 1], [], []>} : vector<16x32xbf16>, vector<32x128xbf16>, vector<16x128xf32> -> vector<16x128xf32>
    %c0_122 = arith.constant 0 : index
    %c0_123 = arith.constant 0 : index
    %384 = vector.load %arg3[%c0_122, %c0_123] : memref<16x128xf32, #tpu.memory_space<vmem>>, vector<16x128xf32>
    tpu.vector_store %arg3[%c0_122, %c0_123], %383 {strides = array<i32>} : memref<16x128xf32, #tpu.memory_space<vmem>>, vector<16x128xf32>,
    return
  }
}

</mosaic_0001>

<llo_original>
// kernel: tpu_custom_call.1
$region0: #{tpu_custom_call.1}
  #allocation0 [shape = 'u32[]', space=smem, size = 0x4, offset = 0x4, fixed_abs, tag = 'smem constant byte address 0x4 - core index']
  #allocation1 [shape = 'u32[144,128]{1,0:T(1,128)}', space=vmem, size = 0x12000, scoped, tag = 'internal scratch']
  %s0 = inlined_call_operand.vmem [shape: s32[18,8], index: 0, kind: input, shape index: {}]
  %s1 = inlined_call_operand.hbm [shape: bf16[608,128], index: 1, kind: input, shape index: {}]
  %s2 = inlined_call_operand.hbm [shape: f32[36,128], index: 2, kind: input, shape index: {}]
  %s3 = inlined_call_operand.hbm [shape: f32[16,128], index: 3, kind: output, shape index: {}]
  %s4 = sld [smem:[#allocation0]]
  $region30: #{tpu_custom_call.1} parent=0
    _
  %s6 = ssub.s32 1, %s4
  %s7 = scalar_select 0, %s6, %s4
  $region1: #{tpu_custom_call.1} parent=0
    #allocation2 [shape = 'u8[155648]{0}', space=vmem, size = 0x26000, scoped, tag = 'input window, operand 1, single buffered']
    #allocation3 [shape = 's32[1]{0}', space=sflag, size = 0x4, scoped, tag = 'scoped memory for tpu_custom_call.1']
    #allocation4 [shape = 's32[1]{0}', space=sflag, size = 0x4, scoped, tag = 'scoped memory for tpu_custom_call.1']
    #allocation5 [shape = 'u8[20480]{0}', space=vmem, size = 0x5000, scoped, tag = 'input window, operand 2, single buffered']
    #allocation6 [shape = 's32[1]{0}', space=sflag, size = 0x4, scoped, tag = 'scoped memory for tpu_custom_call.1']
    #allocation7 [shape = 'u8[8192]{0}', space=vmem, size = 0x2000, scoped, tag = 'output window, operand 0, single buffered']
    %8 = vsyncpa [#allocation3], 0
    %9 = vsyncpa [#allocation6], 0
    %10 = vsyncpa [#allocation4], 0
    // Predicated region
    $region2: #{tpu_custom_call.1} parent=1 // pred_check
      _
    $region3: #{tpu_custom_call.1} parent=1 // pred_check_branch
      %12 = sbr.rel (0) target = $region5
    $region4: #{tpu_custom_call.1} parent=1 // pred_region
      _
    $region5: #{tpu_custom_call.1} parent=1 // pred_fallthru
      _
    // Predicated region
    $region6: #{tpu_custom_call.1} parent=1 // pred_check
      _
    $region7: #{tpu_custom_call.1} parent=1 // pred_check_branch
      %14 = sbr.rel (0) target = $region9
    $region8: #{tpu_custom_call.1} parent=1 // pred_region
      %s16 = ssub.s32 4864, 4864
      %17 = vsyncadd [#allocation3], %s16
      %s18 = sshll.u32 [#allocation2], 4
      %s19 = int_to_ptr.vmem [resolvable:$true] %s18
      %24 = dma.hbm_to_vmem [thread:$0]  %s1, 4864, %s19, [#allocation3], 64, 64, 4
    $region9: #{tpu_custom_call.1} parent=1 // pred_fallthru
      _
    // Predicated region
    $region10: #{tpu_custom_call.1} parent=1 // pred_check
      _
    $region11: #{tpu_custom_call.1} parent=1 // pred_check_branch
      %26 = sbr.rel (0) target = $region13
    $region12: #{tpu_custom_call.1} parent=1 // pred_region
      %s28 = ssub.s32 640, 640
      %29 = vsyncadd [#allocation6], %s28
      %s30 = sshll.u32 [#allocation5], 4
      %s31 = int_to_ptr.vmem [resolvable:$true] %s30
      %36 = dma.hbm_to_vmem [thread:$0]  %s2, 640, %s31, [#allocation6], 128, 128, 8
    $region13: #{tpu_custom_call.1} parent=1 // pred_fallthru
      _
    // Predicated region
    $region14: #{tpu_custom_call.1} parent=1 // pred_check
      _
    $region15: #{tpu_custom_call.1} parent=1 // pred_check_branch
      %38 = sbr.rel (0) target = $region17
    $region16: #{tpu_custom_call.1} parent=1 // pred_region
      %39 = dma.done [#allocation3], 4864
    $region17: #{tpu_custom_call.1} parent=1 // pred_fallthru
      _
    // Predicated region
    $region18: #{tpu_custom_call.1} parent=1 // pred_check
      _
    $region19: #{tpu_custom_call.1} parent=1 // pred_check_branch
      %41 = sbr.rel (0) target = $region21
    $region20: #{tpu_custom_call.1} parent=1 // pred_region
      %42 = dma.done [#allocation6], 640
    $region21: #{tpu_custom_call.1} parent=1 // pred_fallthru
      _
    %v44 = vld [vmem:[%s0] sm:$0xff]
    %v45 = vld [vmem:[%s0 + $0x8] sm:$0xff]
    %v46 = vld [vmem:[%s0 + $0x10] sm:$0x3]
    %v47 = vlaneseq
    %v48 = vand.u32 %v47, 127
    %49 = vset.pattern.permute.xlu0 0
    %50 = vperm.xlu0 %49, %v44
    %v51 = vpop.permute.xlu0 %50
    %52 = vset.pattern.permute.xlu0 0
    %53 = vperm.xlu0 %52, %v45
    %v54 = vpop.permute.xlu0 %53
    %vm55 = vcmp.eq.s32.totalorder %v51, %v48
    %vm56 = vcmp.eq.s32.totalorder %v54, %v48
    %v57 = vsel %vm55, 1, 0
    %v58 = vsel %vm56, 1, 0
    %v59 = vcvt.s32.f32 %v57
    %v60 = vcvt.s32.f32 %v58
    %v61 = vpack.c.bf16 %v60, %v59
    %v62 = vld [vmem:[#allocation2 + $0x10] sm:$0xf]
    %v63 = vld [vmem:[#allocation2 + $0x14] sm:$0xf]
    %v64 = vld [vmem:[#allocation2 + $0x18] sm:$0xf]
    %v65 = vld [vmem:[#allocation2 + $0x1c] sm:$0xf]
    %v66 = vld [vmem:[#allocation2 + $0x20] sm:$0xf]
    %v67 = vld [vmem:[#allocation2 + $0x24] sm:$0xf]
    %v68 = vld [vmem:[#allocation2 + $0x28] sm:$0xf]
    %v69 = vld [vmem:[#allocation2 + $0x2c] sm:$0xf]
    %v70 = vld [vmem:[#allocation2 + $0x30] sm:$0xf]
    %v71 = vld [vmem:[#allocation2 + $0x34] sm:$0xf]
    %v72 = vld [vmem:[#allocation2 + $0x38] sm:$0xf]
    %v73 = vld [vmem:[#allocation2 + $0x3c] sm:$0xf]
    %v74 = vld [vmem:[#allocation2 + $0x40] sm:$0xf]
    %v75 = vld [vmem:[#allocation2 + $0x44] sm:$0xf]
    %v76 = vld [vmem:[#allocation2 + $0x48] sm:$0xf]
    %v77 = vld [vmem:[#allocation2 + $0x4c] sm:$0xf]
    %v78 = vld [vmem:[#allocation5] sm:$0xff]
    %v95 = vunpack.c.l.b16 %v62
    %v96 = vunpack.c.l.b16 %v63
    %v97 = vunpack.c.l.b16 %v64
    %v98 = vunpack.c.l.b16 %v65
    %v99 = vunpack.c.l.b16 %v66
    %v100 = vunpack.c.l.b16 %v67
    %v101 = vunpack.c.l.b16 %v68
    %v102 = vunpack.c.l.b16 %v69
    %v103 = vunpack.c.l.b16 %v70
    %v104 = vunpack.c.l.b16 %v71
    %v105 = vunpack.c.l.b16 %v72
    %v106 = vunpack.c.l.b16 %v73
    %v107 = vunpack.c.l.b16 %v74
    %v108 = vunpack.c.l.b16 %v75
    %v109 = vunpack.c.l.b16 %v76
    %v110 = vunpack.c.l.b16 %v77
    %v111 = vpack.c.b16 %v96, %v95
    %v112 = vpack.c.b16 %v98, %v97
    %v113 = vpack.c.b16 %v100, %v99
    %v114 = vpack.c.b16 %v102, %v101
    %v115 = vpack.c.b16 %v104, %v103
    %v116 = vpack.c.b16 %v106, %v105
    %v117 = vpack.c.b16 %v108, %v107
    %v118 = vpack.c.b16 %v110, %v109
    %127 = vmatprep.subr.bf16.mxu0 0
    %128 = vmatpush1.bf16.msra.mxu0 %v118
    %129 = vmatprep.subr.bf16.mxu0 0
    %130 = vmatpush1.bf16.msra.mxu0 %v117
    %131 = vmatprep.subr.bf16.mxu0 0
    %132 = vmatpush1.bf16.msra.mxu0 %v116
    %133 = vmatprep.subr.bf16.mxu0 0
    %134 = vmatpush1.bf16.msra.mxu0 %v115
    %135 = vmatprep.subr.bf16.mxu0 0
    %136 = vmatpush1.bf16.msra.mxu0 %v114
    %137 = vmatprep.subr.bf16.mxu0 0
    %138 = vmatpush1.bf16.msra.mxu0 %v113
    %139 = vmatprep.subr.bf16.mxu0 0
    %140 = vmatpush1.bf16.msra.mxu0 %v112
    %141 = vmatprep.subr.bf16.mxu0 0
    %142 = vmatpush1.bf16.msra.mxu0 %v111
    %143 = vmatprep.subr.bf16.mxu0 0
    %144 = vmatpush2.bf16.msra.mxu0 0
    %145 = vmatprep.subr.bf16.mxu0 0
    %146 = vmatpush2.bf16.msra.mxu0 0
    %147 = vmatprep.subr.bf16.mxu0 0
    %148 = vmatpush2.bf16.msra.mxu0 0
    %149 = vmatprep.subr.bf16.mxu0 0
    %150 = vmatpush2.bf16.msra.mxu0 0
    %151 = vmatprep.subr.bf16.mxu0 0
    %152 = vmatpush2.bf16.msra.mxu0 0
    %153 = vmatprep.subr.bf16.mxu0 0
    %154 = vmatpush2.bf16.msra.mxu0 0
    %155 = vmatprep.subr.bf16.mxu0 0
    %156 = vmatpush2.bf16.msra.mxu0 0
    %157 = vmatprep.subr.bf16.mxu0 0
    %158 = vmatpush2.bf16.msra.mxu0 0
    %159 = vmatprep.mubr.bf16.mxu0 0
    %160 = vmatmul.mubr.bf16.gmra.mxu0 %v61
    %v161 = vpop.f32.mrf.mxu0
    %v162 = vadd.f32 %v78, %v161
    %v163 = vpop.f32.mrf.mxu0
    %v164 = vpop.f32.mrf.mxu0
    %v165 = vadd.f32 %v78, %v164
    %v166 = vpop.f32.mrf.mxu0
    %167 = vdwg.mxu0
    %vm168 = vcmp.eq.s32.totalorder %v46, 0
    %v169 = vsel %vm168, -1e+30, 0.0
    %v172 = vunpack.c.l.s4 1966171168
    %v173 = vunpack.c.0.s8 %v172
    %v174 = vlaneseq
    %v175 = vshrl.u32 %v174, 7
    %v176 = vsub.s32 %v173, %v175
    %v177 = vrot.slane %v169, %v176
    %v178 = vcombine.high %v177, %v177
    %v180 = vunpack.c.l.s4 1966171168
    %v181 = vunpack.c.0.s8 %v180
    %v182 = vlaneseq
    %v183 = vshrl.u32 %v182, 7
    %v184 = vsub.s32 %v181, %v183
    %v185 = vrot.slane %v177, %v184
    %v187 = vunpack.c.l.s4 1966171168
    %v188 = vunpack.c.0.s8 %v187
    %v189 = vlaneseq
    %v190 = vshrl.u32 %v189, 7
    %v191 = vsub.s32 %v188, %v190
    %v192 = vrot.slane %v178, %v191
    %v193 = vlaneseq
    %v194 = vshrl.u32 %v193, 7
    %v195 = vsub.s32 0, %v194
    %v196 = vrot.slane %v185, %v195
    %v197 = vlaneseq
    %v198 = vshrl.u32 %v197, 7
    %v199 = vsub.s32 0, %v198
    %v200 = vrot.slane %v192, %v199
    %vm203 = vcmp.ge.s32.totalorder %v48, 0
    %vm204 = vcmp.lt.s32.totalorder %v48, 8
    %vm205 = vmand %vm203, %vm204
    %v206 = vsel %vm205, 1, 0
    %v207 = vcvt.s32.f32 %v206
    %vm208 = vcmp.ge.s32.totalorder %v48, 8
    %vm209 = vcmp.lt.s32.totalorder %v48, 16
    %vm210 = vmand %vm208, %vm209
    %v211 = vsel %vm210, 1, 0
    %v212 = vcvt.s32.f32 %v211
    %vm213 = vcmp.ge.s32.totalorder %v48, 16
    %vm214 = vcmp.lt.s32.totalorder %v48, 24
    %vm215 = vmand %vm213, %vm214
    %v216 = vsel %vm215, 1, 0
    %v217 = vcvt.s32.f32 %v216
    %vm218 = vcmp.ge.s32.totalorder %v48, 24
    %vm219 = vcmp.lt.s32.totalorder %v48, 32
    %vm220 = vmand %vm218, %vm219
    %v221 = vsel %vm220, 1, 0
    %v222 = vcvt.s32.f32 %v221
    %v223 = vld [vmem:[#allocation2 + $0x50] sm:$0xf]
    %v224 = vld [vmem:[#allocation2 + $0x54] sm:$0xf]
    %v225 = vld [vmem:[#allocation2 + $0x58] sm:$0xf]
    %v226 = vld [vmem:[#allocation2 + $0x5c] sm:$0xf]
    %v227 = vld [vmem:[#allocation2 + $0x60] sm:$0xf]
    %v228 = vld [vmem:[#allocation2 + $0x64] sm:$0xf]
    %v229 = vld [vmem:[#allocation2 + $0x68] sm:$0xf]
    %v230 = vld [vmem:[#allocation2 + $0x6c] sm:$0xf]
    %v231 = vld [vmem:[#allocation2 + $0x70] sm:$0xf]
    %v232 = vld [vmem:[#allocation2 + $0x74] sm:$0xf]
    %v233 = vld [vmem:[#allocation2 + $0x78] sm:$0xf]
    %v234 = vld [vmem:[#allocation2 + $0x7c] sm:$0xf]
    %v235 = vld [vmem:[#allocation2 + $0x80] sm:$0xf]
    %v236 = vld [vmem:[#allocation2 + $0x84] sm:$0xf]
    %v237 = vld [vmem:[#allocation2 + $0x88] sm:$0xf]
    %v238 = vld [vmem:[#allocation2 + $0x8c] sm:$0xf]
    %v239 = vld [vmem:[#allocation2 + $0x90] sm:$0xf]
    %v240 = vld [vmem:[#allocation2 + $0x94] sm:$0xf]
    %v241 = vld [vmem:[#allocation2 + $0x98] sm:$0xf]
    %v242 = vld [vmem:[#allocation2 + $0x9c] sm:$0xf]
    %v243 = vld [vmem:[#allocation2 + $0xa0] sm:$0xf]
    %v244 = vld [vmem:[#allocation2 + $0xa4] sm:$0xf]
    %v245 = vld [vmem:[#allocation2 + $0xa8] sm:$0xf]
    %v246 = vld [vmem:[#allocation2 + $0xac] sm:$0xf]
    %v247 = vld [vmem:[#allocation2 + $0xb0] sm:$0xf]
    %v248 = vld [vmem:[#allocation2 + $0xb4] sm:$0xf]
    %v249 = vld [vmem:[#allocation2 + $0xb8] sm:$0xf]
    %v250 = vld [vmem:[#allocation2 + $0xbc] sm:$0xf]
    %v251 = vld [vmem:[#allocation5 + $0x10] sm:$0x1]
    %v252 = vld [vmem:[#allocation5 + $0x11] sm:$0x1]
    %v253 = vld [vmem:[#allocation5 + $0x12] sm:$0x1]
    %v254 = vld [vmem:[#allocation5 + $0x13] sm:$0x1]
    %v255 = vld [vmem:[#allocation5 + $0x14] sm:$0x1]
    %v256 = vld [vmem:[#allocation5 + $0x15] sm:$0x1]
    %v257 = vld [vmem:[#allocation5 + $0x16] sm:$0x1]
    %v258 = vld [vmem:[#allocation5 + $0x17] sm:$0x1]
    %v259 = vld [vmem:[#allocation5 + $0x18] sm:$0x1]
    %v260 = vld [vmem:[#allocation5 + $0x19] sm:$0x1]
    %v261 = vpack.c.bf16 %v165, %v162
    %v262 = vlaneseq
    %v263 = vshrl.u32 %v262, 7
    %v264 = vsub.s32 0, %v263
    %v265 = vrot.slane %v251, %v264
    %v270 = vunpack.c.l.b16 %v223
    %v271 = vunpack.c.l.b16 %v224
    %v272 = vunpack.c.l.b16 %v225
    %v273 = vunpack.c.l.b16 %v226
    %v274 = vpack.c.b16 %v271, %v270
    %v275 = vpack.c.b16 %v273, %v272
    %vm278 = vcmask 261120
    %v280 = vsel %vm278, %v261, 0
    %282 = vmatprep.subr.bf16.mxu0 0
    %283 = vmatpush1.bf16.msra.mxu0 0
    %284 = vmatprep.subr.bf16.mxu0 0
    %285 = vmatpush1.bf16.msra.mxu0 0
    %286 = vmatprep.subr.bf16.mxu0 0
    %287 = vmatpush1.bf16.msra.mxu0 0
    %288 = vmatprep.subr.bf16.mxu0 0
    %289 = vmatpush1.bf16.msra.mxu0 0
    %290 = vmatprep.subr.bf16.mxu0 0
    %291 = vmatpush1.bf16.msra.mxu0 0
    %292 = vmatprep.subr.bf16.mxu0 0
    %293 = vmatpush1.bf16.msra.mxu0 0
    %294 = vmatprep.subr.bf16.mxu0 0
    %295 = vmatpush1.bf16.msra.mxu0 %v275
    %296 = vmatprep.subr.bf16.mxu0 0
    %297 = vmatpush1.bf16.msra.mxu0 %v274
    %298 = vmatprep.subr.bf16.mxu0 0
    %299 = vmatpush2.bf16.msra.mxu0 0
    %300 = vmatprep.subr.bf16.mxu0 0
    %301 = vmatpush2.bf16.msra.mxu0 0
    %302 = vmatprep.subr.bf16.mxu0 0
    %303 = vmatpush2.bf16.msra.mxu0 0
    %304 = vmatprep.subr.bf16.mxu0 0
    %305 = vmatpush2.bf16.msra.mxu0 0
    %306 = vmatprep.subr.bf16.mxu0 0
    %307 = vmatpush2.bf16.msra.mxu0 0
    %308 = vmatprep.subr.bf16.mxu0 0
    %309 = vmatpush2.bf16.msra.mxu0 0
    %310 = vmatprep.subr.bf16.mxu0 0
    %311 = vmatpush2.bf16.msra.mxu0 0
    %312 = vmatprep.subr.bf16.mxu0 0
    %313 = vmatpush2.bf16.msra.mxu0 0
    %314 = vmatprep.mubr.bf16.mxu0 0
    %315 = vmatmul.mubr.bf16.gmra.mxu0 %v280
    %v316 = vpop.f32.mrf.mxu0
    %v317 = vadd.f32 %v265, %v316
    %v318 = vpop.f32.mrf.mxu0
    %v319 = vpop.f32.mrf.mxu0
    %v320 = vadd.f32 %v265, %v319
    %v321 = vpop.f32.mrf.mxu0
    %322 = vdwg.mxu0
    %v323 = vlaneseq
    %v324 = vshrl.u32 %v323, 7
    %v325 = vsub.s32 0, %v324
    %v326 = vrot.slane %v252, %v325
    %v331 = vunpack.c.l.b16 %v227
    %v332 = vunpack.c.l.b16 %v228
    %v333 = vunpack.c.l.b16 %v229
    %v334 = vunpack.c.l.b16 %v230
    %v335 = vpack.c.b16 %v332, %v331
    %v336 = vpack.c.b16 %v334, %v333
    %339 = vmatprep.subr.bf16.mxu0 0
    %340 = vmatpush1.bf16.msra.mxu0 0
    %341 = vmatprep.subr.bf16.mxu0 0
    %342 = vmatpush1.bf16.msra.mxu0 0
    %343 = vmatprep.subr.bf16.mxu0 0
    %344 = vmatpush1.bf16.msra.mxu0 0
    %345 = vmatprep.subr.bf16.mxu0 0
    %346 = vmatpush1.bf16.msra.mxu0 0
    %347 = vmatprep.subr.bf16.mxu0 0
    %348 = vmatpush1.bf16.msra.mxu0 0
    %349 = vmatprep.subr.bf16.mxu0 0
    %350 = vmatpush1.bf16.msra.mxu0 0
    %351 = vmatprep.subr.bf16.mxu0 0
    %352 = vmatpush1.bf16.msra.mxu0 %v336
    %353 = vmatprep.subr.bf16.mxu0 0
    %354 = vmatpush1.bf16.msra.mxu0 %v335
    %355 = vmatprep.subr.bf16.mxu0 0
    %356 = vmatpush2.bf16.msra.mxu0 0
    %357 = vmatprep.subr.bf16.mxu0 0
    %358 = vmatpush2.bf16.msra.mxu0 0
    %359 = vmatprep.subr.bf16.mxu0 0
    %360 = vmatpush2.bf16.msra.mxu0 0
    %361 = vmatprep.subr.bf16.mxu0 0
    %362 = vmatpush2.bf16.msra.mxu0 0
    %363 = vmatprep.subr.bf16.mxu0 0
    %364 = vmatpush2.bf16.msra.mxu0 0
    %365 = vmatprep.subr.bf16.mxu0 0
    %366 = vmatpush2.bf16.msra.mxu0 0
    %367 = vmatprep.subr.bf16.mxu0 0
    %368 = vmatpush2.bf16.msra.mxu0 0
    %369 = vmatprep.subr.bf16.mxu0 0
    %370 = vmatpush2.bf16.msra.mxu0 0
    %371 = vmatprep.mubr.bf16.mxu0 0
    %372 = vmatmul.mubr.bf16.gmra.mxu0 %v280
    %v373 = vpop.f32.mrf.mxu0
    %v374 = vadd.f32 %v326, %v373
    %v375 = vpop.f32.mrf.mxu0
    %v376 = vpop.f32.mrf.mxu0
    %v377 = vadd.f32 %v326, %v376
    %v378 = vpop.f32.mrf.mxu0
    %379 = vdwg.mxu0
    %v380 = vlaneseq
    %v381 = vshrl.u32 %v380, 7
    %v382 = vsub.s32 0, %v381
    %v383 = vrot.slane %v253, %v382
    %v388 = vunpack.c.l.b16 %v231
    %v389 = vunpack.c.l.b16 %v232
    %v390 = vunpack.c.l.b16 %v233
    %v391 = vunpack.c.l.b16 %v234
    %v392 = vpack.c.b16 %v389, %v388
    %v393 = vpack.c.b16 %v391, %v390
    %396 = vmatprep.subr.bf16.mxu0 0
    %397 = vmatpush1.bf16.msra.mxu0 0
    %398 = vmatprep.subr.bf16.mxu0 0
    %399 = vmatpush1.bf16.msra.mxu0 0
    %400 = vmatprep.subr.bf16.mxu0 0
    %401 = vmatpush1.bf16.msra.mxu0 0
    %402 = vmatprep.subr.bf16.mxu0 0
    %403 = vmatpush1.bf16.msra.mxu0 0
    %404 = vmatprep.subr.bf16.mxu0 0
    %405 = vmatpush1.bf16.msra.mxu0 0
    %406 = vmatprep.subr.bf16.mxu0 0
    %407 = vmatpush1.bf16.msra.mxu0 0
    %408 = vmatprep.subr.bf16.mxu0 0
    %409 = vmatpush1.bf16.msra.mxu0 %v393
    %410 = vmatprep.subr.bf16.mxu0 0
    %411 = vmatpush1.bf16.msra.mxu0 %v392
    %412 = vmatprep.subr.bf16.mxu0 0
    %413 = vmatpush2.bf16.msra.mxu0 0
    %414 = vmatprep.subr.bf16.mxu0 0
    %415 = vmatpush2.bf16.msra.mxu0 0
    %416 = vmatprep.subr.bf16.mxu0 0
    %417 = vmatpush2.bf16.msra.mxu0 0
    %418 = vmatprep.subr.bf16.mxu0 0
    %419 = vmatpush2.bf16.msra.mxu0 0
    %420 = vmatprep.subr.bf16.mxu0 0
    %421 = vmatpush2.bf16.msra.mxu0 0
    %422 = vmatprep.subr.bf16.mxu0 0
    %423 = vmatpush2.bf16.msra.mxu0 0
    %424 = vmatprep.subr.bf16.mxu0 0
    %425 = vmatpush2.bf16.msra.mxu0 0
    %426 = vmatprep.subr.bf16.mxu0 0
    %427 = vmatpush2.bf16.msra.mxu0 0
    %428 = vmatprep.mubr.bf16.mxu0 0
    %429 = vmatmul.mubr.bf16.gmra.mxu0 %v280
    %v430 = vpop.f32.mrf.mxu0
    %v431 = vadd.f32 %v383, %v430
    %v432 = vpop.f32.mrf.mxu0
    %v433 = vpop.f32.mrf.mxu0
    %v434 = vadd.f32 %v383, %v433
    %v435 = vpop.f32.mrf.mxu0
    %436 = vdwg.mxu0
    %v437 = vmul.f32 %v317, %v207
    %v438 = vmul.f32 %v320, %v207
    %v440 = vsel %vm278, %v437, 0
    %v443 = vsel %vm278, %v374, 0
    %445 = vmatprep.subr.mxu0 0.0
    %446 = vmatpush1.xpose.msra.mxu0 0.0
    %447 = vmatprep.subr.mxu0 0.0
    %448 = vmatpush1.xpose.msra.mxu0 0.0
    %449 = vmatprep.subr.mxu0 0.0
    %450 = vmatpush1.xpose.msra.mxu0 0.0
    %451 = vmatprep.subr.mxu0 0.0
    %452 = vmatpush1.xpose.msra.mxu0 0.0
    %453 = vmatprep.subr.mxu0 0.0
    %454 = vmatpush1.xpose.msra.mxu0 0.0
    %455 = vmatprep.subr.mxu0 0.0
    %456 = vmatpush1.xpose.msra.mxu0 0.0
    %457 = vmatprep.subr.mxu0 0.0
    %458 = vmatpush1.xpose.msra.mxu0 0.0
    %459 = vmatprep.subr.mxu0 0.0
    %460 = vmatpush1.xpose.msra.mxu0 0.0
    %461 = vmatprep.subr.mxu0 0.0
    %462 = vmatpush1.xpose.msra.mxu0 0.0
    %463 = vmatprep.subr.mxu0 0.0
    %464 = vmatpush1.xpose.msra.mxu0 0.0
    %465 = vmatprep.subr.mxu0 0.0
    %466 = vmatpush1.xpose.msra.mxu0 0.0
    %467 = vmatprep.subr.mxu0 0.0
    %468 = vmatpush1.xpose.msra.mxu0 0.0
    %469 = vmatprep.subr.mxu0 0.0
    %470 = vmatpush1.xpose.msra.mxu0 0.0
    %471 = vmatprep.subr.mxu0 0.0
    %472 = vmatpush1.xpose.msra.mxu0 0.0
    %473 = vmatprep.subr.mxu0 0.0
    %474 = vmatpush1.xpose.msra.mxu0 0.0
    %475 = vmatprep.subr.mxu0 0.0
    %476 = vmatpush1.xpose.msra.mxu0 %v443
    %477 = vmatprep.subr.mxu0 0.0
    %478 = vmatpush2.xpose.msra.mxu0 0.0
    %479 = vmatprep.subr.mxu0 0.0
    %480 = vmatpush2.xpose.msra.mxu0 0.0
    %481 = vmatprep.subr.mxu0 0.0
    %482 = vmatpush2.xpose.msra.mxu0 0.0
    %483 = vmatprep.subr.mxu0 0.0
    %484 = vmatpush2.xpose.msra.mxu0 0.0
    %485 = vmatprep.subr.mxu0 0.0
    %486 = vmatpush2.xpose.msra.mxu0 0.0
    %487 = vmatprep.subr.mxu0 0.0
    %488 = vmatpush2.xpose.msra.mxu0 0.0
    %489 = vmatprep.subr.mxu0 0.0
    %490 = vmatpush2.xpose.msra.mxu0 0.0
    %491 = vmatprep.subr.mxu0 0.0
    %492 = vmatpush2.xpose.msra.mxu0 0.0
    %493 = vmatprep.subr.mxu0 0.0
    %494 = vmatpush2.xpose.msra.mxu0 0.0
    %495 = vmatprep.subr.mxu0 0.0
    %496 = vmatpush2.xpose.msra.mxu0 0.0
    %497 = vmatprep.subr.mxu0 0.0
    %498 = vmatpush2.xpose.msra.mxu0 0.0
    %499 = vmatprep.subr.mxu0 0.0
    %500 = vmatpush2.xpose.msra.mxu0 0.0
    %501 = vmatprep.subr.mxu0 0.0
    %502 = vmatpush2.xpose.msra.mxu0 0.0
    %503 = vmatprep.subr.mxu0 0.0
    %504 = vmatpush2.xpose.msra.mxu0 0.0
    %505 = vmatprep.subr.mxu0 0.0
    %506 = vmatpush2.xpose.msra.mxu0 0.0
    %507 = vmatprep.subr.mxu0 0.0
    %508 = vmatpush2.xpose.msra.mxu0 0.0
    %509 = vmatprep.mubr.f32.mxu0 0.0
    %510 = vmatmul.mubr.f32.gmra.mxu0 %v440
    %v511 = vpop.f32.mrf.mxu0
    %v512 = vadd.f32 0.0, %v511
    %v513 = vpop.f32.mrf.mxu0
    %514 = vdwg.mxu0
    %v516 = vsel %vm278, %v438, 0
    %v519 = vsel %vm278, %v377, 0
    %521 = vmatprep.subr.mxu0 0.0
    %522 = vmatpush1.xpose.msra.mxu0 0.0
    %523 = vmatprep.subr.mxu0 0.0
    %524 = vmatpush1.xpose.msra.mxu0 0.0
    %525 = vmatprep.subr.mxu0 0.0
    %526 = vmatpush1.xpose.msra.mxu0 0.0
    %527 = vmatprep.subr.mxu0 0.0
    %528 = vmatpush1.xpose.msra.mxu0 0.0
    %529 = vmatprep.subr.mxu0 0.0
    %530 = vmatpush1.xpose.msra.mxu0 0.0
    %531 = vmatprep.subr.mxu0 0.0
    %532 = vmatpush1.xpose.msra.mxu0 0.0
    %533 = vmatprep.subr.mxu0 0.0
    %534 = vmatpush1.xpose.msra.mxu0 0.0
    %535 = vmatprep.subr.mxu0 0.0
    %536 = vmatpush1.xpose.msra.mxu0 0.0
    %537 = vmatprep.subr.mxu0 0.0
    %538 = vmatpush1.xpose.msra.mxu0 0.0
    %539 = vmatprep.subr.mxu0 0.0
    %540 = vmatpush1.xpose.msra.mxu0 0.0
    %541 = vmatprep.subr.mxu0 0.0
    %542 = vmatpush1.xpose.msra.mxu0 0.0
    %543 = vmatprep.subr.mxu0 0.0
    %544 = vmatpush1.xpose.msra.mxu0 0.0
    %545 = vmatprep.subr.mxu0 0.0
    %546 = vmatpush1.xpose.msra.mxu0 0.0
    %547 = vmatprep.subr.mxu0 0.0
    %548 = vmatpush1.xpose.msra.mxu0 0.0
    %549 = vmatprep.subr.mxu0 0.0
    %550 = vmatpush1.xpose.msra.mxu0 0.0
    %551 = vmatprep.subr.mxu0 0.0
    %552 = vmatpush1.xpose.msra.mxu0 %v519
    %553 = vmatprep.subr.mxu0 0.0
    %554 = vmatpush2.xpose.msra.mxu0 0.0
    %555 = vmatprep.subr.mxu0 0.0
    %556 = vmatpush2.xpose.msra.mxu0 0.0
    %557 = vmatprep.subr.mxu0 0.0
    %558 = vmatpush2.xpose.msra.mxu0 0.0
    %559 = vmatprep.subr.mxu0 0.0
    %560 = vmatpush2.xpose.msra.mxu0 0.0
    %561 = vmatprep.subr.mxu0 0.0
    %562 = vmatpush2.xpose.msra.mxu0 0.0
    %563 = vmatprep.subr.mxu0 0.0
    %564 = vmatpush2.xpose.msra.mxu0 0.0
    %565 = vmatprep.subr.mxu0 0.0
    %566 = vmatpush2.xpose.msra.mxu0 0.0
    %567 = vmatprep.subr.mxu0 0.0
    %568 = vmatpush2.xpose.msra.mxu0 0.0
    %569 = vmatprep.subr.mxu0 0.0
    %570 = vmatpush2.xpose.msra.mxu0 0.0
    %571 = vmatprep.subr.mxu0 0.0
    %572 = vmatpush2.xpose.msra.mxu0 0.0
    %573 = vmatprep.subr.mxu0 0.0
    %574 = vmatpush2.xpose.msra.mxu0 0.0
    %575 = vmatprep.subr.mxu0 0.0
    %576 = vmatpush2.xpose.msra.mxu0 0.0
    %577 = vmatprep.subr.mxu0 0.0
    %578 = vmatpush2.xpose.msra.mxu0 0.0
    %579 = vmatprep.subr.mxu0 0.0
    %580 = vmatpush2.xpose.msra.mxu0 0.0
    %581 = vmatprep.subr.mxu0 0.0
    %582 = vmatpush2.xpose.msra.mxu0 0.0
    %583 = vmatprep.subr.mxu0 0.0
    %584 = vmatpush2.xpose.msra.mxu0 0.0
    %585 = vmatprep.mubr.f32.mxu0 0.0
    %586 = vmatmul.mubr.f32.gmra.mxu0 %v516
    %v587 = vpop.f32.mrf.mxu0
    %v588 = vadd.f32 0.0, %v587
    %v589 = vpop.f32.mrf.mxu0
    %590 = vdwg.mxu0
    %v591 = vmul.f32 %v512, 0.35355338
    %v592 = vmul.f32 %v588, 0.35355338
    %v593 = vadd.f32 %v591, %v196
    %v594 = vadd.f32 %v592, %v200
    %vm595 = vcmask 64512
    %v596 = vsel %vm595, %v593, -inf
    %597 = vmax.xlane.f32.xlu0 %v596
    %v598 = vpop.xlane.xlu0 %597
    %v599 = vsel %vm595, %v594, -inf
    %600 = vmax.xlane.f32.xlu0 %v599
    %v601 = vpop.xlane.xlu0 %600
    %v602 = vsub.f32 %v593, %v598
    %v603 = vsub.f32 %v594, %v601
    %v604 = vmul.f32 %v602, 1.442695
    %v605 = vpow.pop %v604
    %v606 = vmul.f32 %v603, 1.442695
    %v607 = vpow.pop %v606
    %v608 = vsel %vm595, %v605, 0.0
    %609 = vadd.xlane.f32.xlu0 %v608
    %v610 = vpop.xlane.xlu0 %609
    %v611 = vsel %vm595, %v607, 0.0
    %612 = vadd.xlane.f32.xlu0 %v611
    %v613 = vpop.xlane.xlu0 %612
    %v614 = vrcp.pop %v610
    %v615 = vrcp.pop %v613
    %v616 = vmul.f32 %v605, %v614
    %v617 = vmul.f32 %v607, %v615
    %v618 = vmul.f32 %v431, %v207
    %v619 = vmul.f32 %v434, %v207
    %v620 = vmul.f32 %v317, %v212
    %v621 = vmul.f32 %v320, %v212
    %v623 = vsel %vm278, %v620, 0
    %625 = vmatprep.subr.mxu0 0.0
    %626 = vmatpush1.xpose.msra.mxu0 0.0
    %627 = vmatprep.subr.mxu0 0.0
    %628 = vmatpush1.xpose.msra.mxu0 0.0
    %629 = vmatprep.subr.mxu0 0.0
    %630 = vmatpush1.xpose.msra.mxu0 0.0
    %631 = vmatprep.subr.mxu0 0.0
    %632 = vmatpush1.xpose.msra.mxu0 0.0
    %633 = vmatprep.subr.mxu0 0.0
    %634 = vmatpush1.xpose.msra.mxu0 0.0
    %635 = vmatprep.subr.mxu0 0.0
    %636 = vmatpush1.xpose.msra.mxu0 0.0
    %637 = vmatprep.subr.mxu0 0.0
    %638 = vmatpush1.xpose.msra.mxu0 0.0
    %639 = vmatprep.subr.mxu0 0.0
    %640 = vmatpush1.xpose.msra.mxu0 0.0
    %641 = vmatprep.subr.mxu0 0.0
    %642 = vmatpush1.xpose.msra.mxu0 0.0
    %643 = vmatprep.subr.mxu0 0.0
    %644 = vmatpush1.xpose.msra.mxu0 0.0
    %645 = vmatprep.subr.mxu0 0.0
    %646 = vmatpush1.xpose.msra.mxu0 0.0
    %647 = vmatprep.subr.mxu0 0.0
    %648 = vmatpush1.xpose.msra.mxu0 0.0
    %649 = vmatprep.subr.mxu0 0.0
    %650 = vmatpush1.xpose.msra.mxu0 0.0
    %651 = vmatprep.subr.mxu0 0.0
    %652 = vmatpush1.xpose.msra.mxu0 0.0
    %653 = vmatprep.subr.mxu0 0.0
    %654 = vmatpush1.xpose.msra.mxu0 0.0
    %655 = vmatprep.subr.mxu0 0.0
    %656 = vmatpush1.xpose.msra.mxu0 %v443
    %657 = vmatprep.subr.mxu0 0.0
    %658 = vmatpush2.xpose.msra.mxu0 0.0
    %659 = vmatprep.subr.mxu0 0.0
    %660 = vmatpush2.xpose.msra.mxu0 0.0
    %661 = vmatprep.subr.mxu0 0.0
    %662 = vmatpush2.xpose.msra.mxu0 0.0
    %663 = vmatprep.subr.mxu0 0.0
    %664 = vmatpush2.xpose.msra.mxu0 0.0
    %665 = vmatprep.subr.mxu0 0.0
    %666 = vmatpush2.xpose.msra.mxu0 0.0
    %667 = vmatprep.subr.mxu0 0.0
    %668 = vmatpush2.xpose.msra.mxu0 0.0
    %669 = vmatprep.subr.mxu0 0.0
    %670 = vmatpush2.xpose.msra.mxu0 0.0
    %671 = vmatprep.subr.mxu0 0.0
    %672 = vmatpush2.xpose.msra.mxu0 0.0
    %673 = vmatprep.subr.mxu0 0.0
    %674 = vmatpush2.xpose.msra.mxu0 0.0
    %675 = vmatprep.subr.mxu0 0.0
    %676 = vmatpush2.xpose.msra.mxu0 0.0
    %677 = vmatprep.subr.mxu0 0.0
    %678 = vmatpush2.xpose.msra.mxu0 0.0
    %679 = vmatprep.subr.mxu0 0.0
    %680 = vmatpush2.xpose.msra.mxu0 0.0
    %681 = vmatprep.subr.mxu0 0.0
    %682 = vmatpush2.xpose.msra.mxu0 0.0
    %683 = vmatprep.subr.mxu0 0.0
    %684 = vmatpush2.xpose.msra.mxu0 0.0
    %685 = vmatprep.subr.mxu0 0.0
    %686 = vmatpush2.xpose.msra.mxu0 0.0
    %687 = vmatprep.subr.mxu0 0.0
    %688 = vmatpush2.xpose.msra.mxu0 0.0
    %689 = vmatprep.mubr.f32.mxu0 0.0
    %690 = vmatmul.mubr.f32.gmra.mxu0 %v623
    %v691 = vpop.f32.mrf.mxu0
    %v692 = vadd.f32 0.0, %v691
    %v693 = vpop.f32.mrf.mxu0
    %694 = vdwg.mxu0
    %v696 = vsel %vm278, %v621, 0
    %698 = vmatprep.subr.mxu0 0.0
    %699 = vmatpush1.xpose.msra.mxu0 0.0
    %700 = vmatprep.subr.mxu0 0.0
    %701 = vmatpush1.xpose.msra.mxu0 0.0
    %702 = vmatprep.subr.mxu0 0.0
    %703 = vmatpush1.xpose.msra.mxu0 0.0
    %704 = vmatprep.subr.mxu0 0.0
    %705 = vmatpush1.xpose.msra.mxu0 0.0
    %706 = vmatprep.subr.mxu0 0.0
    %707 = vmatpush1.xpose.msra.mxu0 0.0
    %708 = vmatprep.subr.mxu0 0.0
    %709 = vmatpush1.xpose.msra.mxu0 0.0
    %710 = vmatprep.subr.mxu0 0.0
    %711 = vmatpush1.xpose.msra.mxu0 0.0
    %712 = vmatprep.subr.mxu0 0.0
    %713 = vmatpush1.xpose.msra.mxu0 0.0
    %714 = vmatprep.subr.mxu0 0.0
    %715 = vmatpush1.xpose.msra.mxu0 0.0
    %716 = vmatprep.subr.mxu0 0.0
    %717 = vmatpush1.xpose.msra.mxu0 0.0
    %718 = vmatprep.subr.mxu0 0.0
    %719 = vmatpush1.xpose.msra.mxu0 0.0
    %720 = vmatprep.subr.mxu0 0.0
    %721 = vmatpush1.xpose.msra.mxu0 0.0
    %722 = vmatprep.subr.mxu0 0.0
    %723 = vmatpush1.xpose.msra.mxu0 0.0
    %724 = vmatprep.subr.mxu0 0.0
    %725 = vmatpush1.xpose.msra.mxu0 0.0
    %726 = vmatprep.subr.mxu0 0.0
    %727 = vmatpush1.xpose.msra.mxu0 0.0
    %728 = vmatprep.subr.mxu0 0.0
    %729 = vmatpush1.xpose.msra.mxu0 %v519
    %730 = vmatprep.subr.mxu0 0.0
    %731 = vmatpush2.xpose.msra.mxu0 0.0
    %732 = vmatprep.subr.mxu0 0.0
    %733 = vmatpush2.xpose.msra.mxu0 0.0
    %734 = vmatprep.subr.mxu0 0.0
    %735 = vmatpush2.xpose.msra.mxu0 0.0
    %736 = vmatprep.subr.mxu0 0.0
    %737 = vmatpush2.xpose.msra.mxu0 0.0
    %738 = vmatprep.subr.mxu0 0.0
    %739 = vmatpush2.xpose.msra.mxu0 0.0
    %740 = vmatprep.subr.mxu0 0.0
    %741 = vmatpush2.xpose.msra.mxu0 0.0
    %742 = vmatprep.subr.mxu0 0.0
    %743 = vmatpush2.xpose.msra.mxu0 0.0
    %744 = vmatprep.subr.mxu0 0.0
    %745 = vmatpush2.xpose.msra.mxu0 0.0
    %746 = vmatprep.subr.mxu0 0.0
    %747 = vmatpush2.xpose.msra.mxu0 0.0
    %748 = vmatprep.subr.mxu0 0.0
    %749 = vmatpush2.xpose.msra.mxu0 0.0
    %750 = vmatprep.subr.mxu0 0.0
    %751 = vmatpush2.xpose.msra.mxu0 0.0
    %752 = vmatprep.subr.mxu0 0.0
    %753 = vmatpush2.xpose.msra.mxu0 0.0
    %754 = vmatprep.subr.mxu0 0.0
    %755 = vmatpush2.xpose.msra.mxu0 0.0
    %756 = vmatprep.subr.mxu0 0.0
    %757 = vmatpush2.xpose.msra.mxu0 0.0
    %758 = vmatprep.subr.mxu0 0.0
    %759 = vmatpush2.xpose.msra.mxu0 0.0
    %760 = vmatprep.subr.mxu0 0.0
    %761 = vmatpush2.xpose.msra.mxu0 0.0
    %762 = vmatprep.mubr.f32.mxu0 0.0
    %763 = vmatmul.mubr.f32.gmra.mxu0 %v696
    %v764 = vpop.f32.mrf.mxu0
    %v765 = vadd.f32 0.0, %v764
    %v766 = vpop.f32.mrf.mxu0
    %767 = vdwg.mxu0
    %v768 = vmul.f32 %v692, 0.35355338
    %v769 = vmul.f32 %v765, 0.35355338
    %v770 = vadd.f32 %v768, %v196
    %v771 = vadd.f32 %v769, %v200
    %v772 = vsel %vm595, %v770, -inf
    %773 = vmax.xlane.f32.xlu0 %v772
    %v774 = vpop.xlane.xlu0 %773
    %v775 = vsel %vm595, %v771, -inf
    %776 = vmax.xlane.f32.xlu0 %v775
    %v777 = vpop.xlane.xlu0 %776
    %v778 = vsub.f32 %v770, %v774
    %v779 = vsub.f32 %v771, %v777
    %v780 = vmul.f32 %v778, 1.442695
    %v781 = vpow.pop %v780
    %v782 = vmul.f32 %v779, 1.442695
    %v783 = vpow.pop %v782
    %v784 = vsel %vm595, %v781, 0.0
    %785 = vadd.xlane.f32.xlu0 %v784
    %v786 = vpop.xlane.xlu0 %785
    %v787 = vsel %vm595, %v783, 0.0
    %788 = vadd.xlane.f32.xlu0 %v787
    %v789 = vpop.xlane.xlu0 %788
    %v790 = vrcp.pop %v786
    %v791 = vrcp.pop %v789
    %v792 = vmul.f32 %v781, %v790
    %v793 = vmul.f32 %v783, %v791
    %v794 = vmul.f32 %v431, %v212
    %v795 = vmul.f32 %v434, %v212
    %v797 = vsel %vm595, %v792, 0
    %799 = vmatprep.subr.mxu0 0.0
    %800 = vmatpush1.msra.mxu0 0.0
    %801 = vmatprep.subr.mxu0 0.0
    %802 = vmatpush1.msra.mxu0 0.0
    %803 = vmatprep.subr.mxu0 0.0
    %804 = vmatpush1.msra.mxu0 0.0
    %805 = vmatprep.subr.mxu0 0.0
    %806 = vmatpush1.msra.mxu0 0.0
    %807 = vmatprep.subr.mxu0 0.0
    %808 = vmatpush1.msra.mxu0 0.0
    %809 = vmatprep.subr.mxu0 0.0
    %810 = vmatpush1.msra.mxu0 0.0
    %811 = vmatprep.subr.mxu0 0.0
    %812 = vmatpush1.msra.mxu0 0.0
    %813 = vmatprep.subr.mxu0 0.0
    %814 = vmatpush1.msra.mxu0 0.0
    %815 = vmatprep.subr.mxu0 0.0
    %816 = vmatpush1.msra.mxu0 0.0
    %817 = vmatprep.subr.mxu0 0.0
    %818 = vmatpush1.msra.mxu0 0.0
    %819 = vmatprep.subr.mxu0 0.0
    %820 = vmatpush1.msra.mxu0 0.0
    %821 = vmatprep.subr.mxu0 0.0
    %822 = vmatpush1.msra.mxu0 0.0
    %823 = vmatprep.subr.mxu0 0.0
    %824 = vmatpush1.msra.mxu0 0.0
    %825 = vmatprep.subr.mxu0 0.0
    %826 = vmatpush1.msra.mxu0 0.0
    %827 = vmatprep.subr.mxu0 0.0
    %828 = vmatpush1.msra.mxu0 0.0
    %829 = vmatprep.subr.mxu0 0.0
    %830 = vmatpush1.msra.mxu0 %v794
    %831 = vmatprep.subr.mxu0 0.0
    %832 = vmatpush2.msra.mxu0 0.0
    %833 = vmatprep.subr.mxu0 0.0
    %834 = vmatpush2.msra.mxu0 0.0
    %835 = vmatprep.subr.mxu0 0.0
    %836 = vmatpush2.msra.mxu0 0.0
    %837 = vmatprep.subr.mxu0 0.0
    %838 = vmatpush2.msra.mxu0 0.0
    %839 = vmatprep.subr.mxu0 0.0
    %840 = vmatpush2.msra.mxu0 0.0
    %841 = vmatprep.subr.mxu0 0.0
    %842 = vmatpush2.msra.mxu0 0.0
    %843 = vmatprep.subr.mxu0 0.0
    %844 = vmatpush2.msra.mxu0 0.0
    %845 = vmatprep.subr.mxu0 0.0
    %846 = vmatpush2.msra.mxu0 0.0
    %847 = vmatprep.subr.mxu0 0.0
    %848 = vmatpush2.msra.mxu0 0.0
    %849 = vmatprep.subr.mxu0 0.0
    %850 = vmatpush2.msra.mxu0 0.0
    %851 = vmatprep.subr.mxu0 0.0
    %852 = vmatpush2.msra.mxu0 0.0
    %853 = vmatprep.subr.mxu0 0.0
    %854 = vmatpush2.msra.mxu0 0.0
    %855 = vmatprep.subr.mxu0 0.0
    %856 = vmatpush2.msra.mxu0 0.0
    %857 = vmatprep.subr.mxu0 0.0
    %858 = vmatpush2.msra.mxu0 0.0
    %859 = vmatprep.subr.mxu0 0.0
    %860 = vmatpush2.msra.mxu0 0.0
    %861 = vmatprep.subr.mxu0 0.0
    %862 = vmatpush2.msra.mxu0 0.0
    %863 = vmatprep.mubr.f32.mxu0 0.0
    %864 = vmatmul.mubr.f32.gmra.mxu0 %v797
    %v865 = vpop.f32.mrf.mxu0
    %v866 = vadd.f32 0.0, %v865
    %v867 = vpop.f32.mrf.mxu0
    %868 = vdwg.mxu0
    %v870 = vsel %vm595, %v793, 0
    %872 = vmatprep.subr.mxu0 0.0
    %873 = vmatpush1.msra.mxu0 0.0
    %874 = vmatprep.subr.mxu0 0.0
    %875 = vmatpush1.msra.mxu0 0.0
    %876 = vmatprep.subr.mxu0 0.0
    %877 = vmatpush1.msra.mxu0 0.0
    %878 = vmatprep.subr.mxu0 0.0
    %879 = vmatpush1.msra.mxu0 0.0
    %880 = vmatprep.subr.mxu0 0.0
    %881 = vmatpush1.msra.mxu0 0.0
    %882 = vmatprep.subr.mxu0 0.0
    %883 = vmatpush1.msra.mxu0 0.0
    %884 = vmatprep.subr.mxu0 0.0
    %885 = vmatpush1.msra.mxu0 0.0
    %886 = vmatprep.subr.mxu0 0.0
    %887 = vmatpush1.msra.mxu0 0.0
    %888 = vmatprep.subr.mxu0 0.0
    %889 = vmatpush1.msra.mxu0 0.0
    %890 = vmatprep.subr.mxu0 0.0
    %891 = vmatpush1.msra.mxu0 0.0
    %892 = vmatprep.subr.mxu0 0.0
    %893 = vmatpush1.msra.mxu0 0.0
    %894 = vmatprep.subr.mxu0 0.0
    %895 = vmatpush1.msra.mxu0 0.0
    %896 = vmatprep.subr.mxu0 0.0
    %897 = vmatpush1.msra.mxu0 0.0
    %898 = vmatprep.subr.mxu0 0.0
    %899 = vmatpush1.msra.mxu0 0.0
    %900 = vmatprep.subr.mxu0 0.0
    %901 = vmatpush1.msra.mxu0 0.0
    %902 = vmatprep.subr.mxu0 0.0
    %903 = vmatpush1.msra.mxu0 %v795
    %904 = vmatprep.subr.mxu0 0.0
    %905 = vmatpush2.msra.mxu0 0.0
    %906 = vmatprep.subr.mxu0 0.0
    %907 = vmatpush2.msra.mxu0 0.0
    %908 = vmatprep.subr.mxu0 0.0
    %909 = vmatpush2.msra.mxu0 0.0
    %910 = vmatprep.subr.mxu0 0.0
    %911 = vmatpush2.msra.mxu0 0.0
    %912 = vmatprep.subr.mxu0 0.0
    %913 = vmatpush2.msra.mxu0 0.0
    %914 = vmatprep.subr.mxu0 0.0
    %915 = vmatpush2.msra.mxu0 0.0
    %916 = vmatprep.subr.mxu0 0.0
    %917 = vmatpush2.msra.mxu0 0.0
    %918 = vmatprep.subr.mxu0 0.0
    %919 = vmatpush2.msra.mxu0 0.0
    %920 = vmatprep.subr.mxu0 0.0
    %921 = vmatpush2.msra.mxu0 0.0
    %922 = vmatprep.subr.mxu0 0.0
    %923 = vmatpush2.msra.mxu0 0.0
    %924 = vmatprep.subr.mxu0 0.0
    %925 = vmatpush2.msra.mxu0 0.0
    %926 = vmatprep.subr.mxu0 0.0
    %927 = vmatpush2.msra.mxu0 0.0
    %928 = vmatprep.subr.mxu0 0.0
    %929 = vmatpush2.msra.mxu0 0.0
    %930 = vmatprep.subr.mxu0 0.0
    %931 = vmatpush2.msra.mxu0 0.0
    %932 = vmatprep.subr.mxu0 0.0
    %933 = vmatpush2.msra.mxu0 0.0
    %934 = vmatprep.subr.mxu0 0.0
    %935 = vmatpush2.msra.mxu0 0.0
    %936 = vmatprep.mubr.f32.mxu0 0.0
    %937 = vmatmul.mubr.f32.gmra.mxu0 %v870
    %v938 = vpop.f32.mrf.mxu0
    %v939 = vadd.f32 0.0, %v938
    %v940 = vpop.f32.mrf.mxu0
    %941 = vdwg.mxu0
    %v942 = vmul.f32 %v317, %v217
    %v943 = vmul.f32 %v320, %v217
    %v945 = vsel %vm278, %v942, 0
    %947 = vmatprep.subr.mxu0 0.0
    %948 = vmatpush1.xpose.msra.mxu0 0.0
    %949 = vmatprep.subr.mxu0 0.0
    %950 = vmatpush1.xpose.msra.mxu0 0.0
    %951 = vmatprep.subr.mxu0 0.0
    %952 = vmatpush1.xpose.msra.mxu0 0.0
    %953 = vmatprep.subr.mxu0 0.0
    %954 = vmatpush1.xpose.msra.mxu0 0.0
    %955 = vmatprep.subr.mxu0 0.0
    %956 = vmatpush1.xpose.msra.mxu0 0.0
    %957 = vmatprep.subr.mxu0 0.0
    %958 = vmatpush1.xpose.msra.mxu0 0.0
    %959 = vmatprep.subr.mxu0 0.0
    %960 = vmatpush1.xpose.msra.mxu0 0.0
    %961 = vmatprep.subr.mxu0 0.0
    %962 = vmatpush1.xpose.msra.mxu0 0.0
    %963 = vmatprep.subr.mxu0 0.0
    %964 = vmatpush1.xpose.msra.mxu0 0.0
    %965 = vmatprep.subr.mxu0 0.0
    %966 = vmatpush1.xpose.msra.mxu0 0.0
    %967 = vmatprep.subr.mxu0 0.0
    %968 = vmatpush1.xpose.msra.mxu0 0.0
    %969 = vmatprep.subr.mxu0 0.0
    %970 = vmatpush1.xpose.msra.mxu0 0.0
    %971 = vmatprep.subr.mxu0 0.0
    %972 = vmatpush1.xpose.msra.mxu0 0.0
    %973 = vmatprep.subr.mxu0 0.0
    %974 = vmatpush1.xpose.msra.mxu0 0.0
    %975 = vmatprep.subr.mxu0 0.0
    %976 = vmatpush1.xpose.msra.mxu0 0.0
    %977 = vmatprep.subr.mxu0 0.0
    %978 = vmatpush1.xpose.msra.mxu0 %v443
    %979 = vmatprep.subr.mxu0 0.0
    %980 = vmatpush2.xpose.msra.mxu0 0.0
    %981 = vmatprep.subr.mxu0 0.0
    %982 = vmatpush2.xpose.msra.mxu0 0.0
    %983 = vmatprep.subr.mxu0 0.0
    %984 = vmatpush2.xpose.msra.mxu0 0.0
    %985 = vmatprep.subr.mxu0 0.0
    %986 = vmatpush2.xpose.msra.mxu0 0.0
    %987 = vmatprep.subr.mxu0 0.0
    %988 = vmatpush2.xpose.msra.mxu0 0.0
    %989 = vmatprep.subr.mxu0 0.0
    %990 = vmatpush2.xpose.msra.mxu0 0.0
    %991 = vmatprep.subr.mxu0 0.0
    %992 = vmatpush2.xpose.msra.mxu0 0.0
    %993 = vmatprep.subr.mxu0 0.0
    %994 = vmatpush2.xpose.msra.mxu0 0.0
    %995 = vmatprep.subr.mxu0 0.0
    %996 = vmatpush2.xpose.msra.mxu0 0.0
    %997 = vmatprep.subr.mxu0 0.0
    %998 = vmatpush2.xpose.msra.mxu0 0.0
    %999 = vmatprep.subr.mxu0 0.0
    %1000 = vmatpush2.xpose.msra.mxu0 0.0
    %1001 = vmatprep.subr.mxu0 0.0
    %1002 = vmatpush2.xpose.msra.mxu0 0.0
    %1003 = vmatprep.subr.mxu0 0.0
    %1004 = vmatpush2.xpose.msra.mxu0 0.0
    %1005 = vmatprep.subr.mxu0 0.0
    %1006 = vmatpush2.xpose.msra.mxu0 0.0
    %1007 = vmatprep.subr.mxu0 0.0
    %1008 = vmatpush2.xpose.msra.mxu0 0.0
    %1009 = vmatprep.subr.mxu0 0.0
    %1010 = vmatpush2.xpose.msra.mxu0 0.0
    %1011 = vmatprep.mubr.f32.mxu0 0.0
    %1012 = vmatmul.mubr.f32.gmra.mxu0 %v945
    %v1013 = vpop.f32.mrf.mxu0
    %v1014 = vadd.f32 0.0, %v1013
    %v1015 = vpop.f32.mrf.mxu0
    %1016 = vdwg.mxu0
    %v1018 = vsel %vm278, %v943, 0
    %1020 = vmatprep.subr.mxu0 0.0
    %1021 = vmatpush1.xpose.msra.mxu0 0.0
    %1022 = vmatprep.subr.mxu0 0.0
    %1023 = vmatpush1.xpose.msra.mxu0 0.0
    %1024 = vmatprep.subr.mxu0 0.0
    %1025 = vmatpush1.xpose.msra.mxu0 0.0
    %1026 = vmatprep.subr.mxu0 0.0
    %1027 = vmatpush1.xpose.msra.mxu0 0.0
    %1028 = vmatprep.subr.mxu0 0.0
    %1029 = vmatpush1.xpose.msra.mxu0 0.0
    %1030 = vmatprep.subr.mxu0 0.0
    %1031 = vmatpush1.xpose.msra.mxu0 0.0
    %1032 = vmatprep.subr.mxu0 0.0
    %1033 = vmatpush1.xpose.msra.mxu0 0.0
    %1034 = vmatprep.subr.mxu0 0.0
    %1035 = vmatpush1.xpose.msra.mxu0 0.0
    %1036 = vmatprep.subr.mxu0 0.0
    %1037 = vmatpush1.xpose.msra.mxu0 0.0
    %1038 = vmatprep.subr.mxu0 0.0
    %1039 = vmatpush1.xpose.msra.mxu0 0.0
    %1040 = vmatprep.subr.mxu0 0.0
    %1041 = vmatpush1.xpose.msra.mxu0 0.0
    %1042 = vmatprep.subr.mxu0 0.0
    %1043 = vmatpush1.xpose.msra.mxu0 0.0
    %1044 = vmatprep.subr.mxu0 0.0
    %1045 = vmatpush1.xpose.msra.mxu0 0.0
    %1046 = vmatprep.subr.mxu0 0.0
    %1047 = vmatpush1.xpose.msra.mxu0 0.0
    %1048 = vmatprep.subr.mxu0 0.0
    %1049 = vmatpush1.xpose.msra.mxu0 0.0
    %1050 = vmatprep.subr.mxu0 0.0
    %1051 = vmatpush1.xpose.msra.mxu0 %v519
    %1052 = vmatprep.subr.mxu0 0.0
    %1053 = vmatpush2.xpose.msra.mxu0 0.0
    %1054 = vmatprep.subr.mxu0 0.0
    %1055 = vmatpush2.xpose.msra.mxu0 0.0
    %1056 = vmatprep.subr.mxu0 0.0
    %1057 = vmatpush2.xpose.msra.mxu0 0.0
    %1058 = vmatprep.subr.mxu0 0.0
    %1059 = vmatpush2.xpose.msra.mxu0 0.0
    %1060 = vmatprep.subr.mxu0 0.0
    %1061 = vmatpush2.xpose.msra.mxu0 0.0
    %1062 = vmatprep.subr.mxu0 0.0
    %1063 = vmatpush2.xpose.msra.mxu0 0.0
    %1064 = vmatprep.subr.mxu0 0.0
    %1065 = vmatpush2.xpose.msra.mxu0 0.0
    %1066 = vmatprep.subr.mxu0 0.0
    %1067 = vmatpush2.xpose.msra.mxu0 0.0
    %1068 = vmatprep.subr.mxu0 0.0
    %1069 = vmatpush2.xpose.msra.mxu0 0.0
    %1070 = vmatprep.subr.mxu0 0.0
    %1071 = vmatpush2.xpose.msra.mxu0 0.0
    %1072 = vmatprep.subr.mxu0 0.0
    %1073 = vmatpush2.xpose.msra.mxu0 0.0
    %1074 = vmatprep.subr.mxu0 0.0
    %1075 = vmatpush2.xpose.msra.mxu0 0.0
    %1076 = vmatprep.subr.mxu0 0.0
    %1077 = vmatpush2.xpose.msra.mxu0 0.0
    %1078 = vmatprep.subr.mxu0 0.0
    %1079 = vmatpush2.xpose.msra.mxu0 0.0
    %1080 = vmatprep.subr.mxu0 0.0
    %1081 = vmatpush2.xpose.msra.mxu0 0.0
    %1082 = vmatprep.subr.mxu0 0.0
    %1083 = vmatpush2.xpose.msra.mxu0 0.0
    %1084 = vmatprep.mubr.f32.mxu0 0.0
    %1085 = vmatmul.mubr.f32.gmra.mxu0 %v1018
    %v1086 = vpop.f32.mrf.mxu0
    %v1087 = vadd.f32 0.0, %v1086
    %v1088 = vpop.f32.mrf.mxu0
    %1089 = vdwg.mxu0
    %v1090 = vmul.f32 %v1014, 0.35355338
    %v1091 = vmul.f32 %v1087, 0.35355338
    %v1092 = vadd.f32 %v1090, %v196
    %v1093 = vadd.f32 %v1091, %v200
    %v1094 = vsel %vm595, %v1092, -inf
    %1095 = vmax.xlane.f32.xlu0 %v1094
    %v1096 = vpop.xlane.xlu0 %1095
    %v1097 = vsel %vm595, %v1093, -inf
    %1098 = vmax.xlane.f32.xlu0 %v1097
    %v1099 = vpop.xlane.xlu0 %1098
    %v1100 = vsub.f32 %v1092, %v1096
    %v1101 = vsub.f32 %v1093, %v1099
    %v1102 = vmul.f32 %v1100, 1.442695
    %v1103 = vpow.pop %v1102
    %v1104 = vmul.f32 %v1101, 1.442695
    %v1105 = vpow.pop %v1104
    %v1106 = vsel %vm595, %v1103, 0.0
    %1107 = vadd.xlane.f32.xlu0 %v1106
    %v1108 = vpop.xlane.xlu0 %1107
    %v1109 = vsel %vm595, %v1105, 0.0
    %1110 = vadd.xlane.f32.xlu0 %v1109
    %v1111 = vpop.xlane.xlu0 %1110
    %v1112 = vrcp.pop %v1108
    %v1113 = vrcp.pop %v1111
    %v1114 = vmul.f32 %v1103, %v1112
    %v1115 = vmul.f32 %v1105, %v1113
    %v1116 = vmul.f32 %v431, %v217
    %v1117 = vmul.f32 %v434, %v217
    %v1119 = vsel %vm595, %v1114, 0
    %1121 = vmatprep.subr.mxu0 0.0
    %1122 = vmatpush1.msra.mxu0 0.0
    %1123 = vmatprep.subr.mxu0 0.0
    %1124 = vmatpush1.msra.mxu0 0.0
    %1125 = vmatprep.subr.mxu0 0.0
    %1126 = vmatpush1.msra.mxu0 0.0
    %1127 = vmatprep.subr.mxu0 0.0
    %1128 = vmatpush1.msra.mxu0 0.0
    %1129 = vmatprep.subr.mxu0 0.0
    %1130 = vmatpush1.msra.mxu0 0.0
    %1131 = vmatprep.subr.mxu0 0.0
    %1132 = vmatpush1.msra.mxu0 0.0
    %1133 = vmatprep.subr.mxu0 0.0
    %1134 = vmatpush1.msra.mxu0 0.0
    %1135 = vmatprep.subr.mxu0 0.0
    %1136 = vmatpush1.msra.mxu0 0.0
    %1137 = vmatprep.subr.mxu0 0.0
    %1138 = vmatpush1.msra.mxu0 0.0
    %1139 = vmatprep.subr.mxu0 0.0
    %1140 = vmatpush1.msra.mxu0 0.0
    %1141 = vmatprep.subr.mxu0 0.0
    %1142 = vmatpush1.msra.mxu0 0.0
    %1143 = vmatprep.subr.mxu0 0.0
    %1144 = vmatpush1.msra.mxu0 0.0
    %1145 = vmatprep.subr.mxu0 0.0
    %1146 = vmatpush1.msra.mxu0 0.0
    %1147 = vmatprep.subr.mxu0 0.0
    %1148 = vmatpush1.msra.mxu0 0.0
    %1149 = vmatprep.subr.mxu0 0.0
    %1150 = vmatpush1.msra.mxu0 0.0
    %1151 = vmatprep.subr.mxu0 0.0
    %1152 = vmatpush1.msra.mxu0 %v1116
    %1153 = vmatprep.subr.mxu0 0.0
    %1154 = vmatpush2.msra.mxu0 0.0
    %1155 = vmatprep.subr.mxu0 0.0
    %1156 = vmatpush2.msra.mxu0 0.0
    %1157 = vmatprep.subr.mxu0 0.0
    %1158 = vmatpush2.msra.mxu0 0.0
    %1159 = vmatprep.subr.mxu0 0.0
    %1160 = vmatpush2.msra.mxu0 0.0
    %1161 = vmatprep.subr.mxu0 0.0
    %1162 = vmatpush2.msra.mxu0 0.0
    %1163 = vmatprep.subr.mxu0 0.0
    %1164 = vmatpush2.msra.mxu0 0.0
    %1165 = vmatprep.subr.mxu0 0.0
    %1166 = vmatpush2.msra.mxu0 0.0
    %1167 = vmatprep.subr.mxu0 0.0
    %1168 = vmatpush2.msra.mxu0 0.0
    %1169 = vmatprep.subr.mxu0 0.0
    %1170 = vmatpush2.msra.mxu0 0.0
    %1171 = vmatprep.subr.mxu0 0.0
    %1172 = vmatpush2.msra.mxu0 0.0
    %1173 = vmatprep.subr.mxu0 0.0
    %1174 = vmatpush2.msra.mxu0 0.0
    %1175 = vmatprep.subr.mxu0 0.0
    %1176 = vmatpush2.msra.mxu0 0.0
    %1177 = vmatprep.subr.mxu0 0.0
    %1178 = vmatpush2.msra.mxu0 0.0
    %1179 = vmatprep.subr.mxu0 0.0
    %1180 = vmatpush2.msra.mxu0 0.0
    %1181 = vmatprep.subr.mxu0 0.0
    %1182 = vmatpush2.msra.mxu0 0.0
    %1183 = vmatprep.subr.mxu0 0.0
    %1184 = vmatpush2.msra.mxu0 0.0
    %1185 = vmatprep.mubr.f32.mxu0 0.0
    %1186 = vmatmul.mubr.f32.gmra.mxu0 %v1119
    %v1187 = vpop.f32.mrf.mxu0
    %v1188 = vadd.f32 0.0, %v1187
    %v1189 = vpop.f32.mrf.mxu0
    %1190 = vdwg.mxu0
    %v1192 = vsel %vm595, %v1115, 0
    %1194 = vmatprep.subr.mxu0 0.0
    %1195 = vmatpush1.msra.mxu0 0.0
    %1196 = vmatprep.subr.mxu0 0.0
    %1197 = vmatpush1.msra.mxu0 0.0
    %1198 = vmatprep.subr.mxu0 0.0
    %1199 = vmatpush1.msra.mxu0 0.0
    %1200 = vmatprep.subr.mxu0 0.0
    %1201 = vmatpush1.msra.mxu0 0.0
    %1202 = vmatprep.subr.mxu0 0.0
    %1203 = vmatpush1.msra.mxu0 0.0
    %1204 = vmatprep.subr.mxu0 0.0
    %1205 = vmatpush1.msra.mxu0 0.0
    %1206 = vmatprep.subr.mxu0 0.0
    %1207 = vmatpush1.msra.mxu0 0.0
    %1208 = vmatprep.subr.mxu0 0.0
    %1209 = vmatpush1.msra.mxu0 0.0
    %1210 = vmatprep.subr.mxu0 0.0
    %1211 = vmatpush1.msra.mxu0 0.0
    %1212 = vmatprep.subr.mxu0 0.0
    %1213 = vmatpush1.msra.mxu0 0.0
    %1214 = vmatprep.subr.mxu0 0.0
    %1215 = vmatpush1.msra.mxu0 0.0
    %1216 = vmatprep.subr.mxu0 0.0
    %1217 = vmatpush1.msra.mxu0 0.0
    %1218 = vmatprep.subr.mxu0 0.0
    %1219 = vmatpush1.msra.mxu0 0.0
    %1220 = vmatprep.subr.mxu0 0.0
    %1221 = vmatpush1.msra.mxu0 0.0
    %1222 = vmatprep.subr.mxu0 0.0
    %1223 = vmatpush1.msra.mxu0 0.0
    %1224 = vmatprep.subr.mxu0 0.0
    %1225 = vmatpush1.msra.mxu0 %v1117
    %1226 = vmatprep.subr.mxu0 0.0
    %1227 = vmatpush2.msra.mxu0 0.0
    %1228 = vmatprep.subr.mxu0 0.0
    %1229 = vmatpush2.msra.mxu0 0.0
    %1230 = vmatprep.subr.mxu0 0.0
    %1231 = vmatpush2.msra.mxu0 0.0
    %1232 = vmatprep.subr.mxu0 0.0
    %1233 = vmatpush2.msra.mxu0 0.0
    %1234 = vmatprep.subr.mxu0 0.0
    %1235 = vmatpush2.msra.mxu0 0.0
    %1236 = vmatprep.subr.mxu0 0.0
    %1237 = vmatpush2.msra.mxu0 0.0
    %1238 = vmatprep.subr.mxu0 0.0
    %1239 = vmatpush2.msra.mxu0 0.0
    %1240 = vmatprep.subr.mxu0 0.0
    %1241 = vmatpush2.msra.mxu0 0.0
    %1242 = vmatprep.subr.mxu0 0.0
    %1243 = vmatpush2.msra.mxu0 0.0
    %1244 = vmatprep.subr.mxu0 0.0
    %1245 = vmatpush2.msra.mxu0 0.0
    %1246 = vmatprep.subr.mxu0 0.0
    %1247 = vmatpush2.msra.mxu0 0.0
    %1248 = vmatprep.subr.mxu0 0.0
    %1249 = vmatpush2.msra.mxu0 0.0
    %1250 = vmatprep.subr.mxu0 0.0
    %1251 = vmatpush2.msra.mxu0 0.0
    %1252 = vmatprep.subr.mxu0 0.0
    %1253 = vmatpush2.msra.mxu0 0.0
    %1254 = vmatprep.subr.mxu0 0.0
    %1255 = vmatpush2.msra.mxu0 0.0
    %1256 = vmatprep.subr.mxu0 0.0
    %1257 = vmatpush2.msra.mxu0 0.0
    %1258 = vmatprep.mubr.f32.mxu0 0.0
    %1259 = vmatmul.mubr.f32.gmra.mxu0 %v1192
    %v1260 = vpop.f32.mrf.mxu0
    %v1261 = vadd.f32 0.0, %v1260
    %v1262 = vpop.f32.mrf.mxu0
    %1263 = vdwg.mxu0
    %v1264 = vmul.f32 %v317, %v222
    %v1265 = vmul.f32 %v320, %v222
    %v1267 = vsel %vm278, %v1264, 0
    %1269 = vmatprep.subr.mxu0 0.0
    %1270 = vmatpush1.xpose.msra.mxu0 0.0
    %1271 = vmatprep.subr.mxu0 0.0
    %1272 = vmatpush1.xpose.msra.mxu0 0.0
    %1273 = vmatprep.subr.mxu0 0.0
    %1274 = vmatpush1.xpose.msra.mxu0 0.0
    %1275 = vmatprep.subr.mxu0 0.0
    %1276 = vmatpush1.xpose.msra.mxu0 0.0
    %1277 = vmatprep.subr.mxu0 0.0
    %1278 = vmatpush1.xpose.msra.mxu0 0.0
    %1279 = vmatprep.subr.mxu0 0.0
    %1280 = vmatpush1.xpose.msra.mxu0 0.0
    %1281 = vmatprep.subr.mxu0 0.0
    %1282 = vmatpush1.xpose.msra.mxu0 0.0
    %1283 = vmatprep.subr.mxu0 0.0
    %1284 = vmatpush1.xpose.msra.mxu0 0.0
    %1285 = vmatprep.subr.mxu0 0.0
    %1286 = vmatpush1.xpose.msra.mxu0 0.0
    %1287 = vmatprep.subr.mxu0 0.0
    %1288 = vmatpush1.xpose.msra.mxu0 0.0
    %1289 = vmatprep.subr.mxu0 0.0
    %1290 = vmatpush1.xpose.msra.mxu0 0.0
    %1291 = vmatprep.subr.mxu0 0.0
    %1292 = vmatpush1.xpose.msra.mxu0 0.0
    %1293 = vmatprep.subr.mxu0 0.0
    %1294 = vmatpush1.xpose.msra.mxu0 0.0
    %1295 = vmatprep.subr.mxu0 0.0
    %1296 = vmatpush1.xpose.msra.mxu0 0.0
    %1297 = vmatprep.subr.mxu0 0.0
    %1298 = vmatpush1.xpose.msra.mxu0 0.0
    %1299 = vmatprep.subr.mxu0 0.0
    %1300 = vmatpush1.xpose.msra.mxu0 %v443
    %1301 = vmatprep.subr.mxu0 0.0
    %1302 = vmatpush2.xpose.msra.mxu0 0.0
    %1303 = vmatprep.subr.mxu0 0.0
    %1304 = vmatpush2.xpose.msra.mxu0 0.0
    %1305 = vmatprep.subr.mxu0 0.0
    %1306 = vmatpush2.xpose.msra.mxu0 0.0
    %1307 = vmatprep.subr.mxu0 0.0
    %1308 = vmatpush2.xpose.msra.mxu0 0.0
    %1309 = vmatprep.subr.mxu0 0.0
    %1310 = vmatpush2.xpose.msra.mxu0 0.0
    %1311 = vmatprep.subr.mxu0 0.0
    %1312 = vmatpush2.xpose.msra.mxu0 0.0
    %1313 = vmatprep.subr.mxu0 0.0
    %1314 = vmatpush2.xpose.msra.mxu0 0.0
    %1315 = vmatprep.subr.mxu0 0.0
    %1316 = vmatpush2.xpose.msra.mxu0 0.0
    %1317 = vmatprep.subr.mxu0 0.0
    %1318 = vmatpush2.xpose.msra.mxu0 0.0
    %1319 = vmatprep.subr.mxu0 0.0
    %1320 = vmatpush2.xpose.msra.mxu0 0.0
    %1321 = vmatprep.subr.mxu0 0.0
    %1322 = vmatpush2.xpose.msra.mxu0 0.0
    %1323 = vmatprep.subr.mxu0 0.0
    %1324 = vmatpush2.xpose.msra.mxu0 0.0
    %1325 = vmatprep.subr.mxu0 0.0
    %1326 = vmatpush2.xpose.msra.mxu0 0.0
    %1327 = vmatprep.subr.mxu0 0.0
    %1328 = vmatpush2.xpose.msra.mxu0 0.0
    %1329 = vmatprep.subr.mxu0 0.0
    %1330 = vmatpush2.xpose.msra.mxu0 0.0
    %1331 = vmatprep.subr.mxu0 0.0
    %1332 = vmatpush2.xpose.msra.mxu0 0.0
    %1333 = vmatprep.mubr.f32.mxu0 0.0
    %1334 = vmatmul.mubr.f32.gmra.mxu0 %v1267
    %v1335 = vpop.f32.mrf.mxu0
    %v1336 = vadd.f32 0.0, %v1335
    %v1337 = vpop.f32.mrf.mxu0
    %1338 = vdwg.mxu0
    %v1340 = vsel %vm278, %v1265, 0
    %1342 = vmatprep.subr.mxu0 0.0
    %1343 = vmatpush1.xpose.msra.mxu0 0.0
    %1344 = vmatprep.subr.mxu0 0.0
    %1345 = vmatpush1.xpose.msra.mxu0 0.0
    %1346 = vmatprep.subr.mxu0 0.0
    %1347 = vmatpush1.xpose.msra.mxu0 0.0
    %1348 = vmatprep.subr.mxu0 0.0
    %1349 = vmatpush1.xpose.msra.mxu0 0.0
    %1350 = vmatprep.subr.mxu0 0.0
    %1351 = vmatpush1.xpose.msra.mxu0 0.0
    %1352 = vmatprep.subr.mxu0 0.0
    %1353 = vmatpush1.xpose.msra.mxu0 0.0
    %1354 = vmatprep.subr.mxu0 0.0
    %1355 = vmatpush1.xpose.msra.mxu0 0.0
    %1356 = vmatprep.subr.mxu0 0.0
    %1357 = vmatpush1.xpose.msra.mxu0 0.0
    %1358 = vmatprep.subr.mxu0 0.0
    %1359 = vmatpush1.xpose.msra.mxu0 0.0
    %1360 = vmatprep.subr.mxu0 0.0
    %1361 = vmatpush1.xpose.msra.mxu0 0.0
    %1362 = vmatprep.subr.mxu0 0.0
    %1363 = vmatpush1.xpose.msra.mxu0 0.0
    %1364 = vmatprep.subr.mxu0 0.0
    %1365 = vmatpush1.xpose.msra.mxu0 0.0
    %1366 = vmatprep.subr.mxu0 0.0
    %1367 = vmatpush1.xpose.msra.mxu0 0.0
    %1368 = vmatprep.subr.mxu0 0.0
    %1369 = vmatpush1.xpose.msra.mxu0 0.0
    %1370 = vmatprep.subr.mxu0 0.0
    %1371 = vmatpush1.xpose.msra.mxu0 0.0
    %1372 = vmatprep.subr.mxu0 0.0
    %1373 = vmatpush1.xpose.msra.mxu0 %v519
    %1374 = vmatprep.subr.mxu0 0.0
    %1375 = vmatpush2.xpose.msra.mxu0 0.0
    %1376 = vmatprep.subr.mxu0 0.0
    %1377 = vmatpush2.xpose.msra.mxu0 0.0
    %1378 = vmatprep.subr.mxu0 0.0
    %1379 = vmatpush2.xpose.msra.mxu0 0.0
    %1380 = vmatprep.subr.mxu0 0.0
    %1381 = vmatpush2.xpose.msra.mxu0 0.0
    %1382 = vmatprep.subr.mxu0 0.0
    %1383 = vmatpush2.xpose.msra.mxu0 0.0
    %1384 = vmatprep.subr.mxu0 0.0
    %1385 = vmatpush2.xpose.msra.mxu0 0.0
    %1386 = vmatprep.subr.mxu0 0.0
    %1387 = vmatpush2.xpose.msra.mxu0 0.0
    %1388 = vmatprep.subr.mxu0 0.0
    %1389 = vmatpush2.xpose.msra.mxu0 0.0
    %1390 = vmatprep.subr.mxu0 0.0
    %1391 = vmatpush2.xpose.msra.mxu0 0.0
    %1392 = vmatprep.subr.mxu0 0.0
    %1393 = vmatpush2.xpose.msra.mxu0 0.0
    %1394 = vmatprep.subr.mxu0 0.0
    %1395 = vmatpush2.xpose.msra.mxu0 0.0
    %1396 = vmatprep.subr.mxu0 0.0
    %1397 = vmatpush2.xpose.msra.mxu0 0.0
    %1398 = vmatprep.subr.mxu0 0.0
    %1399 = vmatpush2.xpose.msra.mxu0 0.0
    %1400 = vmatprep.subr.mxu0 0.0
    %1401 = vmatpush2.xpose.msra.mxu0 0.0
    %1402 = vmatprep.subr.mxu0 0.0
    %1403 = vmatpush2.xpose.msra.mxu0 0.0
    %1404 = vmatprep.subr.mxu0 0.0
    %1405 = vmatpush2.xpose.msra.mxu0 0.0
    %1406 = vmatprep.mubr.f32.mxu0 0.0
    %1407 = vmatmul.mubr.f32.gmra.mxu0 %v1340
    %v1408 = vpop.f32.mrf.mxu0
    %v1409 = vadd.f32 0.0, %v1408
    %v1410 = vpop.f32.mrf.mxu0
    %1411 = vdwg.mxu0
    %v1412 = vmul.f32 %v1336, 0.35355338
    %v1413 = vmul.f32 %v1409, 0.35355338
    %v1414 = vadd.f32 %v1412, %v196
    %v1415 = vadd.f32 %v1413, %v200
    %v1416 = vsel %vm595, %v1414, -inf
    %1417 = vmax.xlane.f32.xlu0 %v1416
    %v1418 = vpop.xlane.xlu0 %1417
    %v1419 = vsel %vm595, %v1415, -inf
    %1420 = vmax.xlane.f32.xlu0 %v1419
    %v1421 = vpop.xlane.xlu0 %1420
    %v1422 = vsub.f32 %v1414, %v1418
    %v1423 = vsub.f32 %v1415, %v1421
    %v1424 = vmul.f32 %v1422, 1.442695
    %v1425 = vpow.pop %v1424
    %v1426 = vmul.f32 %v1423, 1.442695
    %v1427 = vpow.pop %v1426
    %v1428 = vsel %vm595, %v1425, 0.0
    %1429 = vadd.xlane.f32.xlu0 %v1428
    %v1430 = vpop.xlane.xlu0 %1429
    %v1431 = vsel %vm595, %v1427, 0.0
    %1432 = vadd.xlane.f32.xlu0 %v1431
    %v1433 = vpop.xlane.xlu0 %1432
    %v1434 = vrcp.pop %v1430
    %v1435 = vrcp.pop %v1433
    %v1436 = vmul.f32 %v1425, %v1434
    %v1437 = vmul.f32 %v1427, %v1435
    %v1438 = vmul.f32 %v431, %v222
    %v1439 = vmul.f32 %v434, %v222
    %v1441 = vsel %vm595, %v1436, 0
    %1443 = vmatprep.subr.mxu0 0.0
    %1444 = vmatpush1.msra.mxu0 0.0
    %1445 = vmatprep.subr.mxu0 0.0
    %1446 = vmatpush1.msra.mxu0 0.0
    %1447 = vmatprep.subr.mxu0 0.0
    %1448 = vmatpush1.msra.mxu0 0.0
    %1449 = vmatprep.subr.mxu0 0.0
    %1450 = vmatpush1.msra.mxu0 0.0
    %1451 = vmatprep.subr.mxu0 0.0
    %1452 = vmatpush1.msra.mxu0 0.0
    %1453 = vmatprep.subr.mxu0 0.0
    %1454 = vmatpush1.msra.mxu0 0.0
    %1455 = vmatprep.subr.mxu0 0.0
    %1456 = vmatpush1.msra.mxu0 0.0
    %1457 = vmatprep.subr.mxu0 0.0
    %1458 = vmatpush1.msra.mxu0 0.0
    %1459 = vmatprep.subr.mxu0 0.0
    %1460 = vmatpush1.msra.mxu0 0.0
    %1461 = vmatprep.subr.mxu0 0.0
    %1462 = vmatpush1.msra.mxu0 0.0
    %1463 = vmatprep.subr.mxu0 0.0
    %1464 = vmatpush1.msra.mxu0 0.0
    %1465 = vmatprep.subr.mxu0 0.0
    %1466 = vmatpush1.msra.mxu0 0.0
    %1467 = vmatprep.subr.mxu0 0.0
    %1468 = vmatpush1.msra.mxu0 0.0
    %1469 = vmatprep.subr.mxu0 0.0
    %1470 = vmatpush1.msra.mxu0 0.0
    %1471 = vmatprep.subr.mxu0 0.0
    %1472 = vmatpush1.msra.mxu0 0.0
    %1473 = vmatprep.subr.mxu0 0.0
    %1474 = vmatpush1.msra.mxu0 %v1438
    %1475 = vmatprep.subr.mxu0 0.0
    %1476 = vmatpush2.msra.mxu0 0.0
    %1477 = vmatprep.subr.mxu0 0.0
    %1478 = vmatpush2.msra.mxu0 0.0
    %1479 = vmatprep.subr.mxu0 0.0
    %1480 = vmatpush2.msra.mxu0 0.0
    %1481 = vmatprep.subr.mxu0 0.0
    %1482 = vmatpush2.msra.mxu0 0.0
    %1483 = vmatprep.subr.mxu0 0.0
    %1484 = vmatpush2.msra.mxu0 0.0
    %1485 = vmatprep.subr.mxu0 0.0
    %1486 = vmatpush2.msra.mxu0 0.0
    %1487 = vmatprep.subr.mxu0 0.0
    %1488 = vmatpush2.msra.mxu0 0.0
    %1489 = vmatprep.subr.mxu0 0.0
    %1490 = vmatpush2.msra.mxu0 0.0
    %1491 = vmatprep.subr.mxu0 0.0
    %1492 = vmatpush2.msra.mxu0 0.0
    %1493 = vmatprep.subr.mxu0 0.0
    %1494 = vmatpush2.msra.mxu0 0.0
    %1495 = vmatprep.subr.mxu0 0.0
    %1496 = vmatpush2.msra.mxu0 0.0
    %1497 = vmatprep.subr.mxu0 0.0
    %1498 = vmatpush2.msra.mxu0 0.0
    %1499 = vmatprep.subr.mxu0 0.0
    %1500 = vmatpush2.msra.mxu0 0.0
    %1501 = vmatprep.subr.mxu0 0.0
    %1502 = vmatpush2.msra.mxu0 0.0
    %1503 = vmatprep.subr.mxu0 0.0
    %1504 = vmatpush2.msra.mxu0 0.0
    %1505 = vmatprep.subr.mxu0 0.0
    %1506 = vmatpush2.msra.mxu0 0.0
    %1507 = vmatprep.mubr.f32.mxu0 0.0
    %1508 = vmatmul.mubr.f32.gmra.mxu0 %v1441
    %v1509 = vpop.f32.mrf.mxu0
    %v1510 = vadd.f32 0.0, %v1509
    %v1511 = vpop.f32.mrf.mxu0
    %1512 = vdwg.mxu0
    %v1514 = vsel %vm595, %v1437, 0
    %1516 = vmatprep.subr.mxu0 0.0
    %1517 = vmatpush1.msra.mxu0 0.0
    %1518 = vmatprep.subr.mxu0 0.0
    %1519 = vmatpush1.msra.mxu0 0.0
    %1520 = vmatprep.subr.mxu0 0.0
    %1521 = vmatpush1.msra.mxu0 0.0
    %1522 = vmatprep.subr.mxu0 0.0
    %1523 = vmatpush1.msra.mxu0 0.0
    %1524 = vmatprep.subr.mxu0 0.0
    %1525 = vmatpush1.msra.mxu0 0.0
    %1526 = vmatprep.subr.mxu0 0.0
    %1527 = vmatpush1.msra.mxu0 0.0
    %1528 = vmatprep.subr.mxu0 0.0
    %1529 = vmatpush1.msra.mxu0 0.0
    %1530 = vmatprep.subr.mxu0 0.0
    %1531 = vmatpush1.msra.mxu0 0.0
    %1532 = vmatprep.subr.mxu0 0.0
    %1533 = vmatpush1.msra.mxu0 0.0
    %1534 = vmatprep.subr.mxu0 0.0
    %1535 = vmatpush1.msra.mxu0 0.0
    %1536 = vmatprep.subr.mxu0 0.0
    %1537 = vmatpush1.msra.mxu0 0.0
    %1538 = vmatprep.subr.mxu0 0.0
    %1539 = vmatpush1.msra.mxu0 0.0
    %1540 = vmatprep.subr.mxu0 0.0
    %1541 = vmatpush1.msra.mxu0 0.0
    %1542 = vmatprep.subr.mxu0 0.0
    %1543 = vmatpush1.msra.mxu0 0.0
    %1544 = vmatprep.subr.mxu0 0.0
    %1545 = vmatpush1.msra.mxu0 0.0
    %1546 = vmatprep.subr.mxu0 0.0
    %1547 = vmatpush1.msra.mxu0 %v1439
    %1548 = vmatprep.subr.mxu0 0.0
    %1549 = vmatpush2.msra.mxu0 0.0
    %1550 = vmatprep.subr.mxu0 0.0
    %1551 = vmatpush2.msra.mxu0 0.0
    %1552 = vmatprep.subr.mxu0 0.0
    %1553 = vmatpush2.msra.mxu0 0.0
    %1554 = vmatprep.subr.mxu0 0.0
    %1555 = vmatpush2.msra.mxu0 0.0
    %1556 = vmatprep.subr.mxu0 0.0
    %1557 = vmatpush2.msra.mxu0 0.0
    %1558 = vmatprep.subr.mxu0 0.0
    %1559 = vmatpush2.msra.mxu0 0.0
    %1560 = vmatprep.subr.mxu0 0.0
    %1561 = vmatpush2.msra.mxu0 0.0
    %1562 = vmatprep.subr.mxu0 0.0
    %1563 = vmatpush2.msra.mxu0 0.0
    %1564 = vmatprep.subr.mxu0 0.0
    %1565 = vmatpush2.msra.mxu0 0.0
    %1566 = vmatprep.subr.mxu0 0.0
    %1567 = vmatpush2.msra.mxu0 0.0
    %1568 = vmatprep.subr.mxu0 0.0
    %1569 = vmatpush2.msra.mxu0 0.0
    %1570 = vmatprep.subr.mxu0 0.0
    %1571 = vmatpush2.msra.mxu0 0.0
    %1572 = vmatprep.subr.mxu0 0.0
    %1573 = vmatpush2.msra.mxu0 0.0
    %1574 = vmatprep.subr.mxu0 0.0
    %1575 = vmatpush2.msra.mxu0 0.0
    %1576 = vmatprep.subr.mxu0 0.0
    %1577 = vmatpush2.msra.mxu0 0.0
    %1578 = vmatprep.subr.mxu0 0.0
    %1579 = vmatpush2.msra.mxu0 0.0
    %1580 = vmatprep.mubr.f32.mxu0 0.0
    %1581 = vmatmul.mubr.f32.gmra.mxu0 %v1514
    %v1582 = vpop.f32.mrf.mxu0
    %v1583 = vadd.f32 0.0, %v1582
    %v1584 = vpop.f32.mrf.mxu0
    %1585 = vdwg.mxu0
    %v1587 = vsel %vm595, %v616, 0
    %1589 = vmatprep.subr.mxu0 0.0
    %1590 = vmatpush1.msra.mxu0 0.0
    %1591 = vmatprep.subr.mxu0 0.0
    %1592 = vmatpush1.msra.mxu0 0.0
    %1593 = vmatprep.subr.mxu0 0.0
    %1594 = vmatpush1.msra.mxu0 0.0
    %1595 = vmatprep.subr.mxu0 0.0
    %1596 = vmatpush1.msra.mxu0 0.0
    %1597 = vmatprep.subr.mxu0 0.0
    %1598 = vmatpush1.msra.mxu0 0.0
    %1599 = vmatprep.subr.mxu0 0.0
    %1600 = vmatpush1.msra.mxu0 0.0
    %1601 = vmatprep.subr.mxu0 0.0
    %1602 = vmatpush1.msra.mxu0 0.0
    %1603 = vmatprep.subr.mxu0 0.0
    %1604 = vmatpush1.msra.mxu0 0.0
    %1605 = vmatprep.subr.mxu0 0.0
    %1606 = vmatpush1.msra.mxu0 0.0
    %1607 = vmatprep.subr.mxu0 0.0
    %1608 = vmatpush1.msra.mxu0 0.0
    %1609 = vmatprep.subr.mxu0 0.0
    %1610 = vmatpush1.msra.mxu0 0.0
    %1611 = vmatprep.subr.mxu0 0.0
    %1612 = vmatpush1.msra.mxu0 0.0
    %1613 = vmatprep.subr.mxu0 0.0
    %1614 = vmatpush1.msra.mxu0 0.0
    %1615 = vmatprep.subr.mxu0 0.0
    %1616 = vmatpush1.msra.mxu0 0.0
    %1617 = vmatprep.subr.mxu0 0.0
    %1618 = vmatpush1.msra.mxu0 0.0
    %1619 = vmatprep.subr.mxu0 0.0
    %1620 = vmatpush1.msra.mxu0 %v618
    %1621 = vmatprep.subr.mxu0 0.0
    %1622 = vmatpush2.msra.mxu0 0.0
    %1623 = vmatprep.subr.mxu0 0.0
    %1624 = vmatpush2.msra.mxu0 0.0
    %1625 = vmatprep.subr.mxu0 0.0
    %1626 = vmatpush2.msra.mxu0 0.0
    %1627 = vmatprep.subr.mxu0 0.0
    %1628 = vmatpush2.msra.mxu0 0.0
    %1629 = vmatprep.subr.mxu0 0.0
    %1630 = vmatpush2.msra.mxu0 0.0
    %1631 = vmatprep.subr.mxu0 0.0
    %1632 = vmatpush2.msra.mxu0 0.0
    %1633 = vmatprep.subr.mxu0 0.0
    %1634 = vmatpush2.msra.mxu0 0.0
    %1635 = vmatprep.subr.mxu0 0.0
    %1636 = vmatpush2.msra.mxu0 0.0
    %1637 = vmatprep.subr.mxu0 0.0
    %1638 = vmatpush2.msra.mxu0 0.0
    %1639 = vmatprep.subr.mxu0 0.0
    %1640 = vmatpush2.msra.mxu0 0.0
    %1641 = vmatprep.subr.mxu0 0.0
    %1642 = vmatpush2.msra.mxu0 0.0
    %1643 = vmatprep.subr.mxu0 0.0
    %1644 = vmatpush2.msra.mxu0 0.0
    %1645 = vmatprep.subr.mxu0 0.0
    %1646 = vmatpush2.msra.mxu0 0.0
    %1647 = vmatprep.subr.mxu0 0.0
    %1648 = vmatpush2.msra.mxu0 0.0
    %1649 = vmatprep.subr.mxu0 0.0
    %1650 = vmatpush2.msra.mxu0 0.0
    %1651 = vmatprep.subr.mxu0 0.0
    %1652 = vmatpush2.msra.mxu0 0.0
    %1653 = vmatprep.mubr.f32.mxu0 0.0
    %1654 = vmatmul.mubr.f32.gmra.mxu0 %v1587
    %v1655 = vpop.f32.mrf.mxu0
    %v1656 = vadd.f32 %v866, %v1655
    %v1657 = vpop.f32.mrf.mxu0
    %1658 = vdwg.mxu0
    %v1660 = vsel %vm595, %v617, 0
    %1662 = vmatprep.subr.mxu0 0.0
    %1663 = vmatpush1.msra.mxu0 0.0
    %1664 = vmatprep.subr.mxu0 0.0
    %1665 = vmatpush1.msra.mxu0 0.0
    %1666 = vmatprep.subr.mxu0 0.0
    %1667 = vmatpush1.msra.mxu0 0.0
    %1668 = vmatprep.subr.mxu0 0.0
    %1669 = vmatpush1.msra.mxu0 0.0
    %1670 = vmatprep.subr.mxu0 0.0
    %1671 = vmatpush1.msra.mxu0 0.0
    %1672 = vmatprep.subr.mxu0 0.0
    %1673 = vmatpush1.msra.mxu0 0.0
    %1674 = vmatprep.subr.mxu0 0.0
    %1675 = vmatpush1.msra.mxu0 0.0
    %1676 = vmatprep.subr.mxu0 0.0
    %1677 = vmatpush1.msra.mxu0 0.0
    %1678 = vmatprep.subr.mxu0 0.0
    %1679 = vmatpush1.msra.mxu0 0.0
    %1680 = vmatprep.subr.mxu0 0.0
    %1681 = vmatpush1.msra.mxu0 0.0
    %1682 = vmatprep.subr.mxu0 0.0
    %1683 = vmatpush1.msra.mxu0 0.0
    %1684 = vmatprep.subr.mxu0 0.0
    %1685 = vmatpush1.msra.mxu0 0.0
    %1686 = vmatprep.subr.mxu0 0.0
    %1687 = vmatpush1.msra.mxu0 0.0
    %1688 = vmatprep.subr.mxu0 0.0
    %1689 = vmatpush1.msra.mxu0 0.0
    %1690 = vmatprep.subr.mxu0 0.0
    %1691 = vmatpush1.msra.mxu0 0.0
    %1692 = vmatprep.subr.mxu0 0.0
    %1693 = vmatpush1.msra.mxu0 %v619
    %1694 = vmatprep.subr.mxu0 0.0
    %1695 = vmatpush2.msra.mxu0 0.0
    %1696 = vmatprep.subr.mxu0 0.0
    %1697 = vmatpush2.msra.mxu0 0.0
    %1698 = vmatprep.subr.mxu0 0.0
    %1699 = vmatpush2.msra.mxu0 0.0
    %1700 = vmatprep.subr.mxu0 0.0
    %1701 = vmatpush2.msra.mxu0 0.0
    %1702 = vmatprep.subr.mxu0 0.0
    %1703 = vmatpush2.msra.mxu0 0.0
    %1704 = vmatprep.subr.mxu0 0.0
    %1705 = vmatpush2.msra.mxu0 0.0
    %1706 = vmatprep.subr.mxu0 0.0
    %1707 = vmatpush2.msra.mxu0 0.0
    %1708 = vmatprep.subr.mxu0 0.0
    %1709 = vmatpush2.msra.mxu0 0.0
    %1710 = vmatprep.subr.mxu0 0.0
    %1711 = vmatpush2.msra.mxu0 0.0
    %1712 = vmatprep.subr.mxu0 0.0
    %1713 = vmatpush2.msra.mxu0 0.0
    %1714 = vmatprep.subr.mxu0 0.0
    %1715 = vmatpush2.msra.mxu0 0.0
    %1716 = vmatprep.subr.mxu0 0.0
    %1717 = vmatpush2.msra.mxu0 0.0
    %1718 = vmatprep.subr.mxu0 0.0
    %1719 = vmatpush2.msra.mxu0 0.0
    %1720 = vmatprep.subr.mxu0 0.0
    %1721 = vmatpush2.msra.mxu0 0.0
    %1722 = vmatprep.subr.mxu0 0.0
    %1723 = vmatpush2.msra.mxu0 0.0
    %1724 = vmatprep.subr.mxu0 0.0
    %1725 = vmatpush2.msra.mxu0 0.0
    %1726 = vmatprep.mubr.f32.mxu0 0.0
    %1727 = vmatmul.mubr.f32.gmra.mxu0 %v1660
    %v1728 = vpop.f32.mrf.mxu0
    %v1729 = vadd.f32 %v939, %v1728
    %v1730 = vpop.f32.mrf.mxu0
    %1731 = vdwg.mxu0
    %v1732 = vadd.f32 %v1656, %v1188
    %v1733 = vadd.f32 %v1729, %v1261
    %v1734 = vadd.f32 %v1732, %v1510
    %v1735 = vadd.f32 %v1733, %v1583
    %v1736 = vpack.c.bf16 %v1735, %v1734
    %v1737 = vlaneseq
    %v1738 = vshrl.u32 %v1737, 7
    %v1739 = vsub.s32 0, %v1738
    %v1740 = vrot.slane %v254, %v1739
    %v1745 = vunpack.c.l.b16 %v235
    %v1746 = vunpack.c.l.b16 %v236
    %v1747 = vunpack.c.l.b16 %v237
    %v1748 = vunpack.c.l.b16 %v238
    %v1749 = vpack.c.b16 %v1746, %v1745
    %v1750 = vpack.c.b16 %v1748, %v1747
    %v1754 = vsel %vm278, %v1736, 0
    %1756 = vmatprep.subr.bf16.mxu0 0
    %1757 = vmatpush1.bf16.msra.mxu0 0
    %1758 = vmatprep.subr.bf16.mxu0 0
    %1759 = vmatpush1.bf16.msra.mxu0 0
    %1760 = vmatprep.subr.bf16.mxu0 0
    %1761 = vmatpush1.bf16.msra.mxu0 0
    %1762 = vmatprep.subr.bf16.mxu0 0
    %1763 = vmatpush1.bf16.msra.mxu0 0
    %1764 = vmatprep.subr.bf16.mxu0 0
    %1765 = vmatpush1.bf16.msra.mxu0 0
    %1766 = vmatprep.subr.bf16.mxu0 0
    %1767 = vmatpush1.bf16.msra.mxu0 0
    %1768 = vmatprep.subr.bf16.mxu0 0
    %1769 = vmatpush1.bf16.msra.mxu0 %v1750
    %1770 = vmatprep.subr.bf16.mxu0 0
    %1771 = vmatpush1.bf16.msra.mxu0 %v1749
    %1772 = vmatprep.subr.bf16.mxu0 0
    %1773 = vmatpush2.bf16.msra.mxu0 0
    %1774 = vmatprep.subr.bf16.mxu0 0
    %1775 = vmatpush2.bf16.msra.mxu0 0
    %1776 = vmatprep.subr.bf16.mxu0 0
    %1777 = vmatpush2.bf16.msra.mxu0 0
    %1778 = vmatprep.subr.bf16.mxu0 0
    %1779 = vmatpush2.bf16.msra.mxu0 0
    %1780 = vmatprep.subr.bf16.mxu0 0
    %1781 = vmatpush2.bf16.msra.mxu0 0
    %1782 = vmatprep.subr.bf16.mxu0 0
    %1783 = vmatpush2.bf16.msra.mxu0 0
    %1784 = vmatprep.subr.bf16.mxu0 0
    %1785 = vmatpush2.bf16.msra.mxu0 0
    %1786 = vmatprep.subr.bf16.mxu0 0
    %1787 = vmatpush2.bf16.msra.mxu0 0
    %1788 = vmatprep.mubr.bf16.mxu0 0
    %1789 = vmatmul.mubr.bf16.gmra.mxu0 %v1754
    %v1790 = vpop.f32.mrf.mxu0
    %v1791 = vadd.f32 %v1740, %v1790
    %v1792 = vpop.f32.mrf.mxu0
    %v1793 = vpop.f32.mrf.mxu0
    %v1794 = vadd.f32 %v1740, %v1793
    %v1795 = vpop.f32.mrf.mxu0
    %1796 = vdwg.mxu0
    %v1797 = vadd.f32 %v162, %v1791
    %v1798 = vadd.f32 %v165, %v1794
    %v1799 = vsel %vm278, %v1797, 0.0
    %1800 = vadd.xlane.f32.xlu0 %v1799
    %v1801 = vpop.xlane.xlu0 %1800
    %v1802 = vsel %vm278, %v1798, 0.0
    %1803 = vadd.xlane.f32.xlu0 %v1802
    %v1804 = vpop.xlane.xlu0 %1803
    %v1805 = vrcp.pop 32.0
    %v1806 = vmul.f32 %v1801, %v1805
    %v1807 = vmul.f32 %v1804, %v1805
    %v1808 = vsub.f32 %v1797, %v1806
    %v1809 = vsub.f32 %v1798, %v1807
    %v1810 = vmul.f32 %v1808, %v1808
    %v1811 = vmul.f32 %v1809, %v1809
    %v1812 = vsel %vm278, %v1810, 0.0
    %1813 = vadd.xlane.f32.xlu0 %v1812
    %v1814 = vpop.xlane.xlu0 %1813
    %v1815 = vsel %vm278, %v1811, 0.0
    %1816 = vadd.xlane.f32.xlu0 %v1815
    %v1817 = vpop.xlane.xlu0 %1816
    %v1818 = vmul.f32 %v1814, %v1805
    %v1819 = vmul.f32 %v1817, %v1805
    %v1820 = vadd.f32 %v1818, 1e-05
    %v1821 = vadd.f32 %v1819, 1e-05
    %v1822 = vrsqrt.pop %v1820
    %v1823 = vrsqrt.pop %v1821
    %v1824 = vmul.f32 %v1808, %v1822
    %v1825 = vmul.f32 %v1809, %v1823
    %v1826 = vlaneseq
    %v1827 = vshrl.u32 %v1826, 7
    %v1828 = vsub.s32 0, %v1827
    %v1829 = vrot.slane %v255, %v1828
    %v1830 = vmul.f32 %v1824, %v1829
    %v1831 = vmul.f32 %v1825, %v1829
    %v1832 = vlaneseq
    %v1833 = vshrl.u32 %v1832, 7
    %v1834 = vsub.s32 0, %v1833
    %v1835 = vrot.slane %v256, %v1834
    %v1836 = vadd.f32 %v1830, %v1835
    %v1837 = vadd.f32 %v1831, %v1835
    %v1838 = vpack.c.bf16 %v1837, %v1836
    %v1839 = vlaneseq
    %v1840 = vshrl.u32 %v1839, 7
    %v1841 = vsub.s32 0, %v1840
    %v1842 = vrot.slane %v257, %v1841
    %v1847 = vunpack.c.l.b16 %v239
    %v1848 = vunpack.c.l.b16 %v240
    %v1849 = vunpack.c.l.b16 %v241
    %v1850 = vunpack.c.l.b16 %v242
    %v1851 = vpack.c.b16 %v1848, %v1847
    %v1852 = vpack.c.b16 %v1850, %v1849
    %v1856 = vsel %vm278, %v1838, 0
    %1858 = vmatprep.subr.bf16.mxu0 0
    %1859 = vmatpush1.bf16.msra.mxu0 0
    %1860 = vmatprep.subr.bf16.mxu0 0
    %1861 = vmatpush1.bf16.msra.mxu0 0
    %1862 = vmatprep.subr.bf16.mxu0 0
    %1863 = vmatpush1.bf16.msra.mxu0 0
    %1864 = vmatprep.subr.bf16.mxu0 0
    %1865 = vmatpush1.bf16.msra.mxu0 0
    %1866 = vmatprep.subr.bf16.mxu0 0
    %1867 = vmatpush1.bf16.msra.mxu0 0
    %1868 = vmatprep.subr.bf16.mxu0 0
    %1869 = vmatpush1.bf16.msra.mxu0 0
    %1870 = vmatprep.subr.bf16.mxu0 0
    %1871 = vmatpush1.bf16.msra.mxu0 %v1852
    %1872 = vmatprep.subr.bf16.mxu0 0
    %1873 = vmatpush1.bf16.msra.mxu0 %v1851
    %1874 = vmatprep.subr.bf16.mxu0 0
    %1875 = vmatpush2.bf16.msra.mxu0 0
    %1876 = vmatprep.subr.bf16.mxu0 0
    %1877 = vmatpush2.bf16.msra.mxu0 0
    %1878 = vmatprep.subr.bf16.mxu0 0
    %1879 = vmatpush2.bf16.msra.mxu0 0
    %1880 = vmatprep.subr.bf16.mxu0 0
    %1881 = vmatpush2.bf16.msra.mxu0 0
    %1882 = vmatprep.subr.bf16.mxu0 0
    %1883 = vmatpush2.bf16.msra.mxu0 0
    %1884 = vmatprep.subr.bf16.mxu0 0
    %1885 = vmatpush2.bf16.msra.mxu0 0
    %1886 = vmatprep.subr.bf16.mxu0 0
    %1887 = vmatpush2.bf16.msra.mxu0 0
    %1888 = vmatprep.subr.bf16.mxu0 0
    %1889 = vmatpush2.bf16.msra.mxu0 0
    %1890 = vmatprep.mubr.bf16.mxu0 0
    %1891 = vmatmul.mubr.bf16.gmra.mxu0 %v1856
    %v1892 = vpop.f32.mrf.mxu0
    %v1893 = vadd.f32 %v1842, %v1892
    %v1894 = vpop.f32.mrf.mxu0
    %v1895 = vpop.f32.mrf.mxu0
    %v1896 = vadd.f32 %v1842, %v1895
    %v1897 = vpop.f32.mrf.mxu0
    %1898 = vdwg.mxu0
    %v1899 = vmax.f32 %v1893, 0.0
    %v1900 = vmax.f32 %v1896, 0.0
    %v1901 = vpack.c.bf16 %v1900, %v1899
    %v1902 = vlaneseq
    %v1903 = vshrl.u32 %v1902, 7
    %v1904 = vsub.s32 0, %v1903
    %v1905 = vrot.slane %v258, %v1904
    %v1914 = vunpack.c.l.b16 %v243
    %v1915 = vunpack.c.l.b16 %v244
    %v1916 = vunpack.c.l.b16 %v245
    %v1917 = vunpack.c.l.b16 %v246
    %v1918 = vunpack.c.l.b16 %v247
    %v1919 = vunpack.c.l.b16 %v248
    %v1920 = vunpack.c.l.b16 %v249
    %v1921 = vunpack.c.l.b16 %v250
    %v1922 = vpack.c.b16 %v1915, %v1914
    %v1923 = vpack.c.b16 %v1917, %v1916
    %v1924 = vpack.c.b16 %v1919, %v1918
    %v1925 = vpack.c.b16 %v1921, %v1920
    %vm1930 = vcmask 523264
    %v1932 = vsel %vm1930, %v1901, 0
    %1934 = vmatprep.subr.bf16.mxu0 0
    %1935 = vmatpush1.bf16.msra.mxu0 0
    %1936 = vmatprep.subr.bf16.mxu0 0
    %1937 = vmatpush1.bf16.msra.mxu0 0
    %1938 = vmatprep.subr.bf16.mxu0 0
    %1939 = vmatpush1.bf16.msra.mxu0 0
    %1940 = vmatprep.subr.bf16.mxu0 0
    %1941 = vmatpush1.bf16.msra.mxu0 0
    %1942 = vmatprep.subr.bf16.mxu0 0
    %1943 = vmatpush1.bf16.msra.mxu0 %v1925
    %1944 = vmatprep.subr.bf16.mxu0 0
    %1945 = vmatpush1.bf16.msra.mxu0 %v1924
    %1946 = vmatprep.subr.bf16.mxu0 0
    %1947 = vmatpush1.bf16.msra.mxu0 %v1923
    %1948 = vmatprep.subr.bf16.mxu0 0
    %1949 = vmatpush1.bf16.msra.mxu0 %v1922
    %1950 = vmatprep.subr.bf16.mxu0 0
    %1951 = vmatpush2.bf16.msra.mxu0 0
    %1952 = vmatprep.subr.bf16.mxu0 0
    %1953 = vmatpush2.bf16.msra.mxu0 0
    %1954 = vmatprep.subr.bf16.mxu0 0
    %1955 = vmatpush2.bf16.msra.mxu0 0
    %1956 = vmatprep.subr.bf16.mxu0 0
    %1957 = vmatpush2.bf16.msra.mxu0 0
    %1958 = vmatprep.subr.bf16.mxu0 0
    %1959 = vmatpush2.bf16.msra.mxu0 0
    %1960 = vmatprep.subr.bf16.mxu0 0
    %1961 = vmatpush2.bf16.msra.mxu0 0
    %1962 = vmatprep.subr.bf16.mxu0 0
    %1963 = vmatpush2.bf16.msra.mxu0 0
    %1964 = vmatprep.subr.bf16.mxu0 0
    %1965 = vmatpush2.bf16.msra.mxu0 0
    %1966 = vmatprep.mubr.bf16.mxu0 0
    %1967 = vmatmul.mubr.bf16.gmra.mxu0 %v1932
    %v1968 = vpop.f32.mrf.mxu0
    %v1969 = vadd.f32 %v1905, %v1968
    %v1970 = vpop.f32.mrf.mxu0
    %v1971 = vpop.f32.mrf.mxu0
    %v1972 = vadd.f32 %v1905, %v1971
    %v1973 = vpop.f32.mrf.mxu0
    %1974 = vdwg.mxu0
    %v1975 = vadd.f32 %v1836, %v1969
    %v1976 = vadd.f32 %v1837, %v1972
    %v1977 = vsel %vm278, %v1975, 0.0
    %1978 = vadd.xlane.f32.xlu0 %v1977
    %v1979 = vpop.xlane.xlu0 %1978
    %v1980 = vsel %vm278, %v1976, 0.0
    %1981 = vadd.xlane.f32.xlu0 %v1980
    %v1982 = vpop.xlane.xlu0 %1981
    %v1983 = vmul.f32 %v1979, %v1805
    %v1984 = vmul.f32 %v1982, %v1805
    %v1985 = vsub.f32 %v1975, %v1983
    %v1986 = vsub.f32 %v1976, %v1984
    %v1987 = vmul.f32 %v1985, %v1985
    %v1988 = vmul.f32 %v1986, %v1986
    %v1989 = vsel %vm278, %v1987, 0.0
    %1990 = vadd.xlane.f32.xlu0 %v1989
    %v1991 = vpop.xlane.xlu0 %1990
    %v1992 = vsel %vm278, %v1988, 0.0
    %1993 = vadd.xlane.f32.xlu0 %v1992
    %v1994 = vpop.xlane.xlu0 %1993
    %v1995 = vmul.f32 %v1991, %v1805
    %v1996 = vmul.f32 %v1994, %v1805
    %v1997 = vadd.f32 %v1995, 1e-05
    %v1998 = vadd.f32 %v1996, 1e-05
    %v1999 = vrsqrt.pop %v1997
    %v2000 = vrsqrt.pop %v1998
    %v2001 = vmul.f32 %v1985, %v1999
    %v2002 = vmul.f32 %v1986, %v2000
    %v2003 = vlaneseq
    %v2004 = vshrl.u32 %v2003, 7
    %v2005 = vsub.s32 0, %v2004
    %v2006 = vrot.slane %v259, %v2005
    %v2007 = vmul.f32 %v2001, %v2006
    %v2008 = vmul.f32 %v2002, %v2006
    %v2009 = vlaneseq
    %v2010 = vshrl.u32 %v2009, 7
    %v2011 = vsub.s32 0, %v2010
    %v2012 = vrot.slane %v260, %v2011
    %v2013 = vadd.f32 %v2007, %v2012
    %v2014 = vadd.f32 %v2008, %v2012
    %v2015 = vld [vmem:[#allocation2 + $0xc0] sm:$0xf]
    %v2016 = vld [vmem:[#allocation2 + $0xc4] sm:$0xf]
    %v2017 = vld [vmem:[#allocation2 + $0xc8] sm:$0xf]
    %v2018 = vld [vmem:[#allocation2 + $0xcc] sm:$0xf]
    %v2019 = vld [vmem:[#allocation2 + $0xd0] sm:$0xf]
    %v2020 = vld [vmem:[#allocation2 + $0xd4] sm:$0xf]
    %v2021 = vld [vmem:[#allocation2 + $0xd8] sm:$0xf]
    %v2022 = vld [vmem:[#allocation2 + $0xdc] sm:$0xf]
    %v2023 = vld [vmem:[#allocation2 + $0xe0] sm:$0xf]
    %v2024 = vld [vmem:[#allocation2 + $0xe4] sm:$0xf]
    %v2025 = vld [vmem:[#allocation2 + $0xe8] sm:$0xf]
    %v2026 = vld [vmem:[#allocation2 + $0xec] sm:$0xf]
    %v2027 = vld [vmem:[#allocation2 + $0xf0] sm:$0xf]
    %v2028 = vld [vmem:[#allocation2 + $0xf4] sm:$0xf]
    %v2029 = vld [vmem:[#allocation2 + $0xf8] sm:$0xf]
    %v2030 = vld [vmem:[#allocation2 + $0xfc] sm:$0xf]
    %v2031 = vld [vmem:[#allocation2 + $0x100] sm:$0xf]
    %v2032 = vld [vmem:[#allocation2 + $0x104] sm:$0xf]
    %v2033 = vld [vmem:[#allocation2 + $0x108] sm:$0xf]
    %v2034 = vld [vmem:[#allocation2 + $0x10c] sm:$0xf]
    %v2035 = vld [vmem:[#allocation2 + $0x110] sm:$0xf]
    %v2036 = vld [vmem:[#allocation2 + $0x114] sm:$0xf]
    %v2037 = vld [vmem:[#allocation2 + $0x118] sm:$0xf]
    %v2038 = vld [vmem:[#allocation2 + $0x11c] sm:$0xf]
    %v2039 = vld [vmem:[#allocation2 + $0x120] sm:$0xf]
    %v2040 = vld [vmem:[#allocation2 + $0x124] sm:$0xf]
    %v2041 = vld [vmem:[#allocation2 + $0x128] sm:$0xf]
    %v2042 = vld [vmem:[#allocation2 + $0x12c] sm:$0xf]
    %v2043 = vld [vmem:[#allocation5 + $0x1a] sm:$0x1]
    %v2044 = vld [vmem:[#allocation5 + $0x1b] sm:$0x1]
    %v2045 = vld [vmem:[#allocation5 + $0x1c] sm:$0x1]
    %v2046 = vld [vmem:[#allocation5 + $0x1d] sm:$0x1]
    %v2047 = vld [vmem:[#allocation5 + $0x1e] sm:$0x1]
    %v2048 = vld [vmem:[#allocation5 + $0x1f] sm:$0x1]
    %v2049 = vld [vmem:[#allocation5 + $0x20] sm:$0x1]
    %v2050 = vld [vmem:[#allocation5 + $0x21] sm:$0x1]
    %v2051 = vld [vmem:[#allocation5 + $0x22] sm:$0x1]
    %v2052 = vld [vmem:[#allocation5 + $0x23] sm:$0x1]
    %v2053 = vpack.c.bf16 %v2014, %v2013
    %v2054 = vlaneseq
    %v2055 = vshrl.u32 %v2054, 7
    %v2056 = vsub.s32 0, %v2055
    %v2057 = vrot.slane %v2043, %v2056
    %v2062 = vunpack.c.l.b16 %v2015
    %v2063 = vunpack.c.l.b16 %v2016
    %v2064 = vunpack.c.l.b16 %v2017
    %v2065 = vunpack.c.l.b16 %v2018
    %v2066 = vpack.c.b16 %v2063, %v2062
    %v2067 = vpack.c.b16 %v2065, %v2064
    %v2071 = vsel %vm278, %v2053, 0
    %2073 = vmatprep.subr.bf16.mxu0 0
    %2074 = vmatpush1.bf16.msra.mxu0 0
    %2075 = vmatprep.subr.bf16.mxu0 0
    %2076 = vmatpush1.bf16.msra.mxu0 0
    %2077 = vmatprep.subr.bf16.mxu0 0
    %2078 = vmatpush1.bf16.msra.mxu0 0
    %2079 = vmatprep.subr.bf16.mxu0 0
    %2080 = vmatpush1.bf16.msra.mxu0 0
    %2081 = vmatprep.subr.bf16.mxu0 0
    %2082 = vmatpush1.bf16.msra.mxu0 0
    %2083 = vmatprep.subr.bf16.mxu0 0
    %2084 = vmatpush1.bf16.msra.mxu0 0
    %2085 = vmatprep.subr.bf16.mxu0 0
    %2086 = vmatpush1.bf16.msra.mxu0 %v2067
    %2087 = vmatprep.subr.bf16.mxu0 0
    %2088 = vmatpush1.bf16.msra.mxu0 %v2066
    %2089 = vmatprep.subr.bf16.mxu0 0
    %2090 = vmatpush2.bf16.msra.mxu0 0
    %2091 = vmatprep.subr.bf16.mxu0 0
    %2092 = vmatpush2.bf16.msra.mxu0 0
    %2093 = vmatprep.subr.bf16.mxu0 0
    %2094 = vmatpush2.bf16.msra.mxu0 0
    %2095 = vmatprep.subr.bf16.mxu0 0
    %2096 = vmatpush2.bf16.msra.mxu0 0
    %2097 = vmatprep.subr.bf16.mxu0 0
    %2098 = vmatpush2.bf16.msra.mxu0 0
    %2099 = vmatprep.subr.bf16.mxu0 0
    %2100 = vmatpush2.bf16.msra.mxu0 0
    %2101 = vmatprep.subr.bf16.mxu0 0
    %2102 = vmatpush2.bf16.msra.mxu0 0
    %2103 = vmatprep.subr.bf16.mxu0 0
    %2104 = vmatpush2.bf16.msra.mxu0 0
    %2105 = vmatprep.mubr.bf16.mxu0 0
    %2106 = vmatmul.mubr.bf16.gmra.mxu0 %v2071
    %v2107 = vpop.f32.mrf.mxu0
    %v2108 = vadd.f32 %v2057, %v2107
    %v2109 = vpop.f32.mrf.mxu0
    %v2110 = vpop.f32.mrf.mxu0
    %v2111 = vadd.f32 %v2057, %v2110
    %v2112 = vpop.f32.mrf.mxu0
    %2113 = vdwg.mxu0
    %v2114 = vlaneseq
    %v2115 = vshrl.u32 %v2114, 7
    %v2116 = vsub.s32 0, %v2115
    %v2117 = vrot.slane %v2044, %v2116
    %v2122 = vunpack.c.l.b16 %v2019
    %v2123 = vunpack.c.l.b16 %v2020
    %v2124 = vunpack.c.l.b16 %v2021
    %v2125 = vunpack.c.l.b16 %v2022
    %v2126 = vpack.c.b16 %v2123, %v2122
    %v2127 = vpack.c.b16 %v2125, %v2124
    %2130 = vmatprep.subr.bf16.mxu0 0
    %2131 = vmatpush1.bf16.msra.mxu0 0
    %2132 = vmatprep.subr.bf16.mxu0 0
    %2133 = vmatpush1.bf16.msra.mxu0 0
    %2134 = vmatprep.subr.bf16.mxu0 0
    %2135 = vmatpush1.bf16.msra.mxu0 0
    %2136 = vmatprep.subr.bf16.mxu0 0
    %2137 = vmatpush1.bf16.msra.mxu0 0
    %2138 = vmatprep.subr.bf16.mxu0 0
    %2139 = vmatpush1.bf16.msra.mxu0 0
    %2140 = vmatprep.subr.bf16.mxu0 0
    %2141 = vmatpush1.bf16.msra.mxu0 0
    %2142 = vmatprep.subr.bf16.mxu0 0
    %2143 = vmatpush1.bf16.msra.mxu0 %v2127
    %2144 = vmatprep.subr.bf16.mxu0 0
    %2145 = vmatpush1.bf16.msra.mxu0 %v2126
    %2146 = vmatprep.subr.bf16.mxu0 0
    %2147 = vmatpush2.bf16.msra.mxu0 0
    %2148 = vmatprep.subr.bf16.mxu0 0
    %2149 = vmatpush2.bf16.msra.mxu0 0
    %2150 = vmatprep.subr.bf16.mxu0 0
    %2151 = vmatpush2.bf16.msra.mxu0 0
    %2152 = vmatprep.subr.bf16.mxu0 0
    %2153 = vmatpush2.bf16.msra.mxu0 0
    %2154 = vmatprep.subr.bf16.mxu0 0
    %2155 = vmatpush2.bf16.msra.mxu0 0
    %2156 = vmatprep.subr.bf16.mxu0 0
    %2157 = vmatpush2.bf16.msra.mxu0 0
    %2158 = vmatprep.subr.bf16.mxu0 0
    %2159 = vmatpush2.bf16.msra.mxu0 0
    %2160 = vmatprep.subr.bf16.mxu0 0
    %2161 = vmatpush2.bf16.msra.mxu0 0
    %2162 = vmatprep.mubr.bf16.mxu0 0
    %2163 = vmatmul.mubr.bf16.gmra.mxu0 %v2071
    %v2164 = vpop.f32.mrf.mxu0
    %v2165 = vadd.f32 %v2117, %v2164
    %v2166 = vpop.f32.mrf.mxu0
    %v2167 = vpop.f32.mrf.mxu0
    %v2168 = vadd.f32 %v2117, %v2167
    %v2169 = vpop.f32.mrf.mxu0
    %2170 = vdwg.mxu0
    %v2171 = vlaneseq
    %v2172 = vshrl.u32 %v2171, 7
    %v2173 = vsub.s32 0, %v2172
    %v2174 = vrot.slane %v2045, %v2173
    %v2179 = vunpack.c.l.b16 %v2023
    %v2180 = vunpack.c.l.b16 %v2024
    %v2181 = vunpack.c.l.b16 %v2025
    %v2182 = vunpack.c.l.b16 %v2026
    %v2183 = vpack.c.b16 %v2180, %v2179
    %v2184 = vpack.c.b16 %v2182, %v2181
    %2187 = vmatprep.subr.bf16.mxu0 0
    %2188 = vmatpush1.bf16.msra.mxu0 0
    %2189 = vmatprep.subr.bf16.mxu0 0
    %2190 = vmatpush1.bf16.msra.mxu0 0
    %2191 = vmatprep.subr.bf16.mxu0 0
    %2192 = vmatpush1.bf16.msra.mxu0 0
    %2193 = vmatprep.subr.bf16.mxu0 0
    %2194 = vmatpush1.bf16.msra.mxu0 0
    %2195 = vmatprep.subr.bf16.mxu0 0
    %2196 = vmatpush1.bf16.msra.mxu0 0
    %2197 = vmatprep.subr.bf16.mxu0 0
    %2198 = vmatpush1.bf16.msra.mxu0 0
    %2199 = vmatprep.subr.bf16.mxu0 0
    %2200 = vmatpush1.bf16.msra.mxu0 %v2184
    %2201 = vmatprep.subr.bf16.mxu0 0
    %2202 = vmatpush1.bf16.msra.mxu0 %v2183
    %2203 = vmatprep.subr.bf16.mxu0 0
    %2204 = vmatpush2.bf16.msra.mxu0 0
    %2205 = vmatprep.subr.bf16.mxu0 0
    %2206 = vmatpush2.bf16.msra.mxu0 0
    %2207 = vmatprep.subr.bf16.mxu0 0
    %2208 = vmatpush2.bf16.msra.mxu0 0
    %2209 = vmatprep.subr.bf16.mxu0 0
    %2210 = vmatpush2.bf16.msra.mxu0 0
    %2211 = vmatprep.subr.bf16.mxu0 0
    %2212 = vmatpush2.bf16.msra.mxu0 0
    %2213 = vmatprep.subr.bf16.mxu0 0
    %2214 = vmatpush2.bf16.msra.mxu0 0
    %2215 = vmatprep.subr.bf16.mxu0 0
    %2216 = vmatpush2.bf16.msra.mxu0 0
    %2217 = vmatprep.subr.bf16.mxu0 0
    %2218 = vmatpush2.bf16.msra.mxu0 0
    %2219 = vmatprep.mubr.bf16.mxu0 0
    %2220 = vmatmul.mubr.bf16.gmra.mxu0 %v2071
    %v2221 = vpop.f32.mrf.mxu0
    %v2222 = vadd.f32 %v2174, %v2221
    %v2223 = vpop.f32.mrf.mxu0
    %v2224 = vpop.f32.mrf.mxu0
    %v2225 = vadd.f32 %v2174, %v2224
    %v2226 = vpop.f32.mrf.mxu0
    %2227 = vdwg.mxu0
    %v2228 = vmul.f32 %v2108, %v207
    %v2229 = vmul.f32 %v2111, %v207
    %v2231 = vsel %vm278, %v2228, 0
    %v2234 = vsel %vm278, %v2165, 0
    %2236 = vmatprep.subr.mxu0 0.0
    %2237 = vmatpush1.xpose.msra.mxu0 0.0
    %2238 = vmatprep.subr.mxu0 0.0
    %2239 = vmatpush1.xpose.msra.mxu0 0.0
    %2240 = vmatprep.subr.mxu0 0.0
    %2241 = vmatpush1.xpose.msra.mxu0 0.0
    %2242 = vmatprep.subr.mxu0 0.0
    %2243 = vmatpush1.xpose.msra.mxu0 0.0
    %2244 = vmatprep.subr.mxu0 0.0
    %2245 = vmatpush1.xpose.msra.mxu0 0.0
    %2246 = vmatprep.subr.mxu0 0.0
    %2247 = vmatpush1.xpose.msra.mxu0 0.0
    %2248 = vmatprep.subr.mxu0 0.0
    %2249 = vmatpush1.xpose.msra.mxu0 0.0
    %2250 = vmatprep.subr.mxu0 0.0
    %2251 = vmatpush1.xpose.msra.mxu0 0.0
    %2252 = vmatprep.subr.mxu0 0.0
    %2253 = vmatpush1.xpose.msra.mxu0 0.0
    %2254 = vmatprep.subr.mxu0 0.0
    %2255 = vmatpush1.xpose.msra.mxu0 0.0
    %2256 = vmatprep.subr.mxu0 0.0
    %2257 = vmatpush1.xpose.msra.mxu0 0.0
    %2258 = vmatprep.subr.mxu0 0.0
    %2259 = vmatpush1.xpose.msra.mxu0 0.0
    %2260 = vmatprep.subr.mxu0 0.0
    %2261 = vmatpush1.xpose.msra.mxu0 0.0
    %2262 = vmatprep.subr.mxu0 0.0
    %2263 = vmatpush1.xpose.msra.mxu0 0.0
    %2264 = vmatprep.subr.mxu0 0.0
    %2265 = vmatpush1.xpose.msra.mxu0 0.0
    %2266 = vmatprep.subr.mxu0 0.0
    %2267 = vmatpush1.xpose.msra.mxu0 %v2234
    %2268 = vmatprep.subr.mxu0 0.0
    %2269 = vmatpush2.xpose.msra.mxu0 0.0
    %2270 = vmatprep.subr.mxu0 0.0
    %2271 = vmatpush2.xpose.msra.mxu0 0.0
    %2272 = vmatprep.subr.mxu0 0.0
    %2273 = vmatpush2.xpose.msra.mxu0 0.0
    %2274 = vmatprep.subr.mxu0 0.0
    %2275 = vmatpush2.xpose.msra.mxu0 0.0
    %2276 = vmatprep.subr.mxu0 0.0
    %2277 = vmatpush2.xpose.msra.mxu0 0.0
    %2278 = vmatprep.subr.mxu0 0.0
    %2279 = vmatpush2.xpose.msra.mxu0 0.0
    %2280 = vmatprep.subr.mxu0 0.0
    %2281 = vmatpush2.xpose.msra.mxu0 0.0
    %2282 = vmatprep.subr.mxu0 0.0
    %2283 = vmatpush2.xpose.msra.mxu0 0.0
    %2284 = vmatprep.subr.mxu0 0.0
    %2285 = vmatpush2.xpose.msra.mxu0 0.0
    %2286 = vmatprep.subr.mxu0 0.0
    %2287 = vmatpush2.xpose.msra.mxu0 0.0
    %2288 = vmatprep.subr.mxu0 0.0
    %2289 = vmatpush2.xpose.msra.mxu0 0.0
    %2290 = vmatprep.subr.mxu0 0.0
    %2291 = vmatpush2.xpose.msra.mxu0 0.0
    %2292 = vmatprep.subr.mxu0 0.0
    %2293 = vmatpush2.xpose.msra.mxu0 0.0
    %2294 = vmatprep.subr.mxu0 0.0
    %2295 = vmatpush2.xpose.msra.mxu0 0.0
    %2296 = vmatprep.subr.mxu0 0.0
    %2297 = vmatpush2.xpose.msra.mxu0 0.0
    %2298 = vmatprep.subr.mxu0 0.0
    %2299 = vmatpush2.xpose.msra.mxu0 0.0
    %2300 = vmatprep.mubr.f32.mxu0 0.0
    %2301 = vmatmul.mubr.f32.gmra.mxu0 %v2231
    %v2302 = vpop.f32.mrf.mxu0
    %v2303 = vadd.f32 0.0, %v2302
    %v2304 = vpop.f32.mrf.mxu0
    %2305 = vdwg.mxu0
    %v2307 = vsel %vm278, %v2229, 0
    %v2310 = vsel %vm278, %v2168, 0
    %2312 = vmatprep.subr.mxu0 0.0
    %2313 = vmatpush1.xpose.msra.mxu0 0.0
    %2314 = vmatprep.subr.mxu0 0.0
    %2315 = vmatpush1.xpose.msra.mxu0 0.0
    %2316 = vmatprep.subr.mxu0 0.0
    %2317 = vmatpush1.xpose.msra.mxu0 0.0
    %2318 = vmatprep.subr.mxu0 0.0
    %2319 = vmatpush1.xpose.msra.mxu0 0.0
    %2320 = vmatprep.subr.mxu0 0.0
    %2321 = vmatpush1.xpose.msra.mxu0 0.0
    %2322 = vmatprep.subr.mxu0 0.0
    %2323 = vmatpush1.xpose.msra.mxu0 0.0
    %2324 = vmatprep.subr.mxu0 0.0
    %2325 = vmatpush1.xpose.msra.mxu0 0.0
    %2326 = vmatprep.subr.mxu0 0.0
    %2327 = vmatpush1.xpose.msra.mxu0 0.0
    %2328 = vmatprep.subr.mxu0 0.0
    %2329 = vmatpush1.xpose.msra.mxu0 0.0
    %2330 = vmatprep.subr.mxu0 0.0
    %2331 = vmatpush1.xpose.msra.mxu0 0.0
    %2332 = vmatprep.subr.mxu0 0.0
    %2333 = vmatpush1.xpose.msra.mxu0 0.0
    %2334 = vmatprep.subr.mxu0 0.0
    %2335 = vmatpush1.xpose.msra.mxu0 0.0
    %2336 = vmatprep.subr.mxu0 0.0
    %2337 = vmatpush1.xpose.msra.mxu0 0.0
    %2338 = vmatprep.subr.mxu0 0.0
    %2339 = vmatpush1.xpose.msra.mxu0 0.0
    %2340 = vmatprep.subr.mxu0 0.0
    %2341 = vmatpush1.xpose.msra.mxu0 0.0
    %2342 = vmatprep.subr.mxu0 0.0
    %2343 = vmatpush1.xpose.msra.mxu0 %v2310
    %2344 = vmatprep.subr.mxu0 0.0
    %2345 = vmatpush2.xpose.msra.mxu0 0.0
    %2346 = vmatprep.subr.mxu0 0.0
    %2347 = vmatpush2.xpose.msra.mxu0 0.0
    %2348 = vmatprep.subr.mxu0 0.0
    %2349 = vmatpush2.xpose.msra.mxu0 0.0
    %2350 = vmatprep.subr.mxu0 0.0
    %2351 = vmatpush2.xpose.msra.mxu0 0.0
    %2352 = vmatprep.subr.mxu0 0.0
    %2353 = vmatpush2.xpose.msra.mxu0 0.0
    %2354 = vmatprep.subr.mxu0 0.0
    %2355 = vmatpush2.xpose.msra.mxu0 0.0
    %2356 = vmatprep.subr.mxu0 0.0
    %2357 = vmatpush2.xpose.msra.mxu0 0.0
    %2358 = vmatprep.subr.mxu0 0.0
    %2359 = vmatpush2.xpose.msra.mxu0 0.0
    %2360 = vmatprep.subr.mxu0 0.0
    %2361 = vmatpush2.xpose.msra.mxu0 0.0
    %2362 = vmatprep.subr.mxu0 0.0
    %2363 = vmatpush2.xpose.msra.mxu0 0.0
    %2364 = vmatprep.subr.mxu0 0.0
    %2365 = vmatpush2.xpose.msra.mxu0 0.0
    %2366 = vmatprep.subr.mxu0 0.0
    %2367 = vmatpush2.xpose.msra.mxu0 0.0
    %2368 = vmatprep.subr.mxu0 0.0
    %2369 = vmatpush2.xpose.msra.mxu0 0.0
    %2370 = vmatprep.subr.mxu0 0.0
    %2371 = vmatpush2.xpose.msra.mxu0 0.0
    %2372 = vmatprep.subr.mxu0 0.0
    %2373 = vmatpush2.xpose.msra.mxu0 0.0
    %2374 = vmatprep.subr.mxu0 0.0
    %2375 = vmatpush2.xpose.msra.mxu0 0.0
    %2376 = vmatprep.mubr.f32.mxu0 0.0
    %2377 = vmatmul.mubr.f32.gmra.mxu0 %v2307
    %v2378 = vpop.f32.mrf.mxu0
    %v2379 = vadd.f32 0.0, %v2378
    %v2380 = vpop.f32.mrf.mxu0
    %2381 = vdwg.mxu0
    %v2382 = vmul.f32 %v2303, 0.35355338
    %v2383 = vmul.f32 %v2379, 0.35355338
    %v2384 = vadd.f32 %v2382, %v196
    %v2385 = vadd.f32 %v2383, %v200
    %v2386 = vsel %vm595, %v2384, -inf
    %2387 = vmax.xlane.f32.xlu0 %v2386
    %v2388 = vpop.xlane.xlu0 %2387
    %v2389 = vsel %vm595, %v2385, -inf
    %2390 = vmax.xlane.f32.xlu0 %v2389
    %v2391 = vpop.xlane.xlu0 %2390
    %v2392 = vsub.f32 %v2384, %v2388
    %v2393 = vsub.f32 %v2385, %v2391
    %v2394 = vmul.f32 %v2392, 1.442695
    %v2395 = vpow.pop %v2394
    %v2396 = vmul.f32 %v2393, 1.442695
    %v2397 = vpow.pop %v2396
    %v2398 = vsel %vm595, %v2395, 0.0
    %2399 = vadd.xlane.f32.xlu0 %v2398
    %v2400 = vpop.xlane.xlu0 %2399
    %v2401 = vsel %vm595, %v2397, 0.0
    %2402 = vadd.xlane.f32.xlu0 %v2401
    %v2403 = vpop.xlane.xlu0 %2402
    %v2404 = vrcp.pop %v2400
    %v2405 = vrcp.pop %v2403
    %v2406 = vmul.f32 %v2395, %v2404
    %v2407 = vmul.f32 %v2397, %v2405
    %v2408 = vmul.f32 %v2222, %v207
    %v2409 = vmul.f32 %v2225, %v207
    %v2410 = vmul.f32 %v2108, %v212
    %v2411 = vmul.f32 %v2111, %v212
    %v2413 = vsel %vm278, %v2410, 0
    %2415 = vmatprep.subr.mxu0 0.0
    %2416 = vmatpush1.xpose.msra.mxu0 0.0
    %2417 = vmatprep.subr.mxu0 0.0
    %2418 = vmatpush1.xpose.msra.mxu0 0.0
    %2419 = vmatprep.subr.mxu0 0.0
    %2420 = vmatpush1.xpose.msra.mxu0 0.0
    %2421 = vmatprep.subr.mxu0 0.0
    %2422 = vmatpush1.xpose.msra.mxu0 0.0
    %2423 = vmatprep.subr.mxu0 0.0
    %2424 = vmatpush1.xpose.msra.mxu0 0.0
    %2425 = vmatprep.subr.mxu0 0.0
    %2426 = vmatpush1.xpose.msra.mxu0 0.0
    %2427 = vmatprep.subr.mxu0 0.0
    %2428 = vmatpush1.xpose.msra.mxu0 0.0
    %2429 = vmatprep.subr.mxu0 0.0
    %2430 = vmatpush1.xpose.msra.mxu0 0.0
    %2431 = vmatprep.subr.mxu0 0.0
    %2432 = vmatpush1.xpose.msra.mxu0 0.0
    %2433 = vmatprep.subr.mxu0 0.0
    %2434 = vmatpush1.xpose.msra.mxu0 0.0
    %2435 = vmatprep.subr.mxu0 0.0
    %2436 = vmatpush1.xpose.msra.mxu0 0.0
    %2437 = vmatprep.subr.mxu0 0.0
    %2438 = vmatpush1.xpose.msra.mxu0 0.0
    %2439 = vmatprep.subr.mxu0 0.0
    %2440 = vmatpush1.xpose.msra.mxu0 0.0
    %2441 = vmatprep.subr.mxu0 0.0
    %2442 = vmatpush1.xpose.msra.mxu0 0.0
    %2443 = vmatprep.subr.mxu0 0.0
    %2444 = vmatpush1.xpose.msra.mxu0 0.0
    %2445 = vmatprep.subr.mxu0 0.0
    %2446 = vmatpush1.xpose.msra.mxu0 %v2234
    %2447 = vmatprep.subr.mxu0 0.0
    %2448 = vmatpush2.xpose.msra.mxu0 0.0
    %2449 = vmatprep.subr.mxu0 0.0
    %2450 = vmatpush2.xpose.msra.mxu0 0.0
    %2451 = vmatprep.subr.mxu0 0.0
    %2452 = vmatpush2.xpose.msra.mxu0 0.0
    %2453 = vmatprep.subr.mxu0 0.0
    %2454 = vmatpush2.xpose.msra.mxu0 0.0
    %2455 = vmatprep.subr.mxu0 0.0
    %2456 = vmatpush2.xpose.msra.mxu0 0.0
    %2457 = vmatprep.subr.mxu0 0.0
    %2458 = vmatpush2.xpose.msra.mxu0 0.0
    %2459 = vmatprep.subr.mxu0 0.0
    %2460 = vmatpush2.xpose.msra.mxu0 0.0
    %2461 = vmatprep.subr.mxu0 0.0
    %2462 = vmatpush2.xpose.msra.mxu0 0.0
    %2463 = vmatprep.subr.mxu0 0.0
    %2464 = vmatpush2.xpose.msra.mxu0 0.0
    %2465 = vmatprep.subr.mxu0 0.0
    %2466 = vmatpush2.xpose.msra.mxu0 0.0
    %2467 = vmatprep.subr.mxu0 0.0
    %2468 = vmatpush2.xpose.msra.mxu0 0.0
    %2469 = vmatprep.subr.mxu0 0.0
    %2470 = vmatpush2.xpose.msra.mxu0 0.0
    %2471 = vmatprep.subr.mxu0 0.0
    %2472 = vmatpush2.xpose.msra.mxu0 0.0
    %2473 = vmatprep.subr.mxu0 0.0
    %2474 = vmatpush2.xpose.msra.mxu0 0.0
    %2475 = vmatprep.subr.mxu0 0.0
    %2476 = vmatpush2.xpose.msra.mxu0 0.0
    %2477 = vmatprep.subr.mxu0 0.0
    %2478 = vmatpush2.xpose.msra.mxu0 0.0
    %2479 = vmatprep.mubr.f32.mxu0 0.0
    %2480 = vmatmul.mubr.f32.gmra.mxu0 %v2413
    %v2481 = vpop.f32.mrf.mxu0
    %v2482 = vadd.f32 0.0, %v2481
    %v2483 = vpop.f32.mrf.mxu0
    %2484 = vdwg.mxu0
    %v2486 = vsel %vm278, %v2411, 0
    %2488 = vmatprep.subr.mxu0 0.0
    %2489 = vmatpush1.xpose.msra.mxu0 0.0
    %2490 = vmatprep.subr.mxu0 0.0
    %2491 = vmatpush1.xpose.msra.mxu0 0.0
    %2492 = vmatprep.subr.mxu0 0.0
    %2493 = vmatpush1.xpose.msra.mxu0 0.0
    %2494 = vmatprep.subr.mxu0 0.0
    %2495 = vmatpush1.xpose.msra.mxu0 0.0
    %2496 = vmatprep.subr.mxu0 0.0
    %2497 = vmatpush1.xpose.msra.mxu0 0.0
    %2498 = vmatprep.subr.mxu0 0.0
    %2499 = vmatpush1.xpose.msra.mxu0 0.0
    %2500 = vmatprep.subr.mxu0 0.0
    %2501 = vmatpush1.xpose.msra.mxu0 0.0
    %2502 = vmatprep.subr.mxu0 0.0
    %2503 = vmatpush1.xpose.msra.mxu0 0.0
    %2504 = vmatprep.subr.mxu0 0.0
    %2505 = vmatpush1.xpose.msra.mxu0 0.0
    %2506 = vmatprep.subr.mxu0 0.0
    %2507 = vmatpush1.xpose.msra.mxu0 0.0
    %2508 = vmatprep.subr.mxu0 0.0
    %2509 = vmatpush1.xpose.msra.mxu0 0.0
    %2510 = vmatprep.subr.mxu0 0.0
    %2511 = vmatpush1.xpose.msra.mxu0 0.0
    %2512 = vmatprep.subr.mxu0 0.0
    %2513 = vmatpush1.xpose.msra.mxu0 0.0
    %2514 = vmatprep.subr.mxu0 0.0
    %2515 = vmatpush1.xpose.msra.mxu0 0.0
    %2516 = vmatprep.subr.mxu0 0.0
    %2517 = vmatpush1.xpose.msra.mxu0 0.0
    %2518 = vmatprep.subr.mxu0 0.0
    %2519 = vmatpush1.xpose.msra.mxu0 %v2310
    %2520 = vmatprep.subr.mxu0 0.0
    %2521 = vmatpush2.xpose.msra.mxu0 0.0
    %2522 = vmatprep.subr.mxu0 0.0
    %2523 = vmatpush2.xpose.msra.mxu0 0.0
    %2524 = vmatprep.subr.mxu0 0.0
    %2525 = vmatpush2.xpose.msra.mxu0 0.0
    %2526 = vmatprep.subr.mxu0 0.0
    %2527 = vmatpush2.xpose.msra.mxu0 0.0
    %2528 = vmatprep.subr.mxu0 0.0
    %2529 = vmatpush2.xpose.msra.mxu0 0.0
    %2530 = vmatprep.subr.mxu0 0.0
    %2531 = vmatpush2.xpose.msra.mxu0 0.0
    %2532 = vmatprep.subr.mxu0 0.0
    %2533 = vmatpush2.xpose.msra.mxu0 0.0
    %2534 = vmatprep.subr.mxu0 0.0
    %2535 = vmatpush2.xpose.msra.mxu0 0.0
    %2536 = vmatprep.subr.mxu0 0.0
    %2537 = vmatpush2.xpose.msra.mxu0 0.0
    %2538 = vmatprep.subr.mxu0 0.0
    %2539 = vmatpush2.xpose.msra.mxu0 0.0
    %2540 = vmatprep.subr.mxu0 0.0
    %2541 = vmatpush2.xpose.msra.mxu0 0.0
    %2542 = vmatprep.subr.mxu0 0.0
    %2543 = vmatpush2.xpose.msra.mxu0 0.0
    %2544 = vmatprep.subr.mxu0 0.0
    %2545 = vmatpush2.xpose.msra.mxu0 0.0
    %2546 = vmatprep.subr.mxu0 0.0
    %2547 = vmatpush2.xpose.msra.mxu0 0.0
    %2548 = vmatprep.subr.mxu0 0.0
    %2549 = vmatpush2.xpose.msra.mxu0 0.0
    %2550 = vmatprep.subr.mxu0 0.0
    %2551 = vmatpush2.xpose.msra.mxu0 0.0
    %2552 = vmatprep.mubr.f32.mxu0 0.0
    %2553 = vmatmul.mubr.f32.gmra.mxu0 %v2486
    %v2554 = vpop.f32.mrf.mxu0
    %v2555 = vadd.f32 0.0, %v2554
    %v2556 = vpop.f32.mrf.mxu0
    %2557 = vdwg.mxu0
    %v2558 = vmul.f32 %v2482, 0.35355338
    %v2559 = vmul.f32 %v2555, 0.35355338
    %v2560 = vadd.f32 %v2558, %v196
    %v2561 = vadd.f32 %v2559, %v200
    %v2562 = vsel %vm595, %v2560, -inf
    %2563 = vmax.xlane.f32.xlu0 %v2562
    %v2564 = vpop.xlane.xlu0 %2563
    %v2565 = vsel %vm595, %v2561, -inf
    %2566 = vmax.xlane.f32.xlu0 %v2565
    %v2567 = vpop.xlane.xlu0 %2566
    %v2568 = vsub.f32 %v2560, %v2564
    %v2569 = vsub.f32 %v2561, %v2567
    %v2570 = vmul.f32 %v2568, 1.442695
    %v2571 = vpow.pop %v2570
    %v2572 = vmul.f32 %v2569, 1.442695
    %v2573 = vpow.pop %v2572
    %v2574 = vsel %vm595, %v2571, 0.0
    %2575 = vadd.xlane.f32.xlu0 %v2574
    %v2576 = vpop.xlane.xlu0 %2575
    %v2577 = vsel %vm595, %v2573, 0.0
    %2578 = vadd.xlane.f32.xlu0 %v2577
    %v2579 = vpop.xlane.xlu0 %2578
    %v2580 = vrcp.pop %v2576
    %v2581 = vrcp.pop %v2579
    %v2582 = vmul.f32 %v2571, %v2580
    %v2583 = vmul.f32 %v2573, %v2581
    %v2584 = vmul.f32 %v2222, %v212
    %v2585 = vmul.f32 %v2225, %v212
    %v2587 = vsel %vm595, %v2582, 0
    %2589 = vmatprep.subr.mxu0 0.0
    %2590 = vmatpush1.msra.mxu0 0.0
    %2591 = vmatprep.subr.mxu0 0.0
    %2592 = vmatpush1.msra.mxu0 0.0
    %2593 = vmatprep.subr.mxu0 0.0
    %2594 = vmatpush1.msra.mxu0 0.0
    %2595 = vmatprep.subr.mxu0 0.0
    %2596 = vmatpush1.msra.mxu0 0.0
    %2597 = vmatprep.subr.mxu0 0.0
    %2598 = vmatpush1.msra.mxu0 0.0
    %2599 = vmatprep.subr.mxu0 0.0
    %2600 = vmatpush1.msra.mxu0 0.0
    %2601 = vmatprep.subr.mxu0 0.0
    %2602 = vmatpush1.msra.mxu0 0.0
    %2603 = vmatprep.subr.mxu0 0.0
    %2604 = vmatpush1.msra.mxu0 0.0
    %2605 = vmatprep.subr.mxu0 0.0
    %2606 = vmatpush1.msra.mxu0 0.0
    %2607 = vmatprep.subr.mxu0 0.0
    %2608 = vmatpush1.msra.mxu0 0.0
    %2609 = vmatprep.subr.mxu0 0.0
    %2610 = vmatpush1.msra.mxu0 0.0
    %2611 = vmatprep.subr.mxu0 0.0
    %2612 = vmatpush1.msra.mxu0 0.0
    %2613 = vmatprep.subr.mxu0 0.0
    %2614 = vmatpush1.msra.mxu0 0.0
    %2615 = vmatprep.subr.mxu0 0.0
    %2616 = vmatpush1.msra.mxu0 0.0
    %2617 = vmatprep.subr.mxu0 0.0
    %2618 = vmatpush1.msra.mxu0 0.0
    %2619 = vmatprep.subr.mxu0 0.0
    %2620 = vmatpush1.msra.mxu0 %v2584
    %2621 = vmatprep.subr.mxu0 0.0
    %2622 = vmatpush2.msra.mxu0 0.0
    %2623 = vmatprep.subr.mxu0 0.0
    %2624 = vmatpush2.msra.mxu0 0.0
    %2625 = vmatprep.subr.mxu0 0.0
    %2626 = vmatpush2.msra.mxu0 0.0
    %2627 = vmatprep.subr.mxu0 0.0
    %2628 = vmatpush2.msra.mxu0 0.0
    %2629 = vmatprep.subr.mxu0 0.0
    %2630 = vmatpush2.msra.mxu0 0.0
    %2631 = vmatprep.subr.mxu0 0.0
    %2632 = vmatpush2.msra.mxu0 0.0
    %2633 = vmatprep.subr.mxu0 0.0
    %2634 = vmatpush2.msra.mxu0 0.0
    %2635 = vmatprep.subr.mxu0 0.0
    %2636 = vmatpush2.msra.mxu0 0.0
    %2637 = vmatprep.subr.mxu0 0.0
    %2638 = vmatpush2.msra.mxu0 0.0
    %2639 = vmatprep.subr.mxu0 0.0
    %2640 = vmatpush2.msra.mxu0 0.0
    %2641 = vmatprep.subr.mxu0 0.0
    %2642 = vmatpush2.msra.mxu0 0.0
    %2643 = vmatprep.subr.mxu0 0.0
    %2644 = vmatpush2.msra.mxu0 0.0
    %2645 = vmatprep.subr.mxu0 0.0
    %2646 = vmatpush2.msra.mxu0 0.0
    %2647 = vmatprep.subr.mxu0 0.0
    %2648 = vmatpush2.msra.mxu0 0.0
    %2649 = vmatprep.subr.mxu0 0.0
    %2650 = vmatpush2.msra.mxu0 0.0
    %2651 = vmatprep.subr.mxu0 0.0
    %2652 = vmatpush2.msra.mxu0 0.0
    %2653 = vmatprep.mubr.f32.mxu0 0.0
    %2654 = vmatmul.mubr.f32.gmra.mxu0 %v2587
    %v2655 = vpop.f32.mrf.mxu0
    %v2656 = vadd.f32 0.0, %v2655
    %v2657 = vpop.f32.mrf.mxu0
    %2658 = vdwg.mxu0
    %v2660 = vsel %vm595, %v2583, 0
    %2662 = vmatprep.subr.mxu0 0.0
    %2663 = vmatpush1.msra.mxu0 0.0
    %2664 = vmatprep.subr.mxu0 0.0
    %2665 = vmatpush1.msra.mxu0 0.0
    %2666 = vmatprep.subr.mxu0 0.0
    %2667 = vmatpush1.msra.mxu0 0.0
    %2668 = vmatprep.subr.mxu0 0.0
    %2669 = vmatpush1.msra.mxu0 0.0
    %2670 = vmatprep.subr.mxu0 0.0
    %2671 = vmatpush1.msra.mxu0 0.0
    %2672 = vmatprep.subr.mxu0 0.0
    %2673 = vmatpush1.msra.mxu0 0.0
    %2674 = vmatprep.subr.mxu0 0.0
    %2675 = vmatpush1.msra.mxu0 0.0
    %2676 = vmatprep.subr.mxu0 0.0
    %2677 = vmatpush1.msra.mxu0 0.0
    %2678 = vmatprep.subr.mxu0 0.0
    %2679 = vmatpush1.msra.mxu0 0.0
    %2680 = vmatprep.subr.mxu0 0.0
    %2681 = vmatpush1.msra.mxu0 0.0
    %2682 = vmatprep.subr.mxu0 0.0
    %2683 = vmatpush1.msra.mxu0 0.0
    %2684 = vmatprep.subr.mxu0 0.0
    %2685 = vmatpush1.msra.mxu0 0.0
    %2686 = vmatprep.subr.mxu0 0.0
    %2687 = vmatpush1.msra.mxu0 0.0
    %2688 = vmatprep.subr.mxu0 0.0
    %2689 = vmatpush1.msra.mxu0 0.0
    %2690 = vmatprep.subr.mxu0 0.0
    %2691 = vmatpush1.msra.mxu0 0.0
    %2692 = vmatprep.subr.mxu0 0.0
    %2693 = vmatpush1.msra.mxu0 %v2585
    %2694 = vmatprep.subr.mxu0 0.0
    %2695 = vmatpush2.msra.mxu0 0.0
    %2696 = vmatprep.subr.mxu0 0.0
    %2697 = vmatpush2.msra.mxu0 0.0
    %2698 = vmatprep.subr.mxu0 0.0
    %2699 = vmatpush2.msra.mxu0 0.0
    %2700 = vmatprep.subr.mxu0 0.0
    %2701 = vmatpush2.msra.mxu0 0.0
    %2702 = vmatprep.subr.mxu0 0.0
    %2703 = vmatpush2.msra.mxu0 0.0
    %2704 = vmatprep.subr.mxu0 0.0
    %2705 = vmatpush2.msra.mxu0 0.0
    %2706 = vmatprep.subr.mxu0 0.0
    %2707 = vmatpush2.msra.mxu0 0.0
    %2708 = vmatprep.subr.mxu0 0.0
    %2709 = vmatpush2.msra.mxu0 0.0
    %2710 = vmatprep.subr.mxu0 0.0
    %2711 = vmatpush2.msra.mxu0 0.0
    %2712 = vmatprep.subr.mxu0 0.0
    %2713 = vmatpush2.msra.mxu0 0.0
    %2714 = vmatprep.subr.mxu0 0.0
    %2715 = vmatpush2.msra.mxu0 0.0
    %2716 = vmatprep.subr.mxu0 0.0
    %2717 = vmatpush2.msra.mxu0 0.0
    %2718 = vmatprep.subr.mxu0 0.0
    %2719 = vmatpush2.msra.mxu0 0.0
    %2720 = vmatprep.subr.mxu0 0.0
    %2721 = vmatpush2.msra.mxu0 0.0
    %2722 = vmatprep.subr.mxu0 0.0
    %2723 = vmatpush2.msra.mxu0 0.0
    %2724 = vmatprep.subr.mxu0 0.0
    %2725 = vmatpush2.msra.mxu0 0.0
    %2726 = vmatprep.mubr.f32.mxu0 0.0
    %2727 = vmatmul.mubr.f32.gmra.mxu0 %v2660
    %v2728 = vpop.f32.mrf.mxu0
    %v2729 = vadd.f32 0.0, %v2728
    %v2730 = vpop.f32.mrf.mxu0
    %2731 = vdwg.mxu0
    %v2732 = vmul.f32 %v2108, %v217
    %v2733 = vmul.f32 %v2111, %v217
    %v2735 = vsel %vm278, %v2732, 0
    %2737 = vmatprep.subr.mxu0 0.0
    %2738 = vmatpush1.xpose.msra.mxu0 0.0
    %2739 = vmatprep.subr.mxu0 0.0
    %2740 = vmatpush1.xpose.msra.mxu0 0.0
    %2741 = vmatprep.subr.mxu0 0.0
    %2742 = vmatpush1.xpose.msra.mxu0 0.0
    %2743 = vmatprep.subr.mxu0 0.0
    %2744 = vmatpush1.xpose.msra.mxu0 0.0
    %2745 = vmatprep.subr.mxu0 0.0
    %2746 = vmatpush1.xpose.msra.mxu0 0.0
    %2747 = vmatprep.subr.mxu0 0.0
    %2748 = vmatpush1.xpose.msra.mxu0 0.0
    %2749 = vmatprep.subr.mxu0 0.0
    %2750 = vmatpush1.xpose.msra.mxu0 0.0
    %2751 = vmatprep.subr.mxu0 0.0
    %2752 = vmatpush1.xpose.msra.mxu0 0.0
    %2753 = vmatprep.subr.mxu0 0.0
    %2754 = vmatpush1.xpose.msra.mxu0 0.0
    %2755 = vmatprep.subr.mxu0 0.0
    %2756 = vmatpush1.xpose.msra.mxu0 0.0
    %2757 = vmatprep.subr.mxu0 0.0
    %2758 = vmatpush1.xpose.msra.mxu0 0.0
    %2759 = vmatprep.subr.mxu0 0.0
    %2760 = vmatpush1.xpose.msra.mxu0 0.0
    %2761 = vmatprep.subr.mxu0 0.0
    %2762 = vmatpush1.xpose.msra.mxu0 0.0
    %2763 = vmatprep.subr.mxu0 0.0
    %2764 = vmatpush1.xpose.msra.mxu0 0.0
    %2765 = vmatprep.subr.mxu0 0.0
    %2766 = vmatpush1.xpose.msra.mxu0 0.0
    %2767 = vmatprep.subr.mxu0 0.0
    %2768 = vmatpush1.xpose.msra.mxu0 %v2234
    %2769 = vmatprep.subr.mxu0 0.0
    %2770 = vmatpush2.xpose.msra.mxu0 0.0
    %2771 = vmatprep.subr.mxu0 0.0
    %2772 = vmatpush2.xpose.msra.mxu0 0.0
    %2773 = vmatprep.subr.mxu0 0.0
    %2774 = vmatpush2.xpose.msra.mxu0 0.0
    %2775 = vmatprep.subr.mxu0 0.0
    %2776 = vmatpush2.xpose.msra.mxu0 0.0
    %2777 = vmatprep.subr.mxu0 0.0
    %2778 = vmatpush2.xpose.msra.mxu0 0.0
    %2779 = vmatprep.subr.mxu0 0.0
    %2780 = vmatpush2.xpose.msra.mxu0 0.0
    %2781 = vmatprep.subr.mxu0 0.0
    %2782 = vmatpush2.xpose.msra.mxu0 0.0
    %2783 = vmatprep.subr.mxu0 0.0
    %2784 = vmatpush2.xpose.msra.mxu0 0.0
    %2785 = vmatprep.subr.mxu0 0.0
    %2786 = vmatpush2.xpose.msra.mxu0 0.0
    %2787 = vmatprep.subr.mxu0 0.0
    %2788 = vmatpush2.xpose.msra.mxu0 0.0
    %2789 = vmatprep.subr.mxu0 0.0
    %2790 = vmatpush2.xpose.msra.mxu0 0.0
    %2791 = vmatprep.subr.mxu0 0.0
    %2792 = vmatpush2.xpose.msra.mxu0 0.0
    %2793 = vmatprep.subr.mxu0 0.0
    %2794 = vmatpush2.xpose.msra.mxu0 0.0
    %2795 = vmatprep.subr.mxu0 0.0
    %2796 = vmatpush2.xpose.msra.mxu0 0.0
    %2797 = vmatprep.subr.mxu0 0.0
    %2798 = vmatpush2.xpose.msra.mxu0 0.0
    %2799 = vmatprep.subr.mxu0 0.0
    %2800 = vmatpush2.xpose.msra.mxu0 0.0
    %2801 = vmatprep.mubr.f32.mxu0 0.0
    %2802 = vmatmul.mubr.f32.gmra.mxu0 %v2735
    %v2803 = vpop.f32.mrf.mxu0
    %v2804 = vadd.f32 0.0, %v2803
    %v2805 = vpop.f32.mrf.mxu0
    %2806 = vdwg.mxu0
    %v2808 = vsel %vm278, %v2733, 0
    %2810 = vmatprep.subr.mxu0 0.0
    %2811 = vmatpush1.xpose.msra.mxu0 0.0
    %2812 = vmatprep.subr.mxu0 0.0
    %2813 = vmatpush1.xpose.msra.mxu0 0.0
    %2814 = vmatprep.subr.mxu0 0.0
    %2815 = vmatpush1.xpose.msra.mxu0 0.0
    %2816 = vmatprep.subr.mxu0 0.0
    %2817 = vmatpush1.xpose.msra.mxu0 0.0
    %2818 = vmatprep.subr.mxu0 0.0
    %2819 = vmatpush1.xpose.msra.mxu0 0.0
    %2820 = vmatprep.subr.mxu0 0.0
    %2821 = vmatpush1.xpose.msra.mxu0 0.0
    %2822 = vmatprep.subr.mxu0 0.0
    %2823 = vmatpush1.xpose.msra.mxu0 0.0
    %2824 = vmatprep.subr.mxu0 0.0
    %2825 = vmatpush1.xpose.msra.mxu0 0.0
    %2826 = vmatprep.subr.mxu0 0.0
    %2827 = vmatpush1.xpose.msra.mxu0 0.0
    %2828 = vmatprep.subr.mxu0 0.0
    %2829 = vmatpush1.xpose.msra.mxu0 0.0
    %2830 = vmatprep.subr.mxu0 0.0
    %2831 = vmatpush1.xpose.msra.mxu0 0.0
    %2832 = vmatprep.subr.mxu0 0.0
    %2833 = vmatpush1.xpose.msra.mxu0 0.0
    %2834 = vmatprep.subr.mxu0 0.0
    %2835 = vmatpush1.xpose.msra.mxu0 0.0
    %2836 = vmatprep.subr.mxu0 0.0
    %2837 = vmatpush1.xpose.msra.mxu0 0.0
    %2838 = vmatprep.subr.mxu0 0.0
    %2839 = vmatpush1.xpose.msra.mxu0 0.0
    %2840 = vmatprep.subr.mxu0 0.0
    %2841 = vmatpush1.xpose.msra.mxu0 %v2310
    %2842 = vmatprep.subr.mxu0 0.0
    %2843 = vmatpush2.xpose.msra.mxu0 0.0
    %2844 = vmatprep.subr.mxu0 0.0
    %2845 = vmatpush2.xpose.msra.mxu0 0.0
    %2846 = vmatprep.subr.mxu0 0.0
    %2847 = vmatpush2.xpose.msra.mxu0 0.0
    %2848 = vmatprep.subr.mxu0 0.0
    %2849 = vmatpush2.xpose.msra.mxu0 0.0
    %2850 = vmatprep.subr.mxu0 0.0
    %2851 = vmatpush2.xpose.msra.mxu0 0.0
    %2852 = vmatprep.subr.mxu0 0.0
    %2853 = vmatpush2.xpose.msra.mxu0 0.0
    %2854 = vmatprep.subr.mxu0 0.0
    %2855 = vmatpush2.xpose.msra.mxu0 0.0
    %2856 = vmatprep.subr.mxu0 0.0
    %2857 = vmatpush2.xpose.msra.mxu0 0.0
    %2858 = vmatprep.subr.mxu0 0.0
    %2859 = vmatpush2.xpose.msra.mxu0 0.0
    %2860 = vmatprep.subr.mxu0 0.0
    %2861 = vmatpush2.xpose.msra.mxu0 0.0
    %2862 = vmatprep.subr.mxu0 0.0
    %2863 = vmatpush2.xpose.msra.mxu0 0.0
    %2864 = vmatprep.subr.mxu0 0.0
    %2865 = vmatpush2.xpose.msra.mxu0 0.0
    %2866 = vmatprep.subr.mxu0 0.0
    %2867 = vmatpush2.xpose.msra.mxu0 0.0
    %2868 = vmatprep.subr.mxu0 0.0
    %2869 = vmatpush2.xpose.msra.mxu0 0.0
    %2870 = vmatprep.subr.mxu0 0.0
    %2871 = vmatpush2.xpose.msra.mxu0 0.0
    %2872 = vmatprep.subr.mxu0 0.0
    %2873 = vmatpush2.xpose.msra.mxu0 0.0
    %2874 = vmatprep.mubr.f32.mxu0 0.0
    %2875 = vmatmul.mubr.f32.gmra.mxu0 %v2808
    %v2876 = vpop.f32.mrf.mxu0
    %v2877 = vadd.f32 0.0, %v2876
    %v2878 = vpop.f32.mrf.mxu0
    %2879 = vdwg.mxu0
    %v2880 = vmul.f32 %v2804, 0.35355338
    %v2881 = vmul.f32 %v2877, 0.35355338
    %v2882 = vadd.f32 %v2880, %v196
    %v2883 = vadd.f32 %v2881, %v200
    %v2884 = vsel %vm595, %v2882, -inf
    %2885 = vmax.xlane.f32.xlu0 %v2884
    %v2886 = vpop.xlane.xlu0 %2885
    %v2887 = vsel %vm595, %v2883, -inf
    %2888 = vmax.xlane.f32.xlu0 %v2887
    %v2889 = vpop.xlane.xlu0 %2888
    %v2890 = vsub.f32 %v2882, %v2886
    %v2891 = vsub.f32 %v2883, %v2889
    %v2892 = vmul.f32 %v2890, 1.442695
    %v2893 = vpow.pop %v2892
    %v2894 = vmul.f32 %v2891, 1.442695
    %v2895 = vpow.pop %v2894
    %v2896 = vsel %vm595, %v2893, 0.0
    %2897 = vadd.xlane.f32.xlu0 %v2896
    %v2898 = vpop.xlane.xlu0 %2897
    %v2899 = vsel %vm595, %v2895, 0.0
    %2900 = vadd.xlane.f32.xlu0 %v2899
    %v2901 = vpop.xlane.xlu0 %2900
    %v2902 = vrcp.pop %v2898
    %v2903 = vrcp.pop %v2901
    %v2904 = vmul.f32 %v2893, %v2902
    %v2905 = vmul.f32 %v2895, %v2903
    %v2906 = vmul.f32 %v2222, %v217
    %v2907 = vmul.f32 %v2225, %v217
    %v2909 = vsel %vm595, %v2904, 0
    %2911 = vmatprep.subr.mxu0 0.0
    %2912 = vmatpush1.msra.mxu0 0.0
    %2913 = vmatprep.subr.mxu0 0.0
    %2914 = vmatpush1.msra.mxu0 0.0
    %2915 = vmatprep.subr.mxu0 0.0
    %2916 = vmatpush1.msra.mxu0 0.0
    %2917 = vmatprep.subr.mxu0 0.0
    %2918 = vmatpush1.msra.mxu0 0.0
    %2919 = vmatprep.subr.mxu0 0.0
    %2920 = vmatpush1.msra.mxu0 0.0
    %2921 = vmatprep.subr.mxu0 0.0
    %2922 = vmatpush1.msra.mxu0 0.0
    %2923 = vmatprep.subr.mxu0 0.0
    %2924 = vmatpush1.msra.mxu0 0.0
    %2925 = vmatprep.subr.mxu0 0.0
    %2926 = vmatpush1.msra.mxu0 0.0
    %2927 = vmatprep.subr.mxu0 0.0
    %2928 = vmatpush1.msra.mxu0 0.0
    %2929 = vmatprep.subr.mxu0 0.0
    %2930 = vmatpush1.msra.mxu0 0.0
    %2931 = vmatprep.subr.mxu0 0.0
    %2932 = vmatpush1.msra.mxu0 0.0
    %2933 = vmatprep.subr.mxu0 0.0
    %2934 = vmatpush1.msra.mxu0 0.0
    %2935 = vmatprep.subr.mxu0 0.0
    %2936 = vmatpush1.msra.mxu0 0.0
    %2937 = vmatprep.subr.mxu0 0.0
    %2938 = vmatpush1.msra.mxu0 0.0
    %2939 = vmatprep.subr.mxu0 0.0
    %2940 = vmatpush1.msra.mxu0 0.0
    %2941 = vmatprep.subr.mxu0 0.0
    %2942 = vmatpush1.msra.mxu0 %v2906
    %2943 = vmatprep.subr.mxu0 0.0
    %2944 = vmatpush2.msra.mxu0 0.0
    %2945 = vmatprep.subr.mxu0 0.0
    %2946 = vmatpush2.msra.mxu0 0.0
    %2947 = vmatprep.subr.mxu0 0.0
    %2948 = vmatpush2.msra.mxu0 0.0
    %2949 = vmatprep.subr.mxu0 0.0
    %2950 = vmatpush2.msra.mxu0 0.0
    %2951 = vmatprep.subr.mxu0 0.0
    %2952 = vmatpush2.msra.mxu0 0.0
    %2953 = vmatprep.subr.mxu0 0.0
    %2954 = vmatpush2.msra.mxu0 0.0
    %2955 = vmatprep.subr.mxu0 0.0
    %2956 = vmatpush2.msra.mxu0 0.0
    %2957 = vmatprep.subr.mxu0 0.0
    %2958 = vmatpush2.msra.mxu0 0.0
    %2959 = vmatprep.subr.mxu0 0.0
    %2960 = vmatpush2.msra.mxu0 0.0
    %2961 = vmatprep.subr.mxu0 0.0
    %2962 = vmatpush2.msra.mxu0 0.0
    %2963 = vmatprep.subr.mxu0 0.0
    %2964 = vmatpush2.msra.mxu0 0.0
    %2965 = vmatprep.subr.mxu0 0.0
    %2966 = vmatpush2.msra.mxu0 0.0
    %2967 = vmatprep.subr.mxu0 0.0
    %2968 = vmatpush2.msra.mxu0 0.0
    %2969 = vmatprep.subr.mxu0 0.0
    %2970 = vmatpush2.msra.mxu0 0.0
    %2971 = vmatprep.subr.mxu0 0.0
    %2972 = vmatpush2.msra.mxu0 0.0
    %2973 = vmatprep.subr.mxu0 0.0
    %2974 = vmatpush2.msra.mxu0 0.0
    %2975 = vmatprep.mubr.f32.mxu0 0.0
    %2976 = vmatmul.mubr.f32.gmra.mxu0 %v2909
    %v2977 = vpop.f32.mrf.mxu0
    %v2978 = vadd.f32 0.0, %v2977
    %v2979 = vpop.f32.mrf.mxu0
    %2980 = vdwg.mxu0
    %v2982 = vsel %vm595, %v2905, 0
    %2984 = vmatprep.subr.mxu0 0.0
    %2985 = vmatpush1.msra.mxu0 0.0
    %2986 = vmatprep.subr.mxu0 0.0
    %2987 = vmatpush1.msra.mxu0 0.0
    %2988 = vmatprep.subr.mxu0 0.0
    %2989 = vmatpush1.msra.mxu0 0.0
    %2990 = vmatprep.subr.mxu0 0.0
    %2991 = vmatpush1.msra.mxu0 0.0
    %2992 = vmatprep.subr.mxu0 0.0
    %2993 = vmatpush1.msra.mxu0 0.0
    %2994 = vmatprep.subr.mxu0 0.0
    %2995 = vmatpush1.msra.mxu0 0.0
    %2996 = vmatprep.subr.mxu0 0.0
    %2997 = vmatpush1.msra.mxu0 0.0
    %2998 = vmatprep.subr.mxu0 0.0
    %2999 = vmatpush1.msra.mxu0 0.0
    %3000 = vmatprep.subr.mxu0 0.0
    %3001 = vmatpush1.msra.mxu0 0.0
    %3002 = vmatprep.subr.mxu0 0.0
    %3003 = vmatpush1.msra.mxu0 0.0
    %3004 = vmatprep.subr.mxu0 0.0
    %3005 = vmatpush1.msra.mxu0 0.0
    %3006 = vmatprep.subr.mxu0 0.0
    %3007 = vmatpush1.msra.mxu0 0.0
    %3008 = vmatprep.subr.mxu0 0.0
    %3009 = vmatpush1.msra.mxu0 0.0
    %3010 = vmatprep.subr.mxu0 0.0
    %3011 = vmatpush1.msra.mxu0 0.0
    %3012 = vmatprep.subr.mxu0 0.0
    %3013 = vmatpush1.msra.mxu0 0.0
    %3014 = vmatprep.subr.mxu0 0.0
    %3015 = vmatpush1.msra.mxu0 %v2907
    %3016 = vmatprep.subr.mxu0 0.0
    %3017 = vmatpush2.msra.mxu0 0.0
    %3018 = vmatprep.subr.mxu0 0.0
    %3019 = vmatpush2.msra.mxu0 0.0
    %3020 = vmatprep.subr.mxu0 0.0
    %3021 = vmatpush2.msra.mxu0 0.0
    %3022 = vmatprep.subr.mxu0 0.0
    %3023 = vmatpush2.msra.mxu0 0.0
    %3024 = vmatprep.subr.mxu0 0.0
    %3025 = vmatpush2.msra.mxu0 0.0
    %3026 = vmatprep.subr.mxu0 0.0
    %3027 = vmatpush2.msra.mxu0 0.0
    %3028 = vmatprep.subr.mxu0 0.0
    %3029 = vmatpush2.msra.mxu0 0.0
    %3030 = vmatprep.subr.mxu0 0.0
    %3031 = vmatpush2.msra.mxu0 0.0
    %3032 = vmatprep.subr.mxu0 0.0
    %3033 = vmatpush2.msra.mxu0 0.0
    %3034 = vmatprep.subr.mxu0 0.0
    %3035 = vmatpush2.msra.mxu0 0.0
    %3036 = vmatprep.subr.mxu0 0.0
    %3037 = vmatpush2.msra.mxu0 0.0
    %3038 = vmatprep.subr.mxu0 0.0
    %3039 = vmatpush2.msra.mxu0 0.0
    %3040 = vmatprep.subr.mxu0 0.0
    %3041 = vmatpush2.msra.mxu0 0.0
    %3042 = vmatprep.subr.mxu0 0.0
    %3043 = vmatpush2.msra.mxu0 0.0
    %3044 = vmatprep.subr.mxu0 0.0
    %3045 = vmatpush2.msra.mxu0 0.0
    %3046 = vmatprep.subr.mxu0 0.0
    %3047 = vmatpush2.msra.mxu0 0.0
    %3048 = vmatprep.mubr.f32.mxu0 0.0
    %3049 = vmatmul.mubr.f32.gmra.mxu0 %v2982
    %v3050 = vpop.f32.mrf.mxu0
    %v3051 = vadd.f32 0.0, %v3050
    %v3052 = vpop.f32.mrf.mxu0
    %3053 = vdwg.mxu0
    %v3054 = vmul.f32 %v2108, %v222
    %v3055 = vmul.f32 %v2111, %v222
    %v3057 = vsel %vm278, %v3054, 0
    %3059 = vmatprep.subr.mxu0 0.0
    %3060 = vmatpush1.xpose.msra.mxu0 0.0
    %3061 = vmatprep.subr.mxu0 0.0
    %3062 = vmatpush1.xpose.msra.mxu0 0.0
    %3063 = vmatprep.subr.mxu0 0.0
    %3064 = vmatpush1.xpose.msra.mxu0 0.0
    %3065 = vmatprep.subr.mxu0 0.0
    %3066 = vmatpush1.xpose.msra.mxu0 0.0
    %3067 = vmatprep.subr.mxu0 0.0
    %3068 = vmatpush1.xpose.msra.mxu0 0.0
    %3069 = vmatprep.subr.mxu0 0.0
    %3070 = vmatpush1.xpose.msra.mxu0 0.0
    %3071 = vmatprep.subr.mxu0 0.0
    %3072 = vmatpush1.xpose.msra.mxu0 0.0
    %3073 = vmatprep.subr.mxu0 0.0
    %3074 = vmatpush1.xpose.msra.mxu0 0.0
    %3075 = vmatprep.subr.mxu0 0.0
    %3076 = vmatpush1.xpose.msra.mxu0 0.0
    %3077 = vmatprep.subr.mxu0 0.0
    %3078 = vmatpush1.xpose.msra.mxu0 0.0
    %3079 = vmatprep.subr.mxu0 0.0
    %3080 = vmatpush1.xpose.msra.mxu0 0.0
    %3081 = vmatprep.subr.mxu0 0.0
    %3082 = vmatpush1.xpose.msra.mxu0 0.0
    %3083 = vmatprep.subr.mxu0 0.0
    %3084 = vmatpush1.xpose.msra.mxu0 0.0
    %3085 = vmatprep.subr.mxu0 0.0
    %3086 = vmatpush1.xpose.msra.mxu0 0.0
    %3087 = vmatprep.subr.mxu0 0.0
    %3088 = vmatpush1.xpose.msra.mxu0 0.0
    %3089 = vmatprep.subr.mxu0 0.0
    %3090 = vmatpush1.xpose.msra.mxu0 %v2234
    %3091 = vmatprep.subr.mxu0 0.0
    %3092 = vmatpush2.xpose.msra.mxu0 0.0
    %3093 = vmatprep.subr.mxu0 0.0
    %3094 = vmatpush2.xpose.msra.mxu0 0.0
    %3095 = vmatprep.subr.mxu0 0.0
    %3096 = vmatpush2.xpose.msra.mxu0 0.0
    %3097 = vmatprep.subr.mxu0 0.0
    %3098 = vmatpush2.xpose.msra.mxu0 0.0
    %3099 = vmatprep.subr.mxu0 0.0
    %3100 = vmatpush2.xpose.msra.mxu0 0.0
    %3101 = vmatprep.subr.mxu0 0.0
    %3102 = vmatpush2.xpose.msra.mxu0 0.0
    %3103 = vmatprep.subr.mxu0 0.0
    %3104 = vmatpush2.xpose.msra.mxu0 0.0
    %3105 = vmatprep.subr.mxu0 0.0
    %3106 = vmatpush2.xpose.msra.mxu0 0.0
    %3107 = vmatprep.subr.mxu0 0.0
    %3108 = vmatpush2.xpose.msra.mxu0 0.0
    %3109 = vmatprep.subr.mxu0 0.0
    %3110 = vmatpush2.xpose.msra.mxu0 0.0
    %3111 = vmatprep.subr.mxu0 0.0
    %3112 = vmatpush2.xpose.msra.mxu0 0.0
    %3113 = vmatprep.subr.mxu0 0.0
    %3114 = vmatpush2.xpose.msra.mxu0 0.0
    %3115 = vmatprep.subr.mxu0 0.0
    %3116 = vmatpush2.xpose.msra.mxu0 0.0
    %3117 = vmatprep.subr.mxu0 0.0
    %3118 = vmatpush2.xpose.msra.mxu0 0.0
    %3119 = vmatprep.subr.mxu0 0.0
    %3120 = vmatpush2.xpose.msra.mxu0 0.0
    %3121 = vmatprep.subr.mxu0 0.0
    %3122 = vmatpush2.xpose.msra.mxu0 0.0
    %3123 = vmatprep.mubr.f32.mxu0 0.0
    %3124 = vmatmul.mubr.f32.gmra.mxu0 %v3057
    %v3125 = vpop.f32.mrf.mxu0
    %v3126 = vadd.f32 0.0, %v3125
    %v3127 = vpop.f32.mrf.mxu0
    %3128 = vdwg.mxu0
    %v3130 = vsel %vm278, %v3055, 0
    %3132 = vmatprep.subr.mxu0 0.0
    %3133 = vmatpush1.xpose.msra.mxu0 0.0
    %3134 = vmatprep.subr.mxu0 0.0
    %3135 = vmatpush1.xpose.msra.mxu0 0.0
    %3136 = vmatprep.subr.mxu0 0.0
    %3137 = vmatpush1.xpose.msra.mxu0 0.0
    %3138 = vmatprep.subr.mxu0 0.0
    %3139 = vmatpush1.xpose.msra.mxu0 0.0
    %3140 = vmatprep.subr.mxu0 0.0
    %3141 = vmatpush1.xpose.msra.mxu0 0.0
    %3142 = vmatprep.subr.mxu0 0.0
    %3143 = vmatpush1.xpose.msra.mxu0 0.0
    %3144 = vmatprep.subr.mxu0 0.0
    %3145 = vmatpush1.xpose.msra.mxu0 0.0
    %3146 = vmatprep.subr.mxu0 0.0
    %3147 = vmatpush1.xpose.msra.mxu0 0.0
    %3148 = vmatprep.subr.mxu0 0.0
    %3149 = vmatpush1.xpose.msra.mxu0 0.0
    %3150 = vmatprep.subr.mxu0 0.0
    %3151 = vmatpush1.xpose.msra.mxu0 0.0
    %3152 = vmatprep.subr.mxu0 0.0
    %3153 = vmatpush1.xpose.msra.mxu0 0.0
    %3154 = vmatprep.subr.mxu0 0.0
    %3155 = vmatpush1.xpose.msra.mxu0 0.0
    %3156 = vmatprep.subr.mxu0 0.0
    %3157 = vmatpush1.xpose.msra.mxu0 0.0
    %3158 = vmatprep.subr.mxu0 0.0
    %3159 = vmatpush1.xpose.msra.mxu0 0.0
    %3160 = vmatprep.subr.mxu0 0.0
    %3161 = vmatpush1.xpose.msra.mxu0 0.0
    %3162 = vmatprep.subr.mxu0 0.0
    %3163 = vmatpush1.xpose.msra.mxu0 %v2310
    %3164 = vmatprep.subr.mxu0 0.0
    %3165 = vmatpush2.xpose.msra.mxu0 0.0
    %3166 = vmatprep.subr.mxu0 0.0
    %3167 = vmatpush2.xpose.msra.mxu0 0.0
    %3168 = vmatprep.subr.mxu0 0.0
    %3169 = vmatpush2.xpose.msra.mxu0 0.0
    %3170 = vmatprep.subr.mxu0 0.0
    %3171 = vmatpush2.xpose.msra.mxu0 0.0
    %3172 = vmatprep.subr.mxu0 0.0
    %3173 = vmatpush2.xpose.msra.mxu0 0.0
    %3174 = vmatprep.subr.mxu0 0.0
    %3175 = vmatpush2.xpose.msra.mxu0 0.0
    %3176 = vmatprep.subr.mxu0 0.0
    %3177 = vmatpush2.xpose.msra.mxu0 0.0
    %3178 = vmatprep.subr.mxu0 0.0
    %3179 = vmatpush2.xpose.msra.mxu0 0.0
    %3180 = vmatprep.subr.mxu0 0.0
    %3181 = vmatpush2.xpose.msra.mxu0 0.0
    %3182 = vmatprep.subr.mxu0 0.0
    %3183 = vmatpush2.xpose.msra.mxu0 0.0
    %3184 = vmatprep.subr.mxu0 0.0
    %3185 = vmatpush2.xpose.msra.mxu0 0.0
    %3186 = vmatprep.subr.mxu0 0.0
    %3187 = vmatpush2.xpose.msra.mxu0 0.0
    %3188 = vmatprep.subr.mxu0 0.0
    %3189 = vmatpush2.xpose.msra.mxu0 0.0
    %3190 = vmatprep.subr.mxu0 0.0
    %3191 = vmatpush2.xpose.msra.mxu0 0.0
    %3192 = vmatprep.subr.mxu0 0.0
    %3193 = vmatpush2.xpose.msra.mxu0 0.0
    %3194 = vmatprep.subr.mxu0 0.0
    %3195 = vmatpush2.xpose.msra.mxu0 0.0
    %3196 = vmatprep.mubr.f32.mxu0 0.0
    %3197 = vmatmul.mubr.f32.gmra.mxu0 %v3130
    %v3198 = vpop.f32.mrf.mxu0
    %v3199 = vadd.f32 0.0, %v3198
    %v3200 = vpop.f32.mrf.mxu0
    %3201 = vdwg.mxu0
    %v3202 = vmul.f32 %v3126, 0.35355338
    %v3203 = vmul.f32 %v3199, 0.35355338
    %v3204 = vadd.f32 %v3202, %v196
    %v3205 = vadd.f32 %v3203, %v200
    %v3206 = vsel %vm595, %v3204, -inf
    %3207 = vmax.xlane.f32.xlu0 %v3206
    %v3208 = vpop.xlane.xlu0 %3207
    %v3209 = vsel %vm595, %v3205, -inf
    %3210 = vmax.xlane.f32.xlu0 %v3209
    %v3211 = vpop.xlane.xlu0 %3210
    %v3212 = vsub.f32 %v3204, %v3208
    %v3213 = vsub.f32 %v3205, %v3211
    %v3214 = vmul.f32 %v3212, 1.442695
    %v3215 = vpow.pop %v3214
    %v3216 = vmul.f32 %v3213, 1.442695
    %v3217 = vpow.pop %v3216
    %v3218 = vsel %vm595, %v3215, 0.0
    %3219 = vadd.xlane.f32.xlu0 %v3218
    %v3220 = vpop.xlane.xlu0 %3219
    %v3221 = vsel %vm595, %v3217, 0.0
    %3222 = vadd.xlane.f32.xlu0 %v3221
    %v3223 = vpop.xlane.xlu0 %3222
    %v3224 = vrcp.pop %v3220
    %v3225 = vrcp.pop %v3223
    %v3226 = vmul.f32 %v3215, %v3224
    %v3227 = vmul.f32 %v3217, %v3225
    %v3228 = vmul.f32 %v2222, %v222
    %v3229 = vmul.f32 %v2225, %v222
    %v3231 = vsel %vm595, %v3226, 0
    %3233 = vmatprep.subr.mxu0 0.0
    %3234 = vmatpush1.msra.mxu0 0.0
    %3235 = vmatprep.subr.mxu0 0.0
    %3236 = vmatpush1.msra.mxu0 0.0
    %3237 = vmatprep.subr.mxu0 0.0
    %3238 = vmatpush1.msra.mxu0 0.0
    %3239 = vmatprep.subr.mxu0 0.0
    %3240 = vmatpush1.msra.mxu0 0.0
    %3241 = vmatprep.subr.mxu0 0.0
    %3242 = vmatpush1.msra.mxu0 0.0
    %3243 = vmatprep.subr.mxu0 0.0
    %3244 = vmatpush1.msra.mxu0 0.0
    %3245 = vmatprep.subr.mxu0 0.0
    %3246 = vmatpush1.msra.mxu0 0.0
    %3247 = vmatprep.subr.mxu0 0.0
    %3248 = vmatpush1.msra.mxu0 0.0
    %3249 = vmatprep.subr.mxu0 0.0
    %3250 = vmatpush1.msra.mxu0 0.0
    %3251 = vmatprep.subr.mxu0 0.0
    %3252 = vmatpush1.msra.mxu0 0.0
    %3253 = vmatprep.subr.mxu0 0.0
    %3254 = vmatpush1.msra.mxu0 0.0
    %3255 = vmatprep.subr.mxu0 0.0
    %3256 = vmatpush1.msra.mxu0 0.0
    %3257 = vmatprep.subr.mxu0 0.0
    %3258 = vmatpush1.msra.mxu0 0.0
    %3259 = vmatprep.subr.mxu0 0.0
    %3260 = vmatpush1.msra.mxu0 0.0
    %3261 = vmatprep.subr.mxu0 0.0
    %3262 = vmatpush1.msra.mxu0 0.0
    %3263 = vmatprep.subr.mxu0 0.0
    %3264 = vmatpush1.msra.mxu0 %v3228
    %3265 = vmatprep.subr.mxu0 0.0
    %3266 = vmatpush2.msra.mxu0 0.0
    %3267 = vmatprep.subr.mxu0 0.0
    %3268 = vmatpush2.msra.mxu0 0.0
    %3269 = vmatprep.subr.mxu0 0.0
    %3270 = vmatpush2.msra.mxu0 0.0
    %3271 = vmatprep.subr.mxu0 0.0
    %3272 = vmatpush2.msra.mxu0 0.0
    %3273 = vmatprep.subr.mxu0 0.0
    %3274 = vmatpush2.msra.mxu0 0.0
    %3275 = vmatprep.subr.mxu0 0.0
    %3276 = vmatpush2.msra.mxu0 0.0
    %3277 = vmatprep.subr.mxu0 0.0
    %3278 = vmatpush2.msra.mxu0 0.0
    %3279 = vmatprep.subr.mxu0 0.0
    %3280 = vmatpush2.msra.mxu0 0.0
    %3281 = vmatprep.subr.mxu0 0.0
    %3282 = vmatpush2.msra.mxu0 0.0
    %3283 = vmatprep.subr.mxu0 0.0
    %3284 = vmatpush2.msra.mxu0 0.0
    %3285 = vmatprep.subr.mxu0 0.0
    %3286 = vmatpush2.msra.mxu0 0.0
    %3287 = vmatprep.subr.mxu0 0.0
    %3288 = vmatpush2.msra.mxu0 0.0
    %3289 = vmatprep.subr.mxu0 0.0
    %3290 = vmatpush2.msra.mxu0 0.0
    %3291 = vmatprep.subr.mxu0 0.0
    %3292 = vmatpush2.msra.mxu0 0.0
    %3293 = vmatprep.subr.mxu0 0.0
    %3294 = vmatpush2.msra.mxu0 0.0
    %3295 = vmatprep.subr.mxu0 0.0
    %3296 = vmatpush2.msra.mxu0 0.0
    %3297 = vmatprep.mubr.f32.mxu0 0.0
    %3298 = vmatmul.mubr.f32.gmra.mxu0 %v3231
    %v3299 = vpop.f32.mrf.mxu0
    %v3300 = vadd.f32 0.0, %v3299
    %v3301 = vpop.f32.mrf.mxu0
    %3302 = vdwg.mxu0
    %v3304 = vsel %vm595, %v3227, 0
    %3306 = vmatprep.subr.mxu0 0.0
    %3307 = vmatpush1.msra.mxu0 0.0
    %3308 = vmatprep.subr.mxu0 0.0
    %3309 = vmatpush1.msra.mxu0 0.0
    %3310 = vmatprep.subr.mxu0 0.0
    %3311 = vmatpush1.msra.mxu0 0.0
    %3312 = vmatprep.subr.mxu0 0.0
    %3313 = vmatpush1.msra.mxu0 0.0
    %3314 = vmatprep.subr.mxu0 0.0
    %3315 = vmatpush1.msra.mxu0 0.0
    %3316 = vmatprep.subr.mxu0 0.0
    %3317 = vmatpush1.msra.mxu0 0.0
    %3318 = vmatprep.subr.mxu0 0.0
    %3319 = vmatpush1.msra.mxu0 0.0
    %3320 = vmatprep.subr.mxu0 0.0
    %3321 = vmatpush1.msra.mxu0 0.0
    %3322 = vmatprep.subr.mxu0 0.0
    %3323 = vmatpush1.msra.mxu0 0.0
    %3324 = vmatprep.subr.mxu0 0.0
    %3325 = vmatpush1.msra.mxu0 0.0
    %3326 = vmatprep.subr.mxu0 0.0
    %3327 = vmatpush1.msra.mxu0 0.0
    %3328 = vmatprep.subr.mxu0 0.0
    %3329 = vmatpush1.msra.mxu0 0.0
    %3330 = vmatprep.subr.mxu0 0.0
    %3331 = vmatpush1.msra.mxu0 0.0
    %3332 = vmatprep.subr.mxu0 0.0
    %3333 = vmatpush1.msra.mxu0 0.0
    %3334 = vmatprep.subr.mxu0 0.0
    %3335 = vmatpush1.msra.mxu0 0.0
    %3336 = vmatprep.subr.mxu0 0.0
    %3337 = vmatpush1.msra.mxu0 %v3229
    %3338 = vmatprep.subr.mxu0 0.0
    %3339 = vmatpush2.msra.mxu0 0.0
    %3340 = vmatprep.subr.mxu0 0.0
    %3341 = vmatpush2.msra.mxu0 0.0
    %3342 = vmatprep.subr.mxu0 0.0
    %3343 = vmatpush2.msra.mxu0 0.0
    %3344 = vmatprep.subr.mxu0 0.0
    %3345 = vmatpush2.msra.mxu0 0.0
    %3346 = vmatprep.subr.mxu0 0.0
    %3347 = vmatpush2.msra.mxu0 0.0
    %3348 = vmatprep.subr.mxu0 0.0
    %3349 = vmatpush2.msra.mxu0 0.0
    %3350 = vmatprep.subr.mxu0 0.0
    %3351 = vmatpush2.msra.mxu0 0.0
    %3352 = vmatprep.subr.mxu0 0.0
    %3353 = vmatpush2.msra.mxu0 0.0
    %3354 = vmatprep.subr.mxu0 0.0
    %3355 = vmatpush2.msra.mxu0 0.0
    %3356 = vmatprep.subr.mxu0 0.0
    %3357 = vmatpush2.msra.mxu0 0.0
    %3358 = vmatprep.subr.mxu0 0.0
    %3359 = vmatpush2.msra.mxu0 0.0
    %3360 = vmatprep.subr.mxu0 0.0
    %3361 = vmatpush2.msra.mxu0 0.0
    %3362 = vmatprep.subr.mxu0 0.0
    %3363 = vmatpush2.msra.mxu0 0.0
    %3364 = vmatprep.subr.mxu0 0.0
    %3365 = vmatpush2.msra.mxu0 0.0
    %3366 = vmatprep.subr.mxu0 0.0
    %3367 = vmatpush2.msra.mxu0 0.0
    %3368 = vmatprep.subr.mxu0 0.0
    %3369 = vmatpush2.msra.mxu0 0.0
    %3370 = vmatprep.mubr.f32.mxu0 0.0
    %3371 = vmatmul.mubr.f32.gmra.mxu0 %v3304
    %v3372 = vpop.f32.mrf.mxu0
    %v3373 = vadd.f32 0.0, %v3372
    %v3374 = vpop.f32.mrf.mxu0
    %3375 = vdwg.mxu0
    %v3377 = vsel %vm595, %v2406, 0
    %3379 = vmatprep.subr.mxu0 0.0
    %3380 = vmatpush1.msra.mxu0 0.0
    %3381 = vmatprep.subr.mxu0 0.0
    %3382 = vmatpush1.msra.mxu0 0.0
    %3383 = vmatprep.subr.mxu0 0.0
    %3384 = vmatpush1.msra.mxu0 0.0
    %3385 = vmatprep.subr.mxu0 0.0
    %3386 = vmatpush1.msra.mxu0 0.0
    %3387 = vmatprep.subr.mxu0 0.0
    %3388 = vmatpush1.msra.mxu0 0.0
    %3389 = vmatprep.subr.mxu0 0.0
    %3390 = vmatpush1.msra.mxu0 0.0
    %3391 = vmatprep.subr.mxu0 0.0
    %3392 = vmatpush1.msra.mxu0 0.0
    %3393 = vmatprep.subr.mxu0 0.0
    %3394 = vmatpush1.msra.mxu0 0.0
    %3395 = vmatprep.subr.mxu0 0.0
    %3396 = vmatpush1.msra.mxu0 0.0
    %3397 = vmatprep.subr.mxu0 0.0
    %3398 = vmatpush1.msra.mxu0 0.0
    %3399 = vmatprep.subr.mxu0 0.0
    %3400 = vmatpush1.msra.mxu0 0.0
    %3401 = vmatprep.subr.mxu0 0.0
    %3402 = vmatpush1.msra.mxu0 0.0
    %3403 = vmatprep.subr.mxu0 0.0
    %3404 = vmatpush1.msra.mxu0 0.0
    %3405 = vmatprep.subr.mxu0 0.0
    %3406 = vmatpush1.msra.mxu0 0.0
    %3407 = vmatprep.subr.mxu0 0.0
    %3408 = vmatpush1.msra.mxu0 0.0
    %3409 = vmatprep.subr.mxu0 0.0
    %3410 = vmatpush1.msra.mxu0 %v2408
    %3411 = vmatprep.subr.mxu0 0.0
    %3412 = vmatpush2.msra.mxu0 0.0
    %3413 = vmatprep.subr.mxu0 0.0
    %3414 = vmatpush2.msra.mxu0 0.0
    %3415 = vmatprep.subr.mxu0 0.0
    %3416 = vmatpush2.msra.mxu0 0.0
    %3417 = vmatprep.subr.mxu0 0.0
    %3418 = vmatpush2.msra.mxu0 0.0
    %3419 = vmatprep.subr.mxu0 0.0
    %3420 = vmatpush2.msra.mxu0 0.0
    %3421 = vmatprep.subr.mxu0 0.0
    %3422 = vmatpush2.msra.mxu0 0.0
    %3423 = vmatprep.subr.mxu0 0.0
    %3424 = vmatpush2.msra.mxu0 0.0
    %3425 = vmatprep.subr.mxu0 0.0
    %3426 = vmatpush2.msra.mxu0 0.0
    %3427 = vmatprep.subr.mxu0 0.0
    %3428 = vmatpush2.msra.mxu0 0.0
    %3429 = vmatprep.subr.mxu0 0.0
    %3430 = vmatpush2.msra.mxu0 0.0
    %3431 = vmatprep.subr.mxu0 0.0
    %3432 = vmatpush2.msra.mxu0 0.0
    %3433 = vmatprep.subr.mxu0 0.0
    %3434 = vmatpush2.msra.mxu0 0.0
    %3435 = vmatprep.subr.mxu0 0.0
    %3436 = vmatpush2.msra.mxu0 0.0
    %3437 = vmatprep.subr.mxu0 0.0
    %3438 = vmatpush2.msra.mxu0 0.0
    %3439 = vmatprep.subr.mxu0 0.0
    %3440 = vmatpush2.msra.mxu0 0.0
    %3441 = vmatprep.subr.mxu0 0.0
    %3442 = vmatpush2.msra.mxu0 0.0
    %3443 = vmatprep.mubr.f32.mxu0 0.0
    %3444 = vmatmul.mubr.f32.gmra.mxu0 %v3377
    %v3445 = vpop.f32.mrf.mxu0
    %v3446 = vadd.f32 %v2656, %v3445
    %v3447 = vpop.f32.mrf.mxu0
    %3448 = vdwg.mxu0
    %v3450 = vsel %vm595, %v2407, 0
    %3452 = vmatprep.subr.mxu0 0.0
    %3453 = vmatpush1.msra.mxu0 0.0
    %3454 = vmatprep.subr.mxu0 0.0
    %3455 = vmatpush1.msra.mxu0 0.0
    %3456 = vmatprep.subr.mxu0 0.0
    %3457 = vmatpush1.msra.mxu0 0.0
    %3458 = vmatprep.subr.mxu0 0.0
    %3459 = vmatpush1.msra.mxu0 0.0
    %3460 = vmatprep.subr.mxu0 0.0
    %3461 = vmatpush1.msra.mxu0 0.0
    %3462 = vmatprep.subr.mxu0 0.0
    %3463 = vmatpush1.msra.mxu0 0.0
    %3464 = vmatprep.subr.mxu0 0.0
    %3465 = vmatpush1.msra.mxu0 0.0
    %3466 = vmatprep.subr.mxu0 0.0
    %3467 = vmatpush1.msra.mxu0 0.0
    %3468 = vmatprep.subr.mxu0 0.0
    %3469 = vmatpush1.msra.mxu0 0.0
    %3470 = vmatprep.subr.mxu0 0.0
    %3471 = vmatpush1.msra.mxu0 0.0
    %3472 = vmatprep.subr.mxu0 0.0
    %3473 = vmatpush1.msra.mxu0 0.0
    %3474 = vmatprep.subr.mxu0 0.0
    %3475 = vmatpush1.msra.mxu0 0.0
    %3476 = vmatprep.subr.mxu0 0.0
    %3477 = vmatpush1.msra.mxu0 0.0
    %3478 = vmatprep.subr.mxu0 0.0
    %3479 = vmatpush1.msra.mxu0 0.0
    %3480 = vmatprep.subr.mxu0 0.0
    %3481 = vmatpush1.msra.mxu0 0.0
    %3482 = vmatprep.subr.mxu0 0.0
    %3483 = vmatpush1.msra.mxu0 %v2409
    %3484 = vmatprep.subr.mxu0 0.0
    %3485 = vmatpush2.msra.mxu0 0.0
    %3486 = vmatprep.subr.mxu0 0.0
    %3487 = vmatpush2.msra.mxu0 0.0
    %3488 = vmatprep.subr.mxu0 0.0
    %3489 = vmatpush2.msra.mxu0 0.0
    %3490 = vmatprep.subr.mxu0 0.0
    %3491 = vmatpush2.msra.mxu0 0.0
    %3492 = vmatprep.subr.mxu0 0.0
    %3493 = vmatpush2.msra.mxu0 0.0
    %3494 = vmatprep.subr.mxu0 0.0
    %3495 = vmatpush2.msra.mxu0 0.0
    %3496 = vmatprep.subr.mxu0 0.0
    %3497 = vmatpush2.msra.mxu0 0.0
    %3498 = vmatprep.subr.mxu0 0.0
    %3499 = vmatpush2.msra.mxu0 0.0
    %3500 = vmatprep.subr.mxu0 0.0
    %3501 = vmatpush2.msra.mxu0 0.0
    %3502 = vmatprep.subr.mxu0 0.0
    %3503 = vmatpush2.msra.mxu0 0.0
    %3504 = vmatprep.subr.mxu0 0.0
    %3505 = vmatpush2.msra.mxu0 0.0
    %3506 = vmatprep.subr.mxu0 0.0
    %3507 = vmatpush2.msra.mxu0 0.0
    %3508 = vmatprep.subr.mxu0 0.0
    %3509 = vmatpush2.msra.mxu0 0.0
    %3510 = vmatprep.subr.mxu0 0.0
    %3511 = vmatpush2.msra.mxu0 0.0
    %3512 = vmatprep.subr.mxu0 0.0
    %3513 = vmatpush2.msra.mxu0 0.0
    %3514 = vmatprep.subr.mxu0 0.0
    %3515 = vmatpush2.msra.mxu0 0.0
    %3516 = vmatprep.mubr.f32.mxu0 0.0
    %3517 = vmatmul.mubr.f32.gmra.mxu0 %v3450
    %v3518 = vpop.f32.mrf.mxu0
    %v3519 = vadd.f32 %v2729, %v3518
    %v3520 = vpop.f32.mrf.mxu0
    %3521 = vdwg.mxu0
    %v3522 = vadd.f32 %v3446, %v2978
    %v3523 = vadd.f32 %v3519, %v3051
    %v3524 = vadd.f32 %v3522, %v3300
    %v3525 = vadd.f32 %v3523, %v3373
    %v3526 = vpack.c.bf16 %v3525, %v3524
    %v3527 = vlaneseq
    %v3528 = vshrl.u32 %v3527, 7
    %v3529 = vsub.s32 0, %v3528
    %v3530 = vrot.slane %v2046, %v3529
    %v3535 = vunpack.c.l.b16 %v2027
    %v3536 = vunpack.c.l.b16 %v2028
    %v3537 = vunpack.c.l.b16 %v2029
    %v3538 = vunpack.c.l.b16 %v2030
    %v3539 = vpack.c.b16 %v3536, %v3535
    %v3540 = vpack.c.b16 %v3538, %v3537
    %v3544 = vsel %vm278, %v3526, 0
    %3546 = vmatprep.subr.bf16.mxu0 0
    %3547 = vmatpush1.bf16.msra.mxu0 0
    %3548 = vmatprep.subr.bf16.mxu0 0
    %3549 = vmatpush1.bf16.msra.mxu0 0
    %3550 = vmatprep.subr.bf16.mxu0 0
    %3551 = vmatpush1.bf16.msra.mxu0 0
    %3552 = vmatprep.subr.bf16.mxu0 0
    %3553 = vmatpush1.bf16.msra.mxu0 0
    %3554 = vmatprep.subr.bf16.mxu0 0
    %3555 = vmatpush1.bf16.msra.mxu0 0
    %3556 = vmatprep.subr.bf16.mxu0 0
    %3557 = vmatpush1.bf16.msra.mxu0 0
    %3558 = vmatprep.subr.bf16.mxu0 0
    %3559 = vmatpush1.bf16.msra.mxu0 %v3540
    %3560 = vmatprep.subr.bf16.mxu0 0
    %3561 = vmatpush1.bf16.msra.mxu0 %v3539
    %3562 = vmatprep.subr.bf16.mxu0 0
    %3563 = vmatpush2.bf16.msra.mxu0 0
    %3564 = vmatprep.subr.bf16.mxu0 0
    %3565 = vmatpush2.bf16.msra.mxu0 0
    %3566 = vmatprep.subr.bf16.mxu0 0
    %3567 = vmatpush2.bf16.msra.mxu0 0
    %3568 = vmatprep.subr.bf16.mxu0 0
    %3569 = vmatpush2.bf16.msra.mxu0 0
    %3570 = vmatprep.subr.bf16.mxu0 0
    %3571 = vmatpush2.bf16.msra.mxu0 0
    %3572 = vmatprep.subr.bf16.mxu0 0
    %3573 = vmatpush2.bf16.msra.mxu0 0
    %3574 = vmatprep.subr.bf16.mxu0 0
    %3575 = vmatpush2.bf16.msra.mxu0 0
    %3576 = vmatprep.subr.bf16.mxu0 0
    %3577 = vmatpush2.bf16.msra.mxu0 0
    %3578 = vmatprep.mubr.bf16.mxu0 0
    %3579 = vmatmul.mubr.bf16.gmra.mxu0 %v3544
    %v3580 = vpop.f32.mrf.mxu0
    %v3581 = vadd.f32 %v3530, %v3580
    %v3582 = vpop.f32.mrf.mxu0
    %v3583 = vpop.f32.mrf.mxu0
    %v3584 = vadd.f32 %v3530, %v3583
    %v3585 = vpop.f32.mrf.mxu0
    %3586 = vdwg.mxu0
    %v3587 = vadd.f32 %v2013, %v3581
    %v3588 = vadd.f32 %v2014, %v3584
    %v3589 = vsel %vm278, %v3587, 0.0
    %3590 = vadd.xlane.f32.xlu0 %v3589
    %v3591 = vpop.xlane.xlu0 %3590
    %v3592 = vsel %vm278, %v3588, 0.0
    %3593 = vadd.xlane.f32.xlu0 %v3592
    %v3594 = vpop.xlane.xlu0 %3593
    %v3595 = vmul.f32 %v3591, %v1805
    %v3596 = vmul.f32 %v3594, %v1805
    %v3597 = vsub.f32 %v3587, %v3595
    %v3598 = vsub.f32 %v3588, %v3596
    %v3599 = vmul.f32 %v3597, %v3597
    %v3600 = vmul.f32 %v3598, %v3598
    %v3601 = vsel %vm278, %v3599, 0.0
    %3602 = vadd.xlane.f32.xlu0 %v3601
    %v3603 = vpop.xlane.xlu0 %3602
    %v3604 = vsel %vm278, %v3600, 0.0
    %3605 = vadd.xlane.f32.xlu0 %v3604
    %v3606 = vpop.xlane.xlu0 %3605
    %v3607 = vmul.f32 %v3603, %v1805
    %v3608 = vmul.f32 %v3606, %v1805
    %v3609 = vadd.f32 %v3607, 1e-05
    %v3610 = vadd.f32 %v3608, 1e-05
    %v3611 = vrsqrt.pop %v3609
    %v3612 = vrsqrt.pop %v3610
    %v3613 = vmul.f32 %v3597, %v3611
    %v3614 = vmul.f32 %v3598, %v3612
    %v3615 = vlaneseq
    %v3616 = vshrl.u32 %v3615, 7
    %v3617 = vsub.s32 0, %v3616
    %v3618 = vrot.slane %v2047, %v3617
    %v3619 = vmul.f32 %v3613, %v3618
    %v3620 = vmul.f32 %v3614, %v3618
    %v3621 = vlaneseq
    %v3622 = vshrl.u32 %v3621, 7
    %v3623 = vsub.s32 0, %v3622
    %v3624 = vrot.slane %v2048, %v3623
    %v3625 = vadd.f32 %v3619, %v3624
    %v3626 = vadd.f32 %v3620, %v3624
    %v3627 = vpack.c.bf16 %v3626, %v3625
    %v3628 = vlaneseq
    %v3629 = vshrl.u32 %v3628, 7
    %v3630 = vsub.s32 0, %v3629
    %v3631 = vrot.slane %v2049, %v3630
    %v3636 = vunpack.c.l.b16 %v2031
    %v3637 = vunpack.c.l.b16 %v2032
    %v3638 = vunpack.c.l.b16 %v2033
    %v3639 = vunpack.c.l.b16 %v2034
    %v3640 = vpack.c.b16 %v3637, %v3636
    %v3641 = vpack.c.b16 %v3639, %v3638
    %v3645 = vsel %vm278, %v3627, 0
    %3647 = vmatprep.subr.bf16.mxu0 0
    %3648 = vmatpush1.bf16.msra.mxu0 0
    %3649 = vmatprep.subr.bf16.mxu0 0
    %3650 = vmatpush1.bf16.msra.mxu0 0
    %3651 = vmatprep.subr.bf16.mxu0 0
    %3652 = vmatpush1.bf16.msra.mxu0 0
    %3653 = vmatprep.subr.bf16.mxu0 0
    %3654 = vmatpush1.bf16.msra.mxu0 0
    %3655 = vmatprep.subr.bf16.mxu0 0
    %3656 = vmatpush1.bf16.msra.mxu0 0
    %3657 = vmatprep.subr.bf16.mxu0 0
    %3658 = vmatpush1.bf16.msra.mxu0 0
    %3659 = vmatprep.subr.bf16.mxu0 0
    %3660 = vmatpush1.bf16.msra.mxu0 %v3641
    %3661 = vmatprep.subr.bf16.mxu0 0
    %3662 = vmatpush1.bf16.msra.mxu0 %v3640
    %3663 = vmatprep.subr.bf16.mxu0 0
    %3664 = vmatpush2.bf16.msra.mxu0 0
    %3665 = vmatprep.subr.bf16.mxu0 0
    %3666 = vmatpush2.bf16.msra.mxu0 0
    %3667 = vmatprep.subr.bf16.mxu0 0
    %3668 = vmatpush2.bf16.msra.mxu0 0
    %3669 = vmatprep.subr.bf16.mxu0 0
    %3670 = vmatpush2.bf16.msra.mxu0 0
    %3671 = vmatprep.subr.bf16.mxu0 0
    %3672 = vmatpush2.bf16.msra.mxu0 0
    %3673 = vmatprep.subr.bf16.mxu0 0
    %3674 = vmatpush2.bf16.msra.mxu0 0
    %3675 = vmatprep.subr.bf16.mxu0 0
    %3676 = vmatpush2.bf16.msra.mxu0 0
    %3677 = vmatprep.subr.bf16.mxu0 0
    %3678 = vmatpush2.bf16.msra.mxu0 0
    %3679 = vmatprep.mubr.bf16.mxu0 0
    %3680 = vmatmul.mubr.bf16.gmra.mxu0 %v3645
    %v3681 = vpop.f32.mrf.mxu0
    %v3682 = vadd.f32 %v3631, %v3681
    %v3683 = vpop.f32.mrf.mxu0
    %v3684 = vpop.f32.mrf.mxu0
    %v3685 = vadd.f32 %v3631, %v3684
    %v3686 = vpop.f32.mrf.mxu0
    %3687 = vdwg.mxu0
    %v3688 = vmax.f32 %v3682, 0.0
    %v3689 = vmax.f32 %v3685, 0.0
    %v3690 = vpack.c.bf16 %v3689, %v3688
    %v3691 = vlaneseq
    %v3692 = vshrl.u32 %v3691, 7
    %v3693 = vsub.s32 0, %v3692
    %v3694 = vrot.slane %v2050, %v3693
    %v3703 = vunpack.c.l.b16 %v2035
    %v3704 = vunpack.c.l.b16 %v2036
    %v3705 = vunpack.c.l.b16 %v2037
    %v3706 = vunpack.c.l.b16 %v2038
    %v3707 = vunpack.c.l.b16 %v2039
    %v3708 = vunpack.c.l.b16 %v2040
    %v3709 = vunpack.c.l.b16 %v2041
    %v3710 = vunpack.c.l.b16 %v2042
    %v3711 = vpack.c.b16 %v3704, %v3703
    %v3712 = vpack.c.b16 %v3706, %v3705
    %v3713 = vpack.c.b16 %v3708, %v3707
    %v3714 = vpack.c.b16 %v3710, %v3709
    %v3720 = vsel %vm1930, %v3690, 0
    %3722 = vmatprep.subr.bf16.mxu0 0
    %3723 = vmatpush1.bf16.msra.mxu0 0
    %3724 = vmatprep.subr.bf16.mxu0 0
    %3725 = vmatpush1.bf16.msra.mxu0 0
    %3726 = vmatprep.subr.bf16.mxu0 0
    %3727 = vmatpush1.bf16.msra.mxu0 0
    %3728 = vmatprep.subr.bf16.mxu0 0
    %3729 = vmatpush1.bf16.msra.mxu0 0
    %3730 = vmatprep.subr.bf16.mxu0 0
    %3731 = vmatpush1.bf16.msra.mxu0 %v3714
    %3732 = vmatprep.subr.bf16.mxu0 0
    %3733 = vmatpush1.bf16.msra.mxu0 %v3713
    %3734 = vmatprep.subr.bf16.mxu0 0
    %3735 = vmatpush1.bf16.msra.mxu0 %v3712
    %3736 = vmatprep.subr.bf16.mxu0 0
    %3737 = vmatpush1.bf16.msra.mxu0 %v3711
    %3738 = vmatprep.subr.bf16.mxu0 0
    %3739 = vmatpush2.bf16.msra.mxu0 0
    %3740 = vmatprep.subr.bf16.mxu0 0
    %3741 = vmatpush2.bf16.msra.mxu0 0
    %3742 = vmatprep.subr.bf16.mxu0 0
    %3743 = vmatpush2.bf16.msra.mxu0 0
    %3744 = vmatprep.subr.bf16.mxu0 0
    %3745 = vmatpush2.bf16.msra.mxu0 0
    %3746 = vmatprep.subr.bf16.mxu0 0
    %3747 = vmatpush2.bf16.msra.mxu0 0
    %3748 = vmatprep.subr.bf16.mxu0 0
    %3749 = vmatpush2.bf16.msra.mxu0 0
    %3750 = vmatprep.subr.bf16.mxu0 0
    %3751 = vmatpush2.bf16.msra.mxu0 0
    %3752 = vmatprep.subr.bf16.mxu0 0
    %3753 = vmatpush2.bf16.msra.mxu0 0
    %3754 = vmatprep.mubr.bf16.mxu0 0
    %3755 = vmatmul.mubr.bf16.gmra.mxu0 %v3720
    %v3756 = vpop.f32.mrf.mxu0
    %v3757 = vadd.f32 %v3694, %v3756
    %v3758 = vpop.f32.mrf.mxu0
    %v3759 = vpop.f32.mrf.mxu0
    %v3760 = vadd.f32 %v3694, %v3759
    %v3761 = vpop.f32.mrf.mxu0
    %3762 = vdwg.mxu0
    %v3763 = vadd.f32 %v3625, %v3757
    %v3764 = vadd.f32 %v3626, %v3760
    %v3765 = vsel %vm278, %v3763, 0.0
    %3766 = vadd.xlane.f32.xlu0 %v3765
    %v3767 = vpop.xlane.xlu0 %3766
    %v3768 = vsel %vm278, %v3764, 0.0
    %3769 = vadd.xlane.f32.xlu0 %v3768
    %v3770 = vpop.xlane.xlu0 %3769
    %v3771 = vmul.f32 %v3767, %v1805
    %v3772 = vmul.f32 %v3770, %v1805
    %v3773 = vsub.f32 %v3763, %v3771
    %v3774 = vsub.f32 %v3764, %v3772
    %v3775 = vmul.f32 %v3773, %v3773
    %v3776 = vmul.f32 %v3774, %v3774
    %v3777 = vsel %vm278, %v3775, 0.0
    %3778 = vadd.xlane.f32.xlu0 %v3777
    %v3779 = vpop.xlane.xlu0 %3778
    %v3780 = vsel %vm278, %v3776, 0.0
    %3781 = vadd.xlane.f32.xlu0 %v3780
    %v3782 = vpop.xlane.xlu0 %3781
    %v3783 = vmul.f32 %v3779, %v1805
    %v3784 = vmul.f32 %v3782, %v1805
    %v3785 = vadd.f32 %v3783, 1e-05
    %v3786 = vadd.f32 %v3784, 1e-05
    %v3787 = vrsqrt.pop %v3785
    %v3788 = vrsqrt.pop %v3786
    %v3789 = vmul.f32 %v3773, %v3787
    %v3790 = vmul.f32 %v3774, %v3788
    %v3791 = vlaneseq
    %v3792 = vshrl.u32 %v3791, 7
    %v3793 = vsub.s32 0, %v3792
    %v3794 = vrot.slane %v2051, %v3793
    %v3795 = vmul.f32 %v3789, %v3794
    %v3796 = vmul.f32 %v3790, %v3794
    %v3797 = vlaneseq
    %v3798 = vshrl.u32 %v3797, 7
    %v3799 = vsub.s32 0, %v3798
    %v3800 = vrot.slane %v2052, %v3799
    %v3801 = vadd.f32 %v3795, %v3800
    %v3802 = vadd.f32 %v3796, %v3800
    %v3803 = vld [vmem:[#allocation2] sm:$0xf]
    %v3804 = vld [vmem:[#allocation2 + $0x4] sm:$0xf]
    %v3805 = vld [vmem:[#allocation2 + $0x8] sm:$0xf]
    %v3806 = vld [vmem:[#allocation2 + $0xc] sm:$0xf]
    %v3807 = vpack.c.bf16 %v3802, %v3801
    %v3812 = vunpack.c.l.b16 %v3803
    %v3813 = vunpack.c.l.b16 %v3804
    %v3814 = vunpack.c.l.b16 %v3805
    %v3815 = vunpack.c.l.b16 %v3806
    %v3816 = vpack.c.b16 %v3813, %v3812
    %v3817 = vpack.c.b16 %v3815, %v3814
    %v3821 = vsel %vm278, %v3807, 0
    %3823 = vmatprep.subr.bf16.mxu0 0
    %3824 = vmatpush1.bf16.msra.mxu0 0
    %3825 = vmatprep.subr.bf16.mxu0 0
    %3826 = vmatpush1.bf16.msra.mxu0 0
    %3827 = vmatprep.subr.bf16.mxu0 0
    %3828 = vmatpush1.bf16.msra.mxu0 0
    %3829 = vmatprep.subr.bf16.mxu0 0
    %3830 = vmatpush1.bf16.msra.mxu0 0
    %3831 = vmatprep.subr.bf16.mxu0 0
    %3832 = vmatpush1.bf16.msra.mxu0 0
    %3833 = vmatprep.subr.bf16.mxu0 0
    %3834 = vmatpush1.bf16.msra.mxu0 0
    %3835 = vmatprep.subr.bf16.mxu0 0
    %3836 = vmatpush1.bf16.msra.mxu0 %v3817
    %3837 = vmatprep.subr.bf16.mxu0 0
    %3838 = vmatpush1.bf16.msra.mxu0 %v3816
    %3839 = vmatprep.subr.bf16.mxu0 0
    %3840 = vmatpush2.bf16.msra.mxu0 0
    %3841 = vmatprep.subr.bf16.mxu0 0
    %3842 = vmatpush2.bf16.msra.mxu0 0
    %3843 = vmatprep.subr.bf16.mxu0 0
    %3844 = vmatpush2.bf16.msra.mxu0 0
    %3845 = vmatprep.subr.bf16.mxu0 0
    %3846 = vmatpush2.bf16.msra.mxu0 0
    %3847 = vmatprep.subr.bf16.mxu0 0
    %3848 = vmatpush2.bf16.msra.mxu0 0
    %3849 = vmatprep.subr.bf16.mxu0 0
    %3850 = vmatpush2.bf16.msra.mxu0 0
    %3851 = vmatprep.subr.bf16.mxu0 0
    %3852 = vmatpush2.bf16.msra.mxu0 0
    %3853 = vmatprep.subr.bf16.mxu0 0
    %3854 = vmatpush2.bf16.msra.mxu0 0
    %3855 = vmatprep.mubr.bf16.mxu0 0
    %3856 = vmatmul.mubr.bf16.gmra.mxu0 %v3821
    %v3857 = vpop.f32.mrf.mxu0
    %v3858 = vadd.f32 0.0, %v3857
    %v3859 = vpop.f32.mrf.mxu0
    %v3860 = vpop.f32.mrf.mxu0
    %v3861 = vadd.f32 0.0, %v3860
    %v3862 = vpop.f32.mrf.mxu0
    %3863 = vdwg.mxu0
    %3864 = vst [vmem:[#allocation7] sm:$0xff] %v3858
    %3865 = vst [vmem:[#allocation7 + $0x8] sm:$0xff] %v3861
    // Predicated region
    $region22: #{tpu_custom_call.1} parent=1 // pred_check
      _
    $region23: #{tpu_custom_call.1} parent=1 // pred_check_branch
      %3867 = sbr.rel (0) target = $region25
    $region24: #{tpu_custom_call.1} parent=1 // pred_region
      %s3869 = ssub.s32 256, 256
      %3870 = vsyncadd [#allocation4], %s3869
      %s3871 = sshll.u32 [#allocation7], 4
      %s3872 = int_to_ptr.vmem [resolvable:$true] %s3871
      %3877 = dma.vmem_to_hbm [thread:$0]  %s3872, 256, %s3, [#allocation4], 128, 128, 8
    $region25: #{tpu_custom_call.1} parent=1 // pred_fallthru
      _
    // Predicated region
    $region26: #{tpu_custom_call.1} parent=1 // pred_check
      _
    $region27: #{tpu_custom_call.1} parent=1 // pred_check_branch
      %3879 = sbr.rel (0) target = $region29
    $region28: #{tpu_custom_call.1} parent=1 // pred_region
      %3880 = dma.done [#allocation4], 256
    $region29: #{tpu_custom_call.1} parent=1 // pred_fallthru
      _
    %3881 = vsyncpa [#allocation3], 1
    %3882 = vsyncpa [#allocation6], 1
    %3883 = vsyncpa [#allocation4], 1

</llo_original>
